<compile_context>
chip_gen: v5e
topology: v5e:2x2
jax: 0.10.0
libtpu: 0.0.40
codegen_flags: <defaults>
</compile_context>

<pallas_src>
import functools

import jax
import jax.numpy as jnp
from jax.experimental import pallas as pl
from jax.experimental.pallas import tpu as pltpu

LANE = 128            # lane padding for all feature dims
NODE_TILE = 512       # TM == TK tile for the adjacency matmuls
POOL_TILE = 2048      # max node tile for the pooling/head kernel
H_RESIDENT_BYTES = 4 * 1024 * 1024   # keep h VMEM-resident below this (bf16)


def _round_up(v, m):
    return (v + m - 1) // m * m


# ---------------------------------------------------------------------------
# Kernel 1: one propagation layer   out = maybe_relu((adj @ h + h) @ W + b)
# grid = (rows/TM, cols/TK), reduction over the second axis.
# adj and h are bf16 (native MXU path); accumulation is f32.
# ---------------------------------------------------------------------------
def _prop_fc_kernel(adj_ref, h_ref, w_ref, b_ref, out_ref, acc_ref, *,
                    apply_relu, h_resident, tile):
    i = pl.program_id(0)
    k = pl.program_id(1)

    @pl.when(k == 0)
    def _():
        acc_ref[...] = jnp.zeros_like(acc_ref)

    if h_resident:
        # h is the full (n_pad, d_in) array, VMEM-resident; slice the K tile.
        off = pl.multiple_of(k * tile, tile)
        h_tile = h_ref[pl.ds(off, tile), :]
    else:
        h_tile = h_ref[...]

    # bf16 x bf16 -> f32 accumulate on the MXU.
    acc_ref[...] += jnp.dot(adj_ref[...], h_tile,
                            preferred_element_type=jnp.float32)

    # Self-loop term: (I + adj) @ h == adj @ h + h.  With TM == TK the K tile
    # k == i holds exactly the rows of this output tile, so no extra input
    # stream and no NxN eye are needed.
    @pl.when(k == i)
    def _():
        acc_ref[...] += h_tile.astype(jnp.float32)

    @pl.when(k == pl.num_programs(1) - 1)
    def _():
        # Small per-row-tile FC: keep f32 operands for precision (cheap
        # relative to the N^2 adjacency matmul above).
        y = jnp.dot(acc_ref[...], w_ref[...],
                    preferred_element_type=jnp.float32) + b_ref[...]
        if apply_relu:
            y = jnp.maximum(y, 0.0)
        out_ref[...] = y.astype(out_ref.dtype)


def _propagate_fc(adj_bf16, h_bf16, w, b, *, apply_relu, tile, out_dtype):
    n_pad = adj_bf16.shape[0]
    d_in = h_bf16.shape[1]
    d_out = w.shape[1]
    grid = (n_pad // tile, n_pad // tile)

    h_resident = n_pad * d_in * 2 <= H_RESIDENT_BYTES
    if h_resident:
        h_spec = pl.BlockSpec((n_pad, d_in), lambda i, k: (0, 0))
    else:
        h_spec = pl.BlockSpec((tile, d_in), lambda i, k: (k, 0))

    kernel = functools.partial(_prop_fc_kernel, apply_relu=apply_relu,
                               h_resident=h_resident, tile=tile)
    return pl.pallas_call(
        kernel,
        out_shape=jax.ShapeDtypeStruct((n_pad, d_out), out_dtype),
        grid_spec=pltpu.PrefetchScalarGridSpec(
            num_scalar_prefetch=0,
            grid=grid,
            in_specs=[
                pl.BlockSpec((tile, tile), lambda i, k: (i, k)),    # adj tile
                h_spec,                                             # h
                pl.BlockSpec((d_in, d_out), lambda i, k: (0, 0)),   # weight
                pl.BlockSpec((1, d_out), lambda i, k: (0, 0)),      # bias
            ],
            out_specs=pl.BlockSpec((tile, d_out), lambda i, k: (i, 0)),
            # Accumulates adj@h and the self-loop h: d_in-wide, f32.
            scratch_shapes=[pltpu.VMEM((tile, d_in), jnp.float32)],
        ),
        compiler_params=pltpu.CompilerParams(
            dimension_semantics=("parallel", "arbitrary")),
    )(adj_bf16, h_bf16, w, b)


# ---------------------------------------------------------------------------
# Kernel 2: sum-pool per graph (one-hot matmul per node tile, accumulated in
# VMEM) fused with the fc3 -> relu -> fc4 -> log_softmax head.
# grid = (nodes/TK,), pure reduction.
# ---------------------------------------------------------------------------
def _pool_head_kernel(idx_ref, z_ref, w3_ref, b3_ref, w4_ref, b4_ref,
                      out_ref, pooled_ref, *, n_class):
    k = pl.program_id(0)

    @pl.when(k == 0)
    def _():
        pooled_ref[...] = jnp.zeros_like(pooled_ref)

    g_pad = pooled_ref.shape[0]
    tk = z_ref.shape[0]
    g_iota = jax.lax.broadcasted_iota(jnp.int32, (g_pad, tk), 0)
    # {0,1} one-hot is exact in bf16; z is bf16 -> native MXU, f32 accumulate.
    onehot = (idx_ref[...] == g_iota).astype(jnp.bfloat16)       # [G_pad, TK]
    pooled_ref[...] += jnp.dot(onehot, z_ref[...],
                               preferred_element_type=jnp.float32)

    @pl.when(k == pl.num_programs(0) - 1)
    def _():
        h = jnp.dot(pooled_ref[...], w3_ref[...],
                    preferred_element_type=jnp.float32) + b3_ref[...]
        h = jnp.maximum(h, 0.0)
        logits = jnp.dot(h, w4_ref[...],
                         preferred_element_type=jnp.float32) + b4_ref[...]
        # Mask the zero-padded class lanes before log_softmax.
        lane = jax.lax.broadcasted_iota(jnp.int32, logits.shape, 1)
        logits = jnp.where(lane < n_class, logits, -1e30)
        m = jnp.max(logits, axis=-1, keepdims=True)
        shifted = logits - m
        lse = jnp.log(jnp.sum(jnp.exp(shifted), axis=-1, keepdims=True))
        out_ref[...] = shifted - lse


def _pool_head(idx_2d, z_bf16, w3, b3, w4, b4, *, n_class, g_pad, tile):
    n_pad, h2 = z_bf16.shape
    h3 = w3.shape[1]
    c_p = w4.shape[1]
    grid = (n_pad // tile,)
    kernel = functools.partial(_pool_head_kernel, n_class=n_class)
    return pl.pallas_call(
        kernel,
        out_shape=jax.ShapeDtypeStruct((g_pad, c_p), jnp.float32),
        grid_spec=pltpu.PrefetchScalarGridSpec(
            num_scalar_prefetch=0,
            grid=grid,
            in_specs=[
                pl.BlockSpec((1, tile), lambda k: (0, k)),     # graph ids
                pl.BlockSpec((tile, h2), lambda k: (k, 0)),    # z2 node tile
                pl.BlockSpec((h2, h3), lambda k: (0, 0)),
                pl.BlockSpec((1, h3), lambda k: (0, 0)),
                pl.BlockSpec((h3, c_p), lambda k: (0, 0)),
                pl.BlockSpec((1, c_p), lambda k: (0, 0)),
            ],
            out_specs=pl.BlockSpec((g_pad, c_p), lambda k: (0, 0)),
            scratch_shapes=[pltpu.VMEM((g_pad, h2), jnp.float32)],
        ),
        compiler_params=pltpu.CompilerParams(
            dimension_semantics=("arbitrary",)),
    )(idx_2d, z_bf16, w3, b3, w4, b4)


# ---------------------------------------------------------------------------
# Wrapper
# ---------------------------------------------------------------------------
@functools.partial(jax.jit, static_argnames=("n_graphs",))
def gnn_forward(x, adj, idx, params, *, n_graphs):
    """params: dict with fc{1..4} weights already transposed to [in, out]."""
    n, d = x.shape
    h1 = params["w1"].shape[1]
    h2 = params["w2"].shape[1]
    h3 = params["w3"].shape[1]
    c = params["w4"].shape[1]

    n_pad = _round_up(n, NODE_TILE)
    d_pad = _round_up(d, LANE)
    h1_pad = _round_up(h1, LANE)
    h2_pad = _round_up(h2, LANE)
    h3_pad = _round_up(h3, LANE)
    c_pad = _round_up(c, LANE)
    g_pad = _round_up(n_graphs, 8)

    # Pool kernel node tile: as large as possible while dividing n_pad.
    pool_tile = min(POOL_TILE, n_pad)
    while n_pad % pool_tile:
        pool_tile //= 2

    def pad2(a, rows, cols, dtype=jnp.float32):
        a = a.astype(dtype)
        return jnp.pad(a, ((0, rows - a.shape[0]), (0, cols - a.shape[1])))

    # Activations streamed as the `h` operand live in HBM as bf16 (halves
    # traffic, feeds the native bf16 MXU path). adj is {0,1} -> bf16 is
    # lossless; cast BEFORE padding so the prologue never builds an f32 copy.
    x_p = pad2(x, n_pad, d_pad, jnp.bfloat16)
    adj_p = pad2(adj, n_pad, n_pad, jnp.bfloat16)

    w1, b1 = pad2(params["w1"], d_pad, h1_pad), pad2(params["b1"], 1, h1_pad)
    w2, b2 = pad2(params["w2"], h1_pad, h2_pad), pad2(params["b2"], 1, h2_pad)
    w3, b3 = pad2(params["w3"], h2_pad, h3_pad), pad2(params["b3"], 1, h3_pad)
    w4, b4 = pad2(params["w4"], h3_pad, c_pad), pad2(params["b4"], 1, c_pad)

    # Padded nodes get graph id -1 so they never hit any pooling bucket.
    idx_p = jnp.full((1, n_pad), -1, jnp.int32).at[0, :n].set(
        idx.astype(jnp.int32))

    z1 = _propagate_fc(adj_p, x_p, w1, b1, apply_relu=True,
                       tile=NODE_TILE, out_dtype=jnp.bfloat16)
    z2 = _propagate_fc(adj_p, z1, w2, b2, apply_relu=False,
                       tile=NODE_TILE, out_dtype=jnp.bfloat16)
    out = _pool_head(idx_p, z2, w3, b3, w4, b4,
                     n_class=c, g_pad=g_pad, tile=pool_tile)
    return out[:n_graphs, :c]


def init_params(key, input_dim, h1, h2, h3, n_class):
    """nn.Linear-style init; weights pre-transposed to [in, out]."""
    def linear(k, fan_in, fan_out):
        kw, kb = jax.random.split(k)
        bound = 1.0 / jnp.sqrt(fan_in)
        w = jax.random.uniform(kw, (fan_in, fan_out), jnp.float32, -bound, bound)
        b = jax.random.uniform(kb, (1, fan_out), jnp.float32, -bound, bound)
        return w, b

    k1, k2, k3, k4 = jax.random.split(key, 4)
    w1, b1 = linear(k1, input_dim, h1)
    w2, b2 = linear(k2, h1, h2)
    w3, b3 = linear(k3, h2, h3)
    w4, b4 = linear(k4, h3, n_class)
    return dict(w1=w1, b1=b1, w2=w2, b2=b2, w3=w3, b3=b3, w4=w4, b4=b4)


def reference_forward(x, adj, idx, params, n_graphs):
    """Pure-JAX reference mirroring the PyTorch module (true-f32 matmuls)."""
    hp = jax.lax.Precision.HIGHEST
    a_tilde = jnp.eye(adj.shape[0], dtype=jnp.float32) + adj
    z1 = jax.nn.relu(
        jnp.dot(jnp.dot(a_tilde, x, precision=hp), params["w1"], precision=hp)
        + params["b1"])
    z2 = (jnp.dot(jnp.dot(a_tilde, z1, precision=hp), params["w2"], precision=hp)
          + params["b2"])
    pooled = jnp.zeros((n_graphs, z2.shape[1]), jnp.float32).at[idx].add(z2)
    h3 = jax.nn.relu(jnp.dot(pooled, params["w3"], precision=hp) + params["b3"])
    logits = jnp.dot(h3, params["w4"], precision=hp) + params["b4"]
    return jax.nn.log_softmax(logits, axis=1)


if __name__ == "__main__":
    # Small synthetic batch of 2 graphs, 8 nodes each.
    N, INPUT_DIM = 16, 8
    H1, H2, H3, N_CLASS = 32, 32, 32, 4

    key = jax.random.PRNGKey(0)
    kx, ka, kp = jax.random.split(key, 3)

    x = jax.random.normal(kx, (N, INPUT_DIM), jnp.float32)

    # symmetric adjacency with zero diagonal
    a_raw = (jax.random.uniform(ka, (N, N)) > 0.7).astype(jnp.float32)
    adj = jnp.triu(a_raw, 1)
    adj = adj + adj.T

    idx = jnp.concatenate([jnp.zeros(8, jnp.int32), jnp.ones(8, jnp.int32)])
    n_graphs = int(idx.max()) + 1  # static, like torch's max(idx)+1

    params = init_params(kp, INPUT_DIM, H1, H2, H3, N_CLASS)

    out = gnn_forward(x, adj, idx, params, n_graphs=n_graphs)
    out = jax.block_until_ready(out)

    ref = reference_forward(x, adj, idx, params, n_graphs)
    assert out.shape == (n_graphs, N_CLASS)
    assert bool(jnp.all(jnp.isfinite(out)))
    # Tolerance accounts for the bf16 MXU path + bf16 activation storage vs.
    # the HIGHEST-precision f32 reference; accumulation stays f32 in-kernel.
    assert jnp.allclose(out, ref, atol=1e-1, rtol=1e-1), "mismatch vs reference"

    print("KERNEL_OK")
</pallas_src>

<mosaic_0001>
module attributes {stable_mosaic.version = 11 : i64} {
  func.func @_prop_fc_kernel(%arg0: i32, %arg1: i32, %arg2: memref<512x512xbf16, #tpu.memory_space<vmem>>, %arg3: memref<512x128xbf16, #tpu.memory_space<vmem>>, %arg4: memref<128x128xf32, #tpu.memory_space<vmem>>, %arg5: memref<1x128xf32, #tpu.memory_space<vmem>>, %arg6: memref<512x128xbf16, #tpu.memory_space<vmem>>, %arg7: memref<512x128xf32, #tpu.memory_space<vmem>>) attributes {dimension_semantics = [#tpu.dimension_semantics<parallel>, #tpu.dimension_semantics<arbitrary>], iteration_bounds = array<i64: 1, 1>, scalar_prefetch = 0 : i64, scratch_operands = 1 : i64, tpu.core_type = #tpu.core_type<tc>, window_params = [{transform_indices = @transform_0, window_bounds = array<i64: 512, 512>}, {pipeline_mode = #tpu.pipeline_mode<synchronous>, transform_indices = @transform_1, window_bounds = array<i64: 512, 128>}, {pipeline_mode = #tpu.pipeline_mode<synchronous>, transform_indices = @transform_2, window_bounds = array<i64: 128, 128>}, {pipeline_mode = #tpu.pipeline_mode<synchronous>, transform_indices = @transform_3, window_bounds = array<i64: 1, 128>}, {transform_indices = @transform_4, window_bounds = array<i64: 512, 128>}]} {
    %c0_i32 = arith.constant 0 : i32
    %0 = arith.cmpi eq, %arg1, %c0_i32 : i32
    %1 = arith.extui %0 : i1 to i32
    %c0_i32_0 = arith.constant 0 : i32
    %2 = arith.cmpi ne, %1, %c0_i32_0 : i32
    scf.if %2 {
      %cst_10 = arith.constant 0.000000e+00 : f32
      %18 = vector.broadcast %cst_10 : f32 to vector<512x128xf32>
      %c0_11 = arith.constant 0 : index
      %c0_12 = arith.constant 0 : index
      %19 = vector.load %arg7[%c0_11, %c0_12] : memref<512x128xf32, #tpu.memory_space<vmem>>, vector<512x128xf32>
      tpu.vector_store %arg7[%c0_11, %c0_12], %18 {strides = array<i32>} : memref<512x128xf32, #tpu.memory_space<vmem>>, vector<512x128xf32>,
    } else {
    }
    %c512_i32 = arith.constant 512 : i32
    %3 = arith.muli %arg1, %c512_i32 : i32
    %4 = tpu.assume_multiple %3, 512 : i32
    %5 = arith.index_cast %4 : i32 to index
    %c0 = arith.constant 0 : index
    %6 = vector.load %arg3[%5, %c0] : memref<512x128xbf16, #tpu.memory_space<vmem>>, vector<512x128xbf16>
    %c0_1 = arith.constant 0 : index
    %c0_2 = arith.constant 0 : index
    %7 = vector.load %arg7[%c0_1, %c0_2] : memref<512x128xf32, #tpu.memory_space<vmem>>, vector<512x128xf32>
    %c0_3 = arith.constant 0 : index
    %c0_4 = arith.constant 0 : index
    %8 = vector.load %arg2[%c0_3, %c0_4] : memref<512x512xbf16, #tpu.memory_space<vmem>>, vector<512x512xbf16>
    %cst = arith.constant dense<0.000000e+00> : vector<512x128xf32>
    %9 = tpu.matmul %8, %6, %cst {dimension_numbers = #tpu.dot_dimension_numbers<[1], [0], [0], [1], [0, 0, 1, 1], [], []>} : vector<512x512xbf16>, vector<512x128xbf16>, vector<512x128xf32> -> vector<512x128xf32>
    %10 = arith.addf %7, %9 : vector<512x128xf32>
    %c0_5 = arith.constant 0 : index
    %c0_6 = arith.constant 0 : index
    %11 = vector.load %arg7[%c0_5, %c0_6] : memref<512x128xf32, #tpu.memory_space<vmem>>, vector<512x128xf32>
    tpu.vector_store %arg7[%c0_5, %c0_6], %10 {strides = array<i32>} : memref<512x128xf32, #tpu.memory_space<vmem>>, vector<512x128xf32>,
    %12 = arith.cmpi eq, %arg1, %arg0 : i32
    %13 = arith.extui %12 : i1 to i32
    %c0_i32_7 = arith.constant 0 : i32
    %14 = arith.cmpi ne, %13, %c0_i32_7 : i32
    scf.if %14 {
      %c0_10 = arith.constant 0 : index
      %c0_11 = arith.constant 0 : index
      %18 = vector.load %arg7[%c0_10, %c0_11] : memref<512x128xf32, #tpu.memory_space<vmem>>, vector<512x128xf32>
      %19 = arith.extf %6 : vector<512x128xbf16> to vector<512x128xf32>
      %20 = arith.addf %18, %19 : vector<512x128xf32>
      %c0_12 = arith.constant 0 : index
      %c0_13 = arith.constant 0 : index
      %21 = vector.load %arg7[%c0_12, %c0_13] : memref<512x128xf32, #tpu.memory_space<vmem>>, vector<512x128xf32>
      tpu.vector_store %arg7[%c0_12, %c0_13], %20 {strides = array<i32>} : memref<512x128xf32, #tpu.memory_space<vmem>>, vector<512x128xf32>,
    } else {
    }
    %c0_i32_8 = arith.constant 0 : i32
    %15 = arith.cmpi eq, %arg1, %c0_i32_8 : i32
    %16 = arith.extui %15 : i1 to i32
    %c0_i32_9 = arith.constant 0 : i32
    %17 = arith.cmpi ne, %16, %c0_i32_9 : i32
    scf.if %17 {
      %c0_10 = arith.constant 0 : index
      %c0_11 = arith.constant 0 : index
      %18 = vector.load %arg7[%c0_10, %c0_11] : memref<512x128xf32, #tpu.memory_space<vmem>>, vector<512x128xf32>
      %c0_12 = arith.constant 0 : index
      %c0_13 = arith.constant 0 : index
      %19 = vector.load %arg4[%c0_12, %c0_13] : memref<128x128xf32, #tpu.memory_space<vmem>>, vector<128x128xf32>
      %cst_14 = arith.constant dense<0.000000e+00> : vector<512x128xf32>
      %20 = tpu.matmul %18, %19, %cst_14 {dimension_numbers = #tpu.dot_dimension_numbers<[1], [0], [0], [1], [0, 0, 1, 1], [], []>} : vector<512x128xf32>, vector<128x128xf32>, vector<512x128xf32> -> vector<512x128xf32>
      %c0_15 = arith.constant 0 : index
      %c0_16 = arith.constant 0 : index
      %21 = vector.load %arg5[%c0_15, %c0_16] : memref<1x128xf32, #tpu.memory_space<vmem>>, vector<1x128xf32>
      %22 = vector.broadcast %21 : vector<1x128xf32> to vector<512x128xf32>
      %23 = arith.addf %20, %22 : vector<512x128xf32>
      %cst_17 = arith.constant 0.000000e+00 : f32
      %24 = vector.broadcast %cst_17 : f32 to vector<512x128xf32>
      %25 = arith.maximumf %23, %24 : vector<512x128xf32>
      %26 = arith.truncf %25 : vector<512x128xf32> to vector<512x128xbf16>
      %c0_18 = arith.constant 0 : index
      %c0_19 = arith.constant 0 : index
      %27 = vector.load %arg6[%c0_18, %c0_19] : memref<512x128xbf16, #tpu.memory_space<vmem>>, vector<512x128xbf16>
      tpu.vector_store %arg6[%c0_18, %c0_19], %26 {strides = array<i32>} : memref<512x128xbf16, #tpu.memory_space<vmem>>, vector<512x128xbf16>,
    } else {
    }
    return
  }
  func.func @transform_0(%arg0: i32, %arg1: i32) -> (i32, i32) {
    %c0_i32 = arith.constant 0 : i32
    return %arg0, %arg1 : i32, i32
  }
  func.func @transform_1(%arg0: i32, %arg1: i32) -> (i32, i32) {
    %c0_i32 = arith.constant 0 : i32
    %c0_i32_0 = arith.constant 0 : i32
    %c0_i32_1 = arith.constant 0 : i32
    return %c0_i32, %c0_i32_0 : i32, i32
  }
  func.func @transform_2(%arg0: i32, %arg1: i32) -> (i32, i32) {
    %c0_i32 = arith.constant 0 : i32
    %c0_i32_0 = arith.constant 0 : i32
    %c0_i32_1 = arith.constant 0 : i32
    return %c0_i32, %c0_i32_0 : i32, i32
  }
  func.func @transform_3(%arg0: i32, %arg1: i32) -> (i32, i32) {
    %c0_i32 = arith.constant 0 : i32
    %c0_i32_0 = arith.constant 0 : i32
    %c0_i32_1 = arith.constant 0 : i32
    return %c0_i32, %c0_i32_0 : i32, i32
  }
  func.func @transform_4(%arg0: i32, %arg1: i32) -> (i32, i32) {
    %c0_i32 = arith.constant 0 : i32
    %c0_i32_0 = arith.constant 0 : i32
    return %arg0, %c0_i32 : i32, i32
  }
}

module attributes {stable_mosaic.version = 11 : i64} {
  func.func @_prop_fc_kernel(%arg0: i32, %arg1: i32, %arg2: memref<512x512xbf16, #tpu.memory_space<vmem>>, %arg3: memref<512x128xbf16, #tpu.memory_space<vmem>>, %arg4: memref<128x128xf32, #tpu.memory_space<vmem>>, %arg5: memref<1x128xf32, #tpu.memory_space<vmem>>, %arg6: memref<512x128xbf16, #tpu.memory_space<vmem>>, %arg7: memref<512x128xf32, #tpu.memory_space<vmem>>) attributes {dimension_semantics = [#tpu.dimension_semantics<parallel>, #tpu.dimension_semantics<arbitrary>], iteration_bounds = array<i64: 1, 1>, scalar_prefetch = 0 : i64, scratch_operands = 1 : i64, tpu.core_type = #tpu.core_type<tc>, window_params = [{transform_indices = @transform_0, window_bounds = array<i64: 512, 512>}, {pipeline_mode = #tpu.pipeline_mode<synchronous>, transform_indices = @transform_1, window_bounds = array<i64: 512, 128>}, {pipeline_mode = #tpu.pipeline_mode<synchronous>, transform_indices = @transform_2, window_bounds = array<i64: 128, 128>}, {pipeline_mode = #tpu.pipeline_mode<synchronous>, transform_indices = @transform_3, window_bounds = array<i64: 1, 128>}, {transform_indices = @transform_4, window_bounds = array<i64: 512, 128>}]} {
    %c0_i32 = arith.constant 0 : i32
    %0 = arith.cmpi eq, %arg1, %c0_i32 : i32
    %1 = arith.extui %0 : i1 to i32
    %c0_i32_0 = arith.constant 0 : i32
    %2 = arith.cmpi ne, %1, %c0_i32_0 : i32
    scf.if %2 {
      %cst_10 = arith.constant 0.000000e+00 : f32
      %18 = vector.broadcast %cst_10 : f32 to vector<512x128xf32>
      %c0_11 = arith.constant 0 : index
      %c0_12 = arith.constant 0 : index
      %19 = vector.load %arg7[%c0_11, %c0_12] : memref<512x128xf32, #tpu.memory_space<vmem>>, vector<512x128xf32>
      tpu.vector_store %arg7[%c0_11, %c0_12], %18 {strides = array<i32>} : memref<512x128xf32, #tpu.memory_space<vmem>>, vector<512x128xf32>,
    } else {
    }
    %c512_i32 = arith.constant 512 : i32
    %3 = arith.muli %arg1, %c512_i32 : i32
    %4 = tpu.assume_multiple %3, 512 : i32
    %5 = arith.index_cast %4 : i32 to index
    %c0 = arith.constant 0 : index
    %6 = vector.load %arg3[%5, %c0] : memref<512x128xbf16, #tpu.memory_space<vmem>>, vector<512x128xbf16>
    %c0_1 = arith.constant 0 : index
    %c0_2 = arith.constant 0 : index
    %7 = vector.load %arg7[%c0_1, %c0_2] : memref<512x128xf32, #tpu.memory_space<vmem>>, vector<512x128xf32>
    %c0_3 = arith.constant 0 : index
    %c0_4 = arith.constant 0 : index
    %8 = vector.load %arg2[%c0_3, %c0_4] : memref<512x512xbf16, #tpu.memory_space<vmem>>, vector<512x512xbf16>
    %cst = arith.constant dense<0.000000e+00> : vector<512x128xf32>
    %9 = tpu.matmul %8, %6, %cst {dimension_numbers = #tpu.dot_dimension_numbers<[1], [0], [0], [1], [0, 0, 1, 1], [], []>} : vector<512x512xbf16>, vector<512x128xbf16>, vector<512x128xf32> -> vector<512x128xf32>
    %10 = arith.addf %7, %9 : vector<512x128xf32>
    %c0_5 = arith.constant 0 : index
    %c0_6 = arith.constant 0 : index
    %11 = vector.load %arg7[%c0_5, %c0_6] : memref<512x128xf32, #tpu.memory_space<vmem>>, vector<512x128xf32>
    tpu.vector_store %arg7[%c0_5, %c0_6], %10 {strides = array<i32>} : memref<512x128xf32, #tpu.memory_space<vmem>>, vector<512x128xf32>,
    %12 = arith.cmpi eq, %arg1, %arg0 : i32
    %13 = arith.extui %12 : i1 to i32
    %c0_i32_7 = arith.constant 0 : i32
    %14 = arith.cmpi ne, %13, %c0_i32_7 : i32
    scf.if %14 {
      %c0_10 = arith.constant 0 : index
      %c0_11 = arith.constant 0 : index
      %18 = vector.load %arg7[%c0_10, %c0_11] : memref<512x128xf32, #tpu.memory_space<vmem>>, vector<512x128xf32>
      %19 = arith.extf %6 : vector<512x128xbf16> to vector<512x128xf32>
      %20 = arith.addf %18, %19 : vector<512x128xf32>
      %c0_12 = arith.constant 0 : index
      %c0_13 = arith.constant 0 : index
      %21 = vector.load %arg7[%c0_12, %c0_13] : memref<512x128xf32, #tpu.memory_space<vmem>>, vector<512x128xf32>
      tpu.vector_store %arg7[%c0_12, %c0_13], %20 {strides = array<i32>} : memref<512x128xf32, #tpu.memory_space<vmem>>, vector<512x128xf32>,
    } else {
    }
    %c0_i32_8 = arith.constant 0 : i32
    %15 = arith.cmpi eq, %arg1, %c0_i32_8 : i32
    %16 = arith.extui %15 : i1 to i32
    %c0_i32_9 = arith.constant 0 : i32
    %17 = arith.cmpi ne, %16, %c0_i32_9 : i32
    scf.if %17 {
      %c0_10 = arith.constant 0 : index
      %c0_11 = arith.constant 0 : index
      %18 = vector.load %arg7[%c0_10, %c0_11] : memref<512x128xf32, #tpu.memory_space<vmem>>, vector<512x128xf32>
      %c0_12 = arith.constant 0 : index
      %c0_13 = arith.constant 0 : index
      %19 = vector.load %arg4[%c0_12, %c0_13] : memref<128x128xf32, #tpu.memory_space<vmem>>, vector<128x128xf32>
      %cst_14 = arith.constant dense<0.000000e+00> : vector<512x128xf32>
      %20 = tpu.matmul %18, %19, %cst_14 {dimension_numbers = #tpu.dot_dimension_numbers<[1], [0], [0], [1], [0, 0, 1, 1], [], []>} : vector<512x128xf32>, vector<128x128xf32>, vector<512x128xf32> -> vector<512x128xf32>
      %c0_15 = arith.constant 0 : index
      %c0_16 = arith.constant 0 : index
      %21 = vector.load %arg5[%c0_15, %c0_16] : memref<1x128xf32, #tpu.memory_space<vmem>>, vector<1x128xf32>
      %22 = vector.broadcast %21 : vector<1x128xf32> to vector<512x128xf32>
      %23 = arith.addf %20, %22 : vector<512x128xf32>
      %24 = arith.truncf %23 : vector<512x128xf32> to vector<512x128xbf16>
      %c0_17 = arith.constant 0 : index
      %c0_18 = arith.constant 0 : index
      %25 = vector.load %arg6[%c0_17, %c0_18] : memref<512x128xbf16, #tpu.memory_space<vmem>>, vector<512x128xbf16>
      tpu.vector_store %arg6[%c0_17, %c0_18], %24 {strides = array<i32>} : memref<512x128xbf16, #tpu.memory_space<vmem>>, vector<512x128xbf16>,
    } else {
    }
    return
  }
  func.func @transform_0(%arg0: i32, %arg1: i32) -> (i32, i32) {
    %c0_i32 = arith.constant 0 : i32
    return %arg0, %arg1 : i32, i32
  }
  func.func @transform_1(%arg0: i32, %arg1: i32) -> (i32, i32) {
    %c0_i32 = arith.constant 0 : i32
    %c0_i32_0 = arith.constant 0 : i32
    %c0_i32_1 = arith.constant 0 : i32
    return %c0_i32, %c0_i32_0 : i32, i32
  }
  func.func @transform_2(%arg0: i32, %arg1: i32) -> (i32, i32) {
    %c0_i32 = arith.constant 0 : i32
    %c0_i32_0 = arith.constant 0 : i32
    %c0_i32_1 = arith.constant 0 : i32
    return %c0_i32, %c0_i32_0 : i32, i32
  }
  func.func @transform_3(%arg0: i32, %arg1: i32) -> (i32, i32) {
    %c0_i32 = arith.constant 0 : i32
    %c0_i32_0 = arith.constant 0 : i32
    %c0_i32_1 = arith.constant 0 : i32
    return %c0_i32, %c0_i32_0 : i32, i32
  }
  func.func @transform_4(%arg0: i32, %arg1: i32) -> (i32, i32) {
    %c0_i32 = arith.constant 0 : i32
    %c0_i32_0 = arith.constant 0 : i32
    return %arg0, %c0_i32 : i32, i32
  }
}

module attributes {stable_mosaic.version = 11 : i64} {
  func.func @_pool_head_kernel(%arg0: i32, %arg1: memref<1x512xi32, #tpu.memory_space<vmem>>, %arg2: memref<512x128xbf16, #tpu.memory_space<vmem>>, %arg3: memref<128x128xf32, #tpu.memory_space<vmem>>, %arg4: memref<1x128xf32, #tpu.memory_space<vmem>>, %arg5: memref<128x128xf32, #tpu.memory_space<vmem>>, %arg6: memref<1x128xf32, #tpu.memory_space<vmem>>, %arg7: memref<8x128xf32, #tpu.memory_space<vmem>>, %arg8: memref<8x128xf32, #tpu.memory_space<vmem>>) attributes {dimension_semantics = [#tpu.dimension_semantics<arbitrary>], iteration_bounds = array<i64: 1>, scalar_prefetch = 0 : i64, scratch_operands = 1 : i64, tpu.core_type = #tpu.core_type<tc>, window_params = [{transform_indices = @transform_0, window_bounds = array<i64: 1, 512>}, {transform_indices = @transform_1, window_bounds = array<i64: 512, 128>}, {pipeline_mode = #tpu.pipeline_mode<synchronous>, transform_indices = @transform_2, window_bounds = array<i64: 128, 128>}, {pipeline_mode = #tpu.pipeline_mode<synchronous>, transform_indices = @transform_3, window_bounds = array<i64: 1, 128>}, {pipeline_mode = #tpu.pipeline_mode<synchronous>, transform_indices = @transform_4, window_bounds = array<i64: 128, 128>}, {pipeline_mode = #tpu.pipeline_mode<synchronous>, transform_indices = @transform_5, window_bounds = array<i64: 1, 128>}, {pipeline_mode = #tpu.pipeline_mode<synchronous>, transform_indices = @transform_6, window_bounds = array<i64: 8, 128>}]} {
    %c0_i32 = arith.constant 0 : i32
    %0 = arith.cmpi eq, %arg0, %c0_i32 : i32
    %1 = arith.extui %0 : i1 to i32
    %c0_i32_0 = arith.constant 0 : i32
    %2 = arith.cmpi ne, %1, %c0_i32_0 : i32
    scf.if %2 {
      %cst_10 = arith.constant 0.000000e+00 : f32
      %18 = vector.broadcast %cst_10 : f32 to vector<8x128xf32>
      %c0_11 = arith.constant 0 : index
      %c0_12 = arith.constant 0 : index
      %19 = vector.load %arg8[%c0_11, %c0_12] : memref<8x128xf32, #tpu.memory_space<vmem>>, vector<8x128xf32>
      tpu.vector_store %arg8[%c0_11, %c0_12], %18 {strides = array<i32>} : memref<8x128xf32, #tpu.memory_space<vmem>>, vector<8x128xf32>,
    } else {
    }
    %3 = tpu.iota {dimensions = array<i32: 0>} : vector<8x512xi32>
    %c0 = arith.constant 0 : index
    %c0_1 = arith.constant 0 : index
    %4 = vector.load %arg1[%c0, %c0_1] : memref<1x512xi32, #tpu.memory_space<vmem>>, vector<1x512xi32>
    %5 = vector.broadcast %4 : vector<1x512xi32> to vector<8x512xi32>
    %6 = arith.cmpi eq, %5, %3 : vector<8x512xi32>
    %7 = arith.extui %6 : vector<8x512xi1> to vector<8x512xi32>
    %8 = arith.sitofp %7 : vector<8x512xi32> to vector<8x512xf32>
    %9 = arith.truncf %8 : vector<8x512xf32> to vector<8x512xbf16>
    %c0_2 = arith.constant 0 : index
    %c0_3 = arith.constant 0 : index
    %10 = vector.load %arg8[%c0_2, %c0_3] : memref<8x128xf32, #tpu.memory_space<vmem>>, vector<8x128xf32>
    %c0_4 = arith.constant 0 : index
    %c0_5 = arith.constant 0 : index
    %11 = vector.load %arg2[%c0_4, %c0_5] : memref<512x128xbf16, #tpu.memory_space<vmem>>, vector<512x128xbf16>
    %cst = arith.constant dense<0.000000e+00> : vector<8x128xf32>
    %12 = tpu.matmul %9, %11, %cst {dimension_numbers = #tpu.dot_dimension_numbers<[1], [0], [0], [1], [0, 0, 1, 1], [], []>} : vector<8x512xbf16>, vector<512x128xbf16>, vector<8x128xf32> -> vector<8x128xf32>
    %13 = arith.addf %10, %12 : vector<8x128xf32>
    %c0_6 = arith.constant 0 : index
    %c0_7 = arith.constant 0 : index
    %14 = vector.load %arg8[%c0_6, %c0_7] : memref<8x128xf32, #tpu.memory_space<vmem>>, vector<8x128xf32>
    tpu.vector_store %arg8[%c0_6, %c0_7], %13 {strides = array<i32>} : memref<8x128xf32, #tpu.memory_space<vmem>>, vector<8x128xf32>,
    %c0_i32_8 = arith.constant 0 : i32
    %15 = arith.cmpi eq, %arg0, %c0_i32_8 : i32
    %16 = arith.extui %15 : i1 to i32
    %c0_i32_9 = arith.constant 0 : i32
    %17 = arith.cmpi ne, %16, %c0_i32_9 : i32
    scf.if %17 {
      %c0_10 = arith.constant 0 : index
      %c0_11 = arith.constant 0 : index
      %18 = vector.load %arg8[%c0_10, %c0_11] : memref<8x128xf32, #tpu.memory_space<vmem>>, vector<8x128xf32>
      %c0_12 = arith.constant 0 : index
      %c0_13 = arith.constant 0 : index
      %19 = vector.load %arg3[%c0_12, %c0_13] : memref<128x128xf32, #tpu.memory_space<vmem>>, vector<128x128xf32>
      %cst_14 = arith.constant dense<0.000000e+00> : vector<8x128xf32>
      %20 = tpu.matmul %18, %19, %cst_14 {dimension_numbers = #tpu.dot_dimension_numbers<[1], [0], [0], [1], [0, 0, 1, 1], [], []>} : vector<8x128xf32>, vector<128x128xf32>, vector<8x128xf32> -> vector<8x128xf32>
      %c0_15 = arith.constant 0 : index
      %c0_16 = arith.constant 0 : index
      %21 = vector.load %arg4[%c0_15, %c0_16] : memref<1x128xf32, #tpu.memory_space<vmem>>, vector<1x128xf32>
      %22 = vector.broadcast %21 : vector<1x128xf32> to vector<8x128xf32>
      %23 = arith.addf %20, %22 : vector<8x128xf32>
      %cst_17 = arith.constant 0.000000e+00 : f32
      %24 = vector.broadcast %cst_17 : f32 to vector<8x128xf32>
      %25 = arith.maximumf %23, %24 : vector<8x128xf32>
      %c0_18 = arith.constant 0 : index
      %c0_19 = arith.constant 0 : index
      %26 = vector.load %arg5[%c0_18, %c0_19] : memref<128x128xf32, #tpu.memory_space<vmem>>, vector<128x128xf32>
      %cst_20 = arith.constant dense<0.000000e+00> : vector<8x128xf32>
      %27 = tpu.matmul %25, %26, %cst_20 {dimension_numbers = #tpu.dot_dimension_numbers<[1], [0], [0], [1], [0, 0, 1, 1], [], []>} : vector<8x128xf32>, vector<128x128xf32>, vector<8x128xf32> -> vector<8x128xf32>
      %c0_21 = arith.constant 0 : index
      %c0_22 = arith.constant 0 : index
      %28 = vector.load %arg6[%c0_21, %c0_22] : memref<1x128xf32, #tpu.memory_space<vmem>>, vector<1x128xf32>
      %29 = vector.broadcast %28 : vector<1x128xf32> to vector<8x128xf32>
      %30 = arith.addf %27, %29 : vector<8x128xf32>
      %31 = tpu.iota {dimensions = array<i32: 1>} : vector<8x128xi32>
      %c4_i32 = arith.constant 4 : i32
      %32 = vector.broadcast %c4_i32 : i32 to vector<8x128xi32>
      %33 = arith.cmpi slt, %31, %32 : vector<8x128xi32>
      %cst_23 = arith.constant -1.000000e+30 : f32
      %34 = vector.broadcast %cst_23 : f32 to vector<8x128xf32>
      %35 = arith.select %33, %30, %34 : vector<8x128xi1>, vector<8x128xf32>
      %cst_24 = arith.constant dense<0xFF800000> : vector<8xf32>
      %36 = vector.multi_reduction <maximumf>, %35, %cst_24 [1] : vector<8x128xf32> to vector<8xf32>
      %37 = vector.shape_cast %36 : vector<8xf32> to vector<8x1xf32>
      %38 = vector.broadcast %37 : vector<8x1xf32> to vector<8x128xf32>
      %39 = arith.subf %35, %38 : vector<8x128xf32>
      %40 = math.exp %39 : vector<8x128xf32>
      %cst_25 = arith.constant dense<0.000000e+00> : vector<8xf32>
      %41 = vector.multi_reduction <add>, %40, %cst_25 [1] : vector<8x128xf32> to vector<8xf32>
      %42 = vector.shape_cast %41 : vector<8xf32> to vector<8x1xf32>
      %43 = math.log %42 : vector<8x1xf32>
      %44 = vector.broadcast %43 : vector<8x1xf32> to vector<8x128xf32>
      %45 = arith.subf %39, %44 : vector<8x128xf32>
      %c0_26 = arith.constant 0 : index
      %c0_27 = arith.constant 0 : index
      %46 = vector.load %arg7[%c0_26, %c0_27] : memref<8x128xf32, #tpu.memory_space<vmem>>, vector<8x128xf32>
      tpu.vector_store %arg7[%c0_26, %c0_27], %45 {strides = array<i32>} : memref<8x128xf32, #tpu.memory_space<vmem>>, vector<8x128xf32>,
    } else {
    }
    return
  }
  func.func @transform_0(%arg0: i32) -> (i32, i32) {
    %c0_i32 = arith.constant 0 : i32
    %c0_i32_0 = arith.constant 0 : i32
    return %c0_i32, %arg0 : i32, i32
  }
  func.func @transform_1(%arg0: i32) -> (i32, i32) {
    %c0_i32 = arith.constant 0 : i32
    %c0_i32_0 = arith.constant 0 : i32
    return %arg0, %c0_i32 : i32, i32
  }
  func.func @transform_2(%arg0: i32) -> (i32, i32) {
    %c0_i32 = arith.constant 0 : i32
    %c0_i32_0 = arith.constant 0 : i32
    %c0_i32_1 = arith.constant 0 : i32
    return %c0_i32, %c0_i32_0 : i32, i32
  }
  func.func @transform_3(%arg0: i32) -> (i32, i32) {
    %c0_i32 = arith.constant 0 : i32
    %c0_i32_0 = arith.constant 0 : i32
    %c0_i32_1 = arith.constant 0 : i32
    return %c0_i32, %c0_i32_0 : i32, i32
  }
  func.func @transform_4(%arg0: i32) -> (i32, i32) {
    %c0_i32 = arith.constant 0 : i32
    %c0_i32_0 = arith.constant 0 : i32
    %c0_i32_1 = arith.constant 0 : i32
    return %c0_i32, %c0_i32_0 : i32, i32
  }
  func.func @transform_5(%arg0: i32) -> (i32, i32) {
    %c0_i32 = arith.constant 0 : i32
    %c0_i32_0 = arith.constant 0 : i32
    %c0_i32_1 = arith.constant 0 : i32
    return %c0_i32, %c0_i32_0 : i32, i32
  }
  func.func @transform_6(%arg0: i32) -> (i32, i32) {
    %c0_i32 = arith.constant 0 : i32
    %c0_i32_0 = arith.constant 0 : i32
    %c0_i32_1 = arith.constant 0 : i32
    return %c0_i32, %c0_i32_0 : i32, i32
  }
}

</mosaic_0001>

<llo_original>
// kernel: gnn_forward.5
$region0: #{gnn_forward.5}
  #allocation0 [shape = 'u32[]', space=smem, size = 0x4, offset = 0x4, fixed_abs, tag = 'smem constant byte address 0x4 - core index']
  #allocation1 [shape = 'u32[72,128]{1,0:T(1,128)}', space=vmem, size = 0x9000, scoped, tag = 'internal scratch']
  #allocation2 [shape = 'f32[8,128]{1,0:T(8,128)}', space=vmem, size = 0x1000, scoped, tag = 'scratch operand']
  %s0 = inlined_call_operand.vmem [shape: s32[1,512], index: 0, kind: input, shape index: {}]
  %s1 = inlined_call_operand.vmem [shape: bf16[512,128], index: 1, kind: input, shape index: {}]
  %s2 = inlined_call_operand.vmem [shape: f32[128,128], index: 2, kind: input, shape index: {}]
  %s3 = inlined_call_operand.vmem [shape: f32[1,128], index: 3, kind: input, shape index: {}]
  %s4 = inlined_call_operand.vmem [shape: f32[128,128], index: 4, kind: input, shape index: {}]
  %s5 = inlined_call_operand.vmem [shape: f32[1,128], index: 5, kind: input, shape index: {}]
  %s6 = inlined_call_operand.vmem [shape: f32[8,128], index: 6, kind: output, shape index: {}]
  %s7 = sld [smem:[#allocation0]]
  $region42: #{gnn_forward.5} parent=0
    _
  %s9 = ssub.s32 1, %s7
  %s10 = scalar_select 0, %s9, %s7
  // Predicated region
  $region2: #{gnn_forward.5} parent=0 // pred_check
    _
  $region3: #{gnn_forward.5} parent=0 // pred_check_branch
    %12 = sbr.rel (0) target = $region5
  $region4: #{gnn_forward.5} parent=0 // pred_region
    _
  $region5: #{gnn_forward.5} parent=0 // pred_fallthru
    _
  // Predicated region
  $region6: #{gnn_forward.5} parent=0 // pred_check
    _
  $region7: #{gnn_forward.5} parent=0 // pred_check_branch
    %14 = sbr.rel (0) target = $region9
  $region8: #{gnn_forward.5} parent=0 // pred_region
    _
  $region9: #{gnn_forward.5} parent=0 // pred_fallthru
    _
  // Predicated region
  $region10: #{gnn_forward.5} parent=0 // pred_check
    _
  $region11: #{gnn_forward.5} parent=0 // pred_check_branch
    %16 = sbr.rel (0) target = $region13
  $region12: #{gnn_forward.5} parent=0 // pred_region
    _
  $region13: #{gnn_forward.5} parent=0 // pred_fallthru
    _
  // Predicated region
  $region14: #{gnn_forward.5} parent=0 // pred_check
    _
  $region15: #{gnn_forward.5} parent=0 // pred_check_branch
    %18 = sbr.rel (0) target = $region17
  $region16: #{gnn_forward.5} parent=0 // pred_region
    _
  $region17: #{gnn_forward.5} parent=0 // pred_fallthru
    _
  // Predicated region
  $region18: #{gnn_forward.5} parent=0 // pred_check
    _
  $region19: #{gnn_forward.5} parent=0 // pred_check_branch
    %20 = sbr.rel (0) target = $region21
  $region20: #{gnn_forward.5} parent=0 // pred_region
    _
  $region21: #{gnn_forward.5} parent=0 // pred_fallthru
    _
  // Predicated region
  $region22: #{gnn_forward.5} parent=0 // pred_check
    _
  $region23: #{gnn_forward.5} parent=0 // pred_check_branch
    %22 = sbr.rel (0) target = $region25
  $region24: #{gnn_forward.5} parent=0 // pred_region
    _
  $region25: #{gnn_forward.5} parent=0 // pred_fallthru
    _
  %p23 = scmp.eq.s32.totalorder 0, 0
  // Predicated region
  $region26: #{gnn_forward.5} parent=0 // pred_check
    %p24 = pneg %p23
  $region27: #{gnn_forward.5} parent=0 // pred_check_branch
    %26 = sbr.rel (%p24) target = $region29
  $region28: #{gnn_forward.5} parent=0 // pred_region
    %27 = vst [vmem:[#allocation2] sm:$0xff] 0.0
  $region29: #{gnn_forward.5} parent=0 // pred_fallthru
    _
  %v28 = vlaneseq
  %v29 = vshrl.u32 %v28, 7
  %v30 = vld [vmem:[%s0] sm:$0xf]
  %v31 = vperm.slane %v30, 0
  %v32 = vperm.slane %v30, 1
  %v33 = vperm.slane %v30, 2
  %v34 = vperm.slane %v30, 3
  %vm35 = vcmp.eq.s32.totalorder %v31, %v29
  %vm36 = vcmp.eq.s32.totalorder %v32, %v29
  %vm37 = vcmp.eq.s32.totalorder %v33, %v29
  %vm38 = vcmp.eq.s32.totalorder %v34, %v29
  %v39 = vsel %vm35, 1, 0
  %v40 = vsel %vm36, 1, 0
  %v41 = vsel %vm37, 1, 0
  %v42 = vsel %vm38, 1, 0
  %v43 = vcvt.s32.f32 %v39
  %v44 = vcvt.s32.f32 %v40
  %v45 = vcvt.s32.f32 %v41
  %v46 = vcvt.s32.f32 %v42
  %v47 = vpack.c.bf16 %v43, %v43
  %v48 = vpack.c.bf16 %v44, %v44
  %v49 = vpack.c.bf16 %v45, %v45
  %v50 = vpack.c.bf16 %v46, %v46
  %v51 = vld [vmem:[#allocation2] sm:$0xff]
  %v52 = vld [vmem:[%s1] sm:$0xf]
  %v53 = vld [vmem:[%s1 + $0x4] sm:$0xf]
  %v54 = vld [vmem:[%s1 + $0x8] sm:$0xf]
  %v55 = vld [vmem:[%s1 + $0xc] sm:$0xf]
  %v56 = vld [vmem:[%s1 + $0x10] sm:$0xf]
  %v57 = vld [vmem:[%s1 + $0x14] sm:$0xf]
  %v58 = vld [vmem:[%s1 + $0x18] sm:$0xf]
  %v59 = vld [vmem:[%s1 + $0x1c] sm:$0xf]
  %v60 = vld [vmem:[%s1 + $0x20] sm:$0xf]
  %v61 = vld [vmem:[%s1 + $0x24] sm:$0xf]
  %v62 = vld [vmem:[%s1 + $0x28] sm:$0xf]
  %v63 = vld [vmem:[%s1 + $0x2c] sm:$0xf]
  %v64 = vld [vmem:[%s1 + $0x30] sm:$0xf]
  %v65 = vld [vmem:[%s1 + $0x34] sm:$0xf]
  %v66 = vld [vmem:[%s1 + $0x38] sm:$0xf]
  %v67 = vld [vmem:[%s1 + $0x3c] sm:$0xf]
  %v68 = vld [vmem:[%s1 + $0x40] sm:$0xf]
  %v69 = vld [vmem:[%s1 + $0x44] sm:$0xf]
  %v70 = vld [vmem:[%s1 + $0x48] sm:$0xf]
  %v71 = vld [vmem:[%s1 + $0x4c] sm:$0xf]
  %v72 = vld [vmem:[%s1 + $0x50] sm:$0xf]
  %v73 = vld [vmem:[%s1 + $0x54] sm:$0xf]
  %v74 = vld [vmem:[%s1 + $0x58] sm:$0xf]
  %v75 = vld [vmem:[%s1 + $0x5c] sm:$0xf]
  %v76 = vld [vmem:[%s1 + $0x60] sm:$0xf]
  %v77 = vld [vmem:[%s1 + $0x64] sm:$0xf]
  %v78 = vld [vmem:[%s1 + $0x68] sm:$0xf]
  %v79 = vld [vmem:[%s1 + $0x6c] sm:$0xf]
  %v80 = vld [vmem:[%s1 + $0x70] sm:$0xf]
  %v81 = vld [vmem:[%s1 + $0x74] sm:$0xf]
  %v82 = vld [vmem:[%s1 + $0x78] sm:$0xf]
  %v83 = vld [vmem:[%s1 + $0x7c] sm:$0xf]
  %v84 = vld [vmem:[%s1 + $0x80] sm:$0xf]
  %v85 = vld [vmem:[%s1 + $0x84] sm:$0xf]
  %v86 = vld [vmem:[%s1 + $0x88] sm:$0xf]
  %v87 = vld [vmem:[%s1 + $0x8c] sm:$0xf]
  %v88 = vld [vmem:[%s1 + $0x90] sm:$0xf]
  %v89 = vld [vmem:[%s1 + $0x94] sm:$0xf]
  %v90 = vld [vmem:[%s1 + $0x98] sm:$0xf]
  %v91 = vld [vmem:[%s1 + $0x9c] sm:$0xf]
  %v92 = vld [vmem:[%s1 + $0xa0] sm:$0xf]
  %v93 = vld [vmem:[%s1 + $0xa4] sm:$0xf]
  %v94 = vld [vmem:[%s1 + $0xa8] sm:$0xf]
  %v95 = vld [vmem:[%s1 + $0xac] sm:$0xf]
  %v96 = vld [vmem:[%s1 + $0xb0] sm:$0xf]
  %v97 = vld [vmem:[%s1 + $0xb4] sm:$0xf]
  %v98 = vld [vmem:[%s1 + $0xb8] sm:$0xf]
  %v99 = vld [vmem:[%s1 + $0xbc] sm:$0xf]
  %v100 = vld [vmem:[%s1 + $0xc0] sm:$0xf]
  %v101 = vld [vmem:[%s1 + $0xc4] sm:$0xf]
  %v102 = vld [vmem:[%s1 + $0xc8] sm:$0xf]
  %v103 = vld [vmem:[%s1 + $0xcc] sm:$0xf]
  %v104 = vld [vmem:[%s1 + $0xd0] sm:$0xf]
  %v105 = vld [vmem:[%s1 + $0xd4] sm:$0xf]
  %v106 = vld [vmem:[%s1 + $0xd8] sm:$0xf]
  %v107 = vld [vmem:[%s1 + $0xdc] sm:$0xf]
  %v108 = vld [vmem:[%s1 + $0xe0] sm:$0xf]
  %v109 = vld [vmem:[%s1 + $0xe4] sm:$0xf]
  %v110 = vld [vmem:[%s1 + $0xe8] sm:$0xf]
  %v111 = vld [vmem:[%s1 + $0xec] sm:$0xf]
  %v112 = vld [vmem:[%s1 + $0xf0] sm:$0xf]
  %v113 = vld [vmem:[%s1 + $0xf4] sm:$0xf]
  %v114 = vld [vmem:[%s1 + $0xf8] sm:$0xf]
  %v115 = vld [vmem:[%s1 + $0xfc] sm:$0xf]
  %v180 = vunpack.c.l.b16 %v52
  %v181 = vunpack.c.l.b16 %v53
  %v182 = vunpack.c.l.b16 %v54
  %v183 = vunpack.c.l.b16 %v55
  %v184 = vunpack.c.l.b16 %v56
  %v185 = vunpack.c.l.b16 %v57
  %v186 = vunpack.c.l.b16 %v58
  %v187 = vunpack.c.l.b16 %v59
  %v188 = vunpack.c.l.b16 %v60
  %v189 = vunpack.c.l.b16 %v61
  %v190 = vunpack.c.l.b16 %v62
  %v191 = vunpack.c.l.b16 %v63
  %v192 = vunpack.c.l.b16 %v64
  %v193 = vunpack.c.l.b16 %v65
  %v194 = vunpack.c.l.b16 %v66
  %v195 = vunpack.c.l.b16 %v67
  %v196 = vunpack.c.l.b16 %v68
  %v197 = vunpack.c.l.b16 %v69
  %v198 = vunpack.c.l.b16 %v70
  %v199 = vunpack.c.l.b16 %v71
  %v200 = vunpack.c.l.b16 %v72
  %v201 = vunpack.c.l.b16 %v73
  %v202 = vunpack.c.l.b16 %v74
  %v203 = vunpack.c.l.b16 %v75
  %v204 = vunpack.c.l.b16 %v76
  %v205 = vunpack.c.l.b16 %v77
  %v206 = vunpack.c.l.b16 %v78
  %v207 = vunpack.c.l.b16 %v79
  %v208 = vunpack.c.l.b16 %v80
  %v209 = vunpack.c.l.b16 %v81
  %v210 = vunpack.c.l.b16 %v82
  %v211 = vunpack.c.l.b16 %v83
  %v212 = vunpack.c.l.b16 %v84
  %v213 = vunpack.c.l.b16 %v85
  %v214 = vunpack.c.l.b16 %v86
  %v215 = vunpack.c.l.b16 %v87
  %v216 = vunpack.c.l.b16 %v88
  %v217 = vunpack.c.l.b16 %v89
  %v218 = vunpack.c.l.b16 %v90
  %v219 = vunpack.c.l.b16 %v91
  %v220 = vunpack.c.l.b16 %v92
  %v221 = vunpack.c.l.b16 %v93
  %v222 = vunpack.c.l.b16 %v94
  %v223 = vunpack.c.l.b16 %v95
  %v224 = vunpack.c.l.b16 %v96
  %v225 = vunpack.c.l.b16 %v97
  %v226 = vunpack.c.l.b16 %v98
  %v227 = vunpack.c.l.b16 %v99
  %v228 = vunpack.c.l.b16 %v100
  %v229 = vunpack.c.l.b16 %v101
  %v230 = vunpack.c.l.b16 %v102
  %v231 = vunpack.c.l.b16 %v103
  %v232 = vunpack.c.l.b16 %v104
  %v233 = vunpack.c.l.b16 %v105
  %v234 = vunpack.c.l.b16 %v106
  %v235 = vunpack.c.l.b16 %v107
  %v236 = vunpack.c.l.b16 %v108
  %v237 = vunpack.c.l.b16 %v109
  %v238 = vunpack.c.l.b16 %v110
  %v239 = vunpack.c.l.b16 %v111
  %v240 = vunpack.c.l.b16 %v112
  %v241 = vunpack.c.l.b16 %v113
  %v242 = vunpack.c.l.b16 %v114
  %v243 = vunpack.c.l.b16 %v115
  %v244 = vpack.c.b16 %v181, %v180
  %v245 = vpack.c.b16 %v183, %v182
  %v246 = vpack.c.b16 %v185, %v184
  %v247 = vpack.c.b16 %v187, %v186
  %v248 = vpack.c.b16 %v189, %v188
  %v249 = vpack.c.b16 %v191, %v190
  %v250 = vpack.c.b16 %v193, %v192
  %v251 = vpack.c.b16 %v195, %v194
  %v252 = vpack.c.b16 %v197, %v196
  %v253 = vpack.c.b16 %v199, %v198
  %v254 = vpack.c.b16 %v201, %v200
  %v255 = vpack.c.b16 %v203, %v202
  %v256 = vpack.c.b16 %v205, %v204
  %v257 = vpack.c.b16 %v207, %v206
  %v258 = vpack.c.b16 %v209, %v208
  %v259 = vpack.c.b16 %v211, %v210
  %v260 = vpack.c.b16 %v213, %v212
  %v261 = vpack.c.b16 %v215, %v214
  %v262 = vpack.c.b16 %v217, %v216
  %v263 = vpack.c.b16 %v219, %v218
  %v264 = vpack.c.b16 %v221, %v220
  %v265 = vpack.c.b16 %v223, %v222
  %v266 = vpack.c.b16 %v225, %v224
  %v267 = vpack.c.b16 %v227, %v226
  %v268 = vpack.c.b16 %v229, %v228
  %v269 = vpack.c.b16 %v231, %v230
  %v270 = vpack.c.b16 %v233, %v232
  %v271 = vpack.c.b16 %v235, %v234
  %v272 = vpack.c.b16 %v237, %v236
  %v273 = vpack.c.b16 %v239, %v238
  %v274 = vpack.c.b16 %v241, %v240
  %v275 = vpack.c.b16 %v243, %v242
  %308 = vmatpush.bf16.msra.mxu0 %v251
  %309 = vmatpush.bf16.msra.mxu0 %v250
  %310 = vmatpush.bf16.msra.mxu0 %v249
  %311 = vmatpush.bf16.msra.mxu0 %v248
  %312 = vmatpush.bf16.msra.mxu0 %v247
  %313 = vmatpush.bf16.msra.mxu0 %v246
  %314 = vmatpush.bf16.msra.mxu0 %v245
  %315 = vmatpush.bf16.msra.mxu0 %v244
  %316 = vmatmul.bf16.gmra.mxu0 %v47
  %v317 = vpop.f32.mrf.mxu0
  %v318 = vadd.f32 0.0, %v317
  %v319 = vpop.f32.mrf.mxu0
  %320 = vdwg.mxu0
  %321 = vmatpush.bf16.msra.mxu0 %v259
  %322 = vmatpush.bf16.msra.mxu0 %v258
  %323 = vmatpush.bf16.msra.mxu0 %v257
  %324 = vmatpush.bf16.msra.mxu0 %v256
  %325 = vmatpush.bf16.msra.mxu0 %v255
  %326 = vmatpush.bf16.msra.mxu0 %v254
  %327 = vmatpush.bf16.msra.mxu0 %v253
  %328 = vmatpush.bf16.msra.mxu0 %v252
  %329 = vmatmul.bf16.gmra.mxu0 %v48
  %v330 = vpop.f32.mrf.mxu0
  %v331 = vadd.f32 %v318, %v330
  %v332 = vpop.f32.mrf.mxu0
  %333 = vdwg.mxu0
  %334 = vmatpush.bf16.msra.mxu0 %v267
  %335 = vmatpush.bf16.msra.mxu0 %v266
  %336 = vmatpush.bf16.msra.mxu0 %v265
  %337 = vmatpush.bf16.msra.mxu0 %v264
  %338 = vmatpush.bf16.msra.mxu0 %v263
  %339 = vmatpush.bf16.msra.mxu0 %v262
  %340 = vmatpush.bf16.msra.mxu0 %v261
  %341 = vmatpush.bf16.msra.mxu0 %v260
  %342 = vmatmul.bf16.gmra.mxu0 %v49
  %v343 = vpop.f32.mrf.mxu0
  %v344 = vadd.f32 %v331, %v343
  %v345 = vpop.f32.mrf.mxu0
  %346 = vdwg.mxu0
  %347 = vmatpush.bf16.msra.mxu0 %v275
  %348 = vmatpush.bf16.msra.mxu0 %v274
  %349 = vmatpush.bf16.msra.mxu0 %v273
  %350 = vmatpush.bf16.msra.mxu0 %v272
  %351 = vmatpush.bf16.msra.mxu0 %v271
  %352 = vmatpush.bf16.msra.mxu0 %v270
  %353 = vmatpush.bf16.msra.mxu0 %v269
  %354 = vmatpush.bf16.msra.mxu0 %v268
  %355 = vmatmul.bf16.gmra.mxu0 %v50
  %v356 = vpop.f32.mrf.mxu0
  %v357 = vadd.f32 %v344, %v356
  %v358 = vpop.f32.mrf.mxu0
  %359 = vdwg.mxu0
  %v360 = vadd.f32 %v51, %v357
  %361 = vst [vmem:[#allocation2] sm:$0xff] %v360
  // Predicated region
  $region30: #{gnn_forward.5} parent=0 // pred_check
    %p362 = pneg %p23
  $region31: #{gnn_forward.5} parent=0 // pred_check_branch
    %364 = sbr.rel (%p362) target = $region33
  $region32: #{gnn_forward.5} parent=0 // pred_region
    %v365 = vld [vmem:[#allocation2] sm:$0xff]
    %v366 = vld [vmem:[%s2] sm:$0xff]
    %v367 = vld [vmem:[%s2 + $0x8] sm:$0xff]
    %v368 = vld [vmem:[%s2 + $0x10] sm:$0xff]
    %v369 = vld [vmem:[%s2 + $0x18] sm:$0xff]
    %v370 = vld [vmem:[%s2 + $0x20] sm:$0xff]
    %v371 = vld [vmem:[%s2 + $0x28] sm:$0xff]
    %v372 = vld [vmem:[%s2 + $0x30] sm:$0xff]
    %v373 = vld [vmem:[%s2 + $0x38] sm:$0xff]
    %v374 = vld [vmem:[%s2 + $0x40] sm:$0xff]
    %v375 = vld [vmem:[%s2 + $0x48] sm:$0xff]
    %v376 = vld [vmem:[%s2 + $0x50] sm:$0xff]
    %v377 = vld [vmem:[%s2 + $0x58] sm:$0xff]
    %v378 = vld [vmem:[%s2 + $0x60] sm:$0xff]
    %v379 = vld [vmem:[%s2 + $0x68] sm:$0xff]
    %v380 = vld [vmem:[%s2 + $0x70] sm:$0xff]
    %v381 = vld [vmem:[%s2 + $0x78] sm:$0xff]
    %v382 = vld [vmem:[%s3] sm:$0x1]
    %v384 = vperm.slane %v382, 0
    %386 = vmatpush.msra.mxu0 %v381
    %387 = vmatpush.msra.mxu0 %v380
    %388 = vmatpush.msra.mxu0 %v379
    %389 = vmatpush.msra.mxu0 %v378
    %390 = vmatpush.msra.mxu0 %v377
    %391 = vmatpush.msra.mxu0 %v376
    %392 = vmatpush.msra.mxu0 %v375
    %393 = vmatpush.msra.mxu0 %v374
    %394 = vmatpush.msra.mxu0 %v373
    %395 = vmatpush.msra.mxu0 %v372
    %396 = vmatpush.msra.mxu0 %v371
    %397 = vmatpush.msra.mxu0 %v370
    %398 = vmatpush.msra.mxu0 %v369
    %399 = vmatpush.msra.mxu0 %v368
    %400 = vmatpush.msra.mxu0 %v367
    %401 = vmatpush.msra.mxu0 %v366
    %402 = vmatmul.f32.gmra.mxu0 %v365
    %v403 = vpop.f32.mrf.mxu0
    %v404 = vadd.f32 %v384, %v403
    %405 = vdwg.mxu0
    %v406 = vmax.f32 %v404, 0.0
    %v407 = vld [vmem:[%s4] sm:$0xff]
    %v408 = vld [vmem:[%s4 + $0x8] sm:$0xff]
    %v409 = vld [vmem:[%s4 + $0x10] sm:$0xff]
    %v410 = vld [vmem:[%s4 + $0x18] sm:$0xff]
    %v411 = vld [vmem:[%s4 + $0x20] sm:$0xff]
    %v412 = vld [vmem:[%s4 + $0x28] sm:$0xff]
    %v413 = vld [vmem:[%s4 + $0x30] sm:$0xff]
    %v414 = vld [vmem:[%s4 + $0x38] sm:$0xff]
    %v415 = vld [vmem:[%s4 + $0x40] sm:$0xff]
    %v416 = vld [vmem:[%s4 + $0x48] sm:$0xff]
    %v417 = vld [vmem:[%s4 + $0x50] sm:$0xff]
    %v418 = vld [vmem:[%s4 + $0x58] sm:$0xff]
    %v419 = vld [vmem:[%s4 + $0x60] sm:$0xff]
    %v420 = vld [vmem:[%s4 + $0x68] sm:$0xff]
    %v421 = vld [vmem:[%s4 + $0x70] sm:$0xff]
    %v422 = vld [vmem:[%s4 + $0x78] sm:$0xff]
    %v423 = vld [vmem:[%s5] sm:$0x1]
    %v425 = vperm.slane %v423, 0
    %427 = vmatpush.msra.mxu0 %v422
    %428 = vmatpush.msra.mxu0 %v421
    %429 = vmatpush.msra.mxu0 %v420
    %430 = vmatpush.msra.mxu0 %v419
    %431 = vmatpush.msra.mxu0 %v418
    %432 = vmatpush.msra.mxu0 %v417
    %433 = vmatpush.msra.mxu0 %v416
    %434 = vmatpush.msra.mxu0 %v415
    %435 = vmatpush.msra.mxu0 %v414
    %436 = vmatpush.msra.mxu0 %v413
    %437 = vmatpush.msra.mxu0 %v412
    %438 = vmatpush.msra.mxu0 %v411
    %439 = vmatpush.msra.mxu0 %v410
    %440 = vmatpush.msra.mxu0 %v409
    %441 = vmatpush.msra.mxu0 %v408
    %442 = vmatpush.msra.mxu0 %v407
    %443 = vmatmul.f32.gmra.mxu0 %v406
    %v444 = vpop.f32.mrf.mxu0
    %v445 = vadd.f32 %v425, %v444
    %446 = vdwg.mxu0
    %v447 = vlaneseq
    %v448 = vand.u32 %v447, 127
    %vm449 = vcmp.lt.s32.totalorder %v448, 4
    %v450 = vsel %vm449, %v445, -1e+30
    %451 = vmax.xlane.f32.xlu0 %v450
    %v452 = vpop.xlane.xlu0 %451
    %v453 = vsub.f32 %v450, %v452
    %v454 = vmul.f32 %v453, 1.442695
    %v455 = vpow.pop %v454
    %456 = vadd.xlane.f32.xlu0 %v455
    %v457 = vpop.xlane.xlu0 %456
    %v458 = vlog2.pop %v457
    %v459 = vmul.f32 %v458, 0.6931472
    %v460 = vsub.f32 %v453, %v459
    %461 = vst [vmem:[%s6] sm:$0xff] %v460
  $region33: #{gnn_forward.5} parent=0 // pred_fallthru
    _
  // Predicated region
  $region34: #{gnn_forward.5} parent=0 // pred_check
    _
  $region35: #{gnn_forward.5} parent=0 // pred_check_branch
    %463 = sbr.rel (0) target = $region37
  $region36: #{gnn_forward.5} parent=0 // pred_region
    _
  $region37: #{gnn_forward.5} parent=0 // pred_fallthru
    _
  // Predicated region
  $region38: #{gnn_forward.5} parent=0 // pred_check
    _
  $region39: #{gnn_forward.5} parent=0 // pred_check_branch
    %465 = sbr.rel (0) target = $region41
  $region40: #{gnn_forward.5} parent=0 // pred_region
    _
  $region41: #{gnn_forward.5} parent=0 // pred_fallthru
    _

// kernel: gnn_forward.4
$region0: #{gnn_forward.4}
  #allocation0 [shape = 'u32[]', space=smem, size = 0x4, offset = 0x4, fixed_abs, tag = 'smem constant byte address 0x4 - core index']
  #allocation1 [shape = 'u32[72,128]{1,0:T(1,128)}', space=vmem, size = 0x9000, scoped, tag = 'internal scratch']
  #allocation2 [shape = 'f32[512,128]{1,0:T(8,128)}', space=vmem, size = 0x40000, scoped, tag = 'scratch operand']
  %s0 = inlined_call_operand.vmem [shape: bf16[512,512], index: 0, kind: input, shape index: {}]
  %s1 = inlined_call_operand.vmem [shape: bf16[512,128], index: 1, kind: input, shape index: {}]
  %s2 = inlined_call_operand.vmem [shape: f32[128,128], index: 2, kind: input, shape index: {}]
  %s3 = inlined_call_operand.vmem [shape: f32[1,128], index: 3, kind: input, shape index: {}]
  %s4 = inlined_call_operand.vmem [shape: bf16[512,128], index: 4, kind: output, shape index: {}]
  %s5 = sld [smem:[#allocation0]]
  $region38: #{gnn_forward.4} parent=0
    _
  %s7 = ssub.s32 1, %s5
  %s8 = scalar_select 0, %s7, %s5
  // Predicated region
  $region2: #{gnn_forward.4} parent=0 // pred_check
    _
  $region3: #{gnn_forward.4} parent=0 // pred_check_branch
    %10 = sbr.rel (0) target = $region5
  $region4: #{gnn_forward.4} parent=0 // pred_region
    _
  $region5: #{gnn_forward.4} parent=0 // pred_fallthru
    _
  // Predicated region
  $region6: #{gnn_forward.4} parent=0 // pred_check
    _
  $region7: #{gnn_forward.4} parent=0 // pred_check_branch
    %12 = sbr.rel (0) target = $region9
  $region8: #{gnn_forward.4} parent=0 // pred_region
    _
  $region9: #{gnn_forward.4} parent=0 // pred_fallthru
    _
  // Predicated region
  $region10: #{gnn_forward.4} parent=0 // pred_check
    _
  $region11: #{gnn_forward.4} parent=0 // pred_check_branch
    %14 = sbr.rel (0) target = $region13
  $region12: #{gnn_forward.4} parent=0 // pred_region
    _
  $region13: #{gnn_forward.4} parent=0 // pred_fallthru
    _
  // Predicated region
  $region14: #{gnn_forward.4} parent=0 // pred_check
    _
  $region15: #{gnn_forward.4} parent=0 // pred_check_branch
    %16 = sbr.rel (0) target = $region17
  $region16: #{gnn_forward.4} parent=0 // pred_region
    _
  $region17: #{gnn_forward.4} parent=0 // pred_fallthru
    _
  %p17 = scmp.eq.s32.totalorder 0, 0
  // Predicated region
  $region18: #{gnn_forward.4} parent=0 // pred_check
    %p18 = pneg %p17
  $region19: #{gnn_forward.4} parent=0 // pred_check_branch
    %20 = sbr.rel (%p18) target = $region21
  $region20: #{gnn_forward.4} parent=0 // pred_region
    %21 = vst [vmem:[#allocation2] sm:$0xff] 0.0
    %22 = vst [vmem:[#allocation2 + $0x8] sm:$0xff] 0.0
    %23 = vst [vmem:[#allocation2 + $0x10] sm:$0xff] 0.0
    %24 = vst [vmem:[#allocation2 + $0x18] sm:$0xff] 0.0
    %25 = vst [vmem:[#allocation2 + $0x20] sm:$0xff] 0.0
    %26 = vst [vmem:[#allocation2 + $0x28] sm:$0xff] 0.0
    %27 = vst [vmem:[#allocation2 + $0x30] sm:$0xff] 0.0
    %28 = vst [vmem:[#allocation2 + $0x38] sm:$0xff] 0.0
    %29 = vst [vmem:[#allocation2 + $0x40] sm:$0xff] 0.0
    %30 = vst [vmem:[#allocation2 + $0x48] sm:$0xff] 0.0
    %31 = vst [vmem:[#allocation2 + $0x50] sm:$0xff] 0.0
    %32 = vst [vmem:[#allocation2 + $0x58] sm:$0xff] 0.0
    %33 = vst [vmem:[#allocation2 + $0x60] sm:$0xff] 0.0
    %34 = vst [vmem:[#allocation2 + $0x68] sm:$0xff] 0.0
    %35 = vst [vmem:[#allocation2 + $0x70] sm:$0xff] 0.0
    %36 = vst [vmem:[#allocation2 + $0x78] sm:$0xff] 0.0
    %37 = vst [vmem:[#allocation2 + $0x80] sm:$0xff] 0.0
    %38 = vst [vmem:[#allocation2 + $0x88] sm:$0xff] 0.0
    %39 = vst [vmem:[#allocation2 + $0x90] sm:$0xff] 0.0
    %40 = vst [vmem:[#allocation2 + $0x98] sm:$0xff] 0.0
    %41 = vst [vmem:[#allocation2 + $0xa0] sm:$0xff] 0.0
    %42 = vst [vmem:[#allocation2 + $0xa8] sm:$0xff] 0.0
    %43 = vst [vmem:[#allocation2 + $0xb0] sm:$0xff] 0.0
    %44 = vst [vmem:[#allocation2 + $0xb8] sm:$0xff] 0.0
    %45 = vst [vmem:[#allocation2 + $0xc0] sm:$0xff] 0.0
    %46 = vst [vmem:[#allocation2 + $0xc8] sm:$0xff] 0.0
    %47 = vst [vmem:[#allocation2 + $0xd0] sm:$0xff] 0.0
    %48 = vst [vmem:[#allocation2 + $0xd8] sm:$0xff] 0.0
    %49 = vst [vmem:[#allocation2 + $0xe0] sm:$0xff] 0.0
    %50 = vst [vmem:[#allocation2 + $0xe8] sm:$0xff] 0.0
    %51 = vst [vmem:[#allocation2 + $0xf0] sm:$0xff] 0.0
    %52 = vst [vmem:[#allocation2 + $0xf8] sm:$0xff] 0.0
    %53 = vst [vmem:[#allocation2 + $0x100] sm:$0xff] 0.0
    %54 = vst [vmem:[#allocation2 + $0x108] sm:$0xff] 0.0
    %55 = vst [vmem:[#allocation2 + $0x110] sm:$0xff] 0.0
    %56 = vst [vmem:[#allocation2 + $0x118] sm:$0xff] 0.0
    %57 = vst [vmem:[#allocation2 + $0x120] sm:$0xff] 0.0
    %58 = vst [vmem:[#allocation2 + $0x128] sm:$0xff] 0.0
    %59 = vst [vmem:[#allocation2 + $0x130] sm:$0xff] 0.0
    %60 = vst [vmem:[#allocation2 + $0x138] sm:$0xff] 0.0
    %61 = vst [vmem:[#allocation2 + $0x140] sm:$0xff] 0.0
    %62 = vst [vmem:[#allocation2 + $0x148] sm:$0xff] 0.0
    %63 = vst [vmem:[#allocation2 + $0x150] sm:$0xff] 0.0
    %64 = vst [vmem:[#allocation2 + $0x158] sm:$0xff] 0.0
    %65 = vst [vmem:[#allocation2 + $0x160] sm:$0xff] 0.0
    %66 = vst [vmem:[#allocation2 + $0x168] sm:$0xff] 0.0
    %67 = vst [vmem:[#allocation2 + $0x170] sm:$0xff] 0.0
    %68 = vst [vmem:[#allocation2 + $0x178] sm:$0xff] 0.0
    %69 = vst [vmem:[#allocation2 + $0x180] sm:$0xff] 0.0
    %70 = vst [vmem:[#allocation2 + $0x188] sm:$0xff] 0.0
    %71 = vst [vmem:[#allocation2 + $0x190] sm:$0xff] 0.0
    %72 = vst [vmem:[#allocation2 + $0x198] sm:$0xff] 0.0
    %73 = vst [vmem:[#allocation2 + $0x1a0] sm:$0xff] 0.0
    %74 = vst [vmem:[#allocation2 + $0x1a8] sm:$0xff] 0.0
    %75 = vst [vmem:[#allocation2 + $0x1b0] sm:$0xff] 0.0
    %76 = vst [vmem:[#allocation2 + $0x1b8] sm:$0xff] 0.0
    %77 = vst [vmem:[#allocation2 + $0x1c0] sm:$0xff] 0.0
    %78 = vst [vmem:[#allocation2 + $0x1c8] sm:$0xff] 0.0
    %79 = vst [vmem:[#allocation2 + $0x1d0] sm:$0xff] 0.0
    %80 = vst [vmem:[#allocation2 + $0x1d8] sm:$0xff] 0.0
    %81 = vst [vmem:[#allocation2 + $0x1e0] sm:$0xff] 0.0
    %82 = vst [vmem:[#allocation2 + $0x1e8] sm:$0xff] 0.0
    %83 = vst [vmem:[#allocation2 + $0x1f0] sm:$0xff] 0.0
    %84 = vst [vmem:[#allocation2 + $0x1f8] sm:$0xff] 0.0
  $region21: #{gnn_forward.4} parent=0 // pred_fallthru
    _
  %s85 = smul.u32 0, 512
  %s86 = sshra.s32 %s85, 3
  %s87 = sand.u32 %s85, 7
  %s88 = smul.addr %s86, 4
  %s89 = scalar_lea.vmem %s1, %s88
  %v90 = vld [vmem:[%s89] sm:$0xf]
  %v91 = vld [vmem:[%s89 + $0x4] sm:$0xf]
  %v92 = vld [vmem:[%s89 + $0x8] sm:$0xf]
  %v93 = vld [vmem:[%s89 + $0xc] sm:$0xf]
  %v94 = vld [vmem:[%s89 + $0x10] sm:$0xf]
  %v95 = vld [vmem:[%s89 + $0x14] sm:$0xf]
  %v96 = vld [vmem:[%s89 + $0x18] sm:$0xf]
  %v97 = vld [vmem:[%s89 + $0x1c] sm:$0xf]
  %v98 = vld [vmem:[%s89 + $0x20] sm:$0xf]
  %v99 = vld [vmem:[%s89 + $0x24] sm:$0xf]
  %v100 = vld [vmem:[%s89 + $0x28] sm:$0xf]
  %v101 = vld [vmem:[%s89 + $0x2c] sm:$0xf]
  %v102 = vld [vmem:[%s89 + $0x30] sm:$0xf]
  %v103 = vld [vmem:[%s89 + $0x34] sm:$0xf]
  %v104 = vld [vmem:[%s89 + $0x38] sm:$0xf]
  %v105 = vld [vmem:[%s89 + $0x3c] sm:$0xf]
  %v106 = vld [vmem:[%s89 + $0x40] sm:$0xf]
  %v107 = vld [vmem:[%s89 + $0x44] sm:$0xf]
  %v108 = vld [vmem:[%s89 + $0x48] sm:$0xf]
  %v109 = vld [vmem:[%s89 + $0x4c] sm:$0xf]
  %v110 = vld [vmem:[%s89 + $0x50] sm:$0xf]
  %v111 = vld [vmem:[%s89 + $0x54] sm:$0xf]
  %v112 = vld [vmem:[%s89 + $0x58] sm:$0xf]
  %v113 = vld [vmem:[%s89 + $0x5c] sm:$0xf]
  %v114 = vld [vmem:[%s89 + $0x60] sm:$0xf]
  %v115 = vld [vmem:[%s89 + $0x64] sm:$0xf]
  %v116 = vld [vmem:[%s89 + $0x68] sm:$0xf]
  %v117 = vld [vmem:[%s89 + $0x6c] sm:$0xf]
  %v118 = vld [vmem:[%s89 + $0x70] sm:$0xf]
  %v119 = vld [vmem:[%s89 + $0x74] sm:$0xf]
  %v120 = vld [vmem:[%s89 + $0x78] sm:$0xf]
  %v121 = vld [vmem:[%s89 + $0x7c] sm:$0xf]
  %v122 = vld [vmem:[%s89 + $0x80] sm:$0xf]
  %v123 = vld [vmem:[%s89 + $0x84] sm:$0xf]
  %v124 = vld [vmem:[%s89 + $0x88] sm:$0xf]
  %v125 = vld [vmem:[%s89 + $0x8c] sm:$0xf]
  %v126 = vld [vmem:[%s89 + $0x90] sm:$0xf]
  %v127 = vld [vmem:[%s89 + $0x94] sm:$0xf]
  %v128 = vld [vmem:[%s89 + $0x98] sm:$0xf]
  %v129 = vld [vmem:[%s89 + $0x9c] sm:$0xf]
  %v130 = vld [vmem:[%s89 + $0xa0] sm:$0xf]
  %v131 = vld [vmem:[%s89 + $0xa4] sm:$0xf]
  %v132 = vld [vmem:[%s89 + $0xa8] sm:$0xf]
  %v133 = vld [vmem:[%s89 + $0xac] sm:$0xf]
  %v134 = vld [vmem:[%s89 + $0xb0] sm:$0xf]
  %v135 = vld [vmem:[%s89 + $0xb4] sm:$0xf]
  %v136 = vld [vmem:[%s89 + $0xb8] sm:$0xf]
  %v137 = vld [vmem:[%s89 + $0xbc] sm:$0xf]
  %v138 = vld [vmem:[%s89 + $0xc0] sm:$0xf]
  %v139 = vld [vmem:[%s89 + $0xc4] sm:$0xf]
  %v140 = vld [vmem:[%s89 + $0xc8] sm:$0xf]
  %v141 = vld [vmem:[%s89 + $0xcc] sm:$0xf]
  %v142 = vld [vmem:[%s89 + $0xd0] sm:$0xf]
  %v143 = vld [vmem:[%s89 + $0xd4] sm:$0xf]
  %v144 = vld [vmem:[%s89 + $0xd8] sm:$0xf]
  %v145 = vld [vmem:[%s89 + $0xdc] sm:$0xf]
  %v146 = vld [vmem:[%s89 + $0xe0] sm:$0xf]
  %v147 = vld [vmem:[%s89 + $0xe4] sm:$0xf]
  %v148 = vld [vmem:[%s89 + $0xe8] sm:$0xf]
  %v149 = vld [vmem:[%s89 + $0xec] sm:$0xf]
  %v150 = vld [vmem:[%s89 + $0xf0] sm:$0xf]
  %v151 = vld [vmem:[%s89 + $0xf4] sm:$0xf]
  %v152 = vld [vmem:[%s89 + $0xf8] sm:$0xf]
  %v153 = vld [vmem:[%s89 + $0xfc] sm:$0xf]
  %v154 = vld [vmem:[#allocation2] sm:$0xff]
  %v155 = vld [vmem:[#allocation2 + $0x8] sm:$0xff]
  %v156 = vld [vmem:[#allocation2 + $0x10] sm:$0xff]
  %v157 = vld [vmem:[#allocation2 + $0x18] sm:$0xff]
  %v158 = vld [vmem:[#allocation2 + $0x20] sm:$0xff]
  %v159 = vld [vmem:[#allocation2 + $0x28] sm:$0xff]
  %v160 = vld [vmem:[#allocation2 + $0x30] sm:$0xff]
  %v161 = vld [vmem:[#allocation2 + $0x38] sm:$0xff]
  %v162 = vld [vmem:[#allocation2 + $0x40] sm:$0xff]
  %v163 = vld [vmem:[#allocation2 + $0x48] sm:$0xff]
  %v164 = vld [vmem:[#allocation2 + $0x50] sm:$0xff]
  %v165 = vld [vmem:[#allocation2 + $0x58] sm:$0xff]
  %v166 = vld [vmem:[#allocation2 + $0x60] sm:$0xff]
  %v167 = vld [vmem:[#allocation2 + $0x68] sm:$0xff]
  %v168 = vld [vmem:[#allocation2 + $0x70] sm:$0xff]
  %v169 = vld [vmem:[#allocation2 + $0x78] sm:$0xff]
  %v170 = vld [vmem:[#allocation2 + $0x80] sm:$0xff]
  %v171 = vld [vmem:[#allocation2 + $0x88] sm:$0xff]
  %v172 = vld [vmem:[#allocation2 + $0x90] sm:$0xff]
  %v173 = vld [vmem:[#allocation2 + $0x98] sm:$0xff]
  %v174 = vld [vmem:[#allocation2 + $0xa0] sm:$0xff]
  %v175 = vld [vmem:[#allocation2 + $0xa8] sm:$0xff]
  %v176 = vld [vmem:[#allocation2 + $0xb0] sm:$0xff]
  %v177 = vld [vmem:[#allocation2 + $0xb8] sm:$0xff]
  %v178 = vld [vmem:[#allocation2 + $0xc0] sm:$0xff]
  %v179 = vld [vmem:[#allocation2 + $0xc8] sm:$0xff]
  %v180 = vld [vmem:[#allocation2 + $0xd0] sm:$0xff]
  %v181 = vld [vmem:[#allocation2 + $0xd8] sm:$0xff]
  %v182 = vld [vmem:[#allocation2 + $0xe0] sm:$0xff]
  %v183 = vld [vmem:[#allocation2 + $0xe8] sm:$0xff]
  %v184 = vld [vmem:[#allocation2 + $0xf0] sm:$0xff]
  %v185 = vld [vmem:[#allocation2 + $0xf8] sm:$0xff]
  %v186 = vld [vmem:[#allocation2 + $0x100] sm:$0xff]
  %v187 = vld [vmem:[#allocation2 + $0x108] sm:$0xff]
  %v188 = vld [vmem:[#allocation2 + $0x110] sm:$0xff]
  %v189 = vld [vmem:[#allocation2 + $0x118] sm:$0xff]
  %v190 = vld [vmem:[#allocation2 + $0x120] sm:$0xff]
  %v191 = vld [vmem:[#allocation2 + $0x128] sm:$0xff]
  %v192 = vld [vmem:[#allocation2 + $0x130] sm:$0xff]
  %v193 = vld [vmem:[#allocation2 + $0x138] sm:$0xff]
  %v194 = vld [vmem:[#allocation2 + $0x140] sm:$0xff]
  %v195 = vld [vmem:[#allocation2 + $0x148] sm:$0xff]
  %v196 = vld [vmem:[#allocation2 + $0x150] sm:$0xff]
  %v197 = vld [vmem:[#allocation2 + $0x158] sm:$0xff]
  %v198 = vld [vmem:[#allocation2 + $0x160] sm:$0xff]
  %v199 = vld [vmem:[#allocation2 + $0x168] sm:$0xff]
  %v200 = vld [vmem:[#allocation2 + $0x170] sm:$0xff]
  %v201 = vld [vmem:[#allocation2 + $0x178] sm:$0xff]
  %v202 = vld [vmem:[#allocation2 + $0x180] sm:$0xff]
  %v203 = vld [vmem:[#allocation2 + $0x188] sm:$0xff]
  %v204 = vld [vmem:[#allocation2 + $0x190] sm:$0xff]
  %v205 = vld [vmem:[#allocation2 + $0x198] sm:$0xff]
  %v206 = vld [vmem:[#allocation2 + $0x1a0] sm:$0xff]
  %v207 = vld [vmem:[#allocation2 + $0x1a8] sm:$0xff]
  %v208 = vld [vmem:[#allocation2 + $0x1b0] sm:$0xff]
  %v209 = vld [vmem:[#allocation2 + $0x1b8] sm:$0xff]
  %v210 = vld [vmem:[#allocation2 + $0x1c0] sm:$0xff]
  %v211 = vld [vmem:[#allocation2 + $0x1c8] sm:$0xff]
  %v212 = vld [vmem:[#allocation2 + $0x1d0] sm:$0xff]
  %v213 = vld [vmem:[#allocation2 + $0x1d8] sm:$0xff]
  %v214 = vld [vmem:[#allocation2 + $0x1e0] sm:$0xff]
  %v215 = vld [vmem:[#allocation2 + $0x1e8] sm:$0xff]
  %v216 = vld [vmem:[#allocation2 + $0x1f0] sm:$0xff]
  %v217 = vld [vmem:[#allocation2 + $0x1f8] sm:$0xff]
  %v218 = vld [vmem:[%s0] sm:$0xff]
  %v219 = vld [vmem:[%s0 + $0x8] sm:$0xff]
  %v220 = vld [vmem:[%s0 + $0x10] sm:$0xff]
  %v221 = vld [vmem:[%s0 + $0x18] sm:$0xff]
  %v222 = vld [vmem:[%s0 + $0x20] sm:$0xff]
  %v223 = vld [vmem:[%s0 + $0x28] sm:$0xff]
  %v224 = vld [vmem:[%s0 + $0x30] sm:$0xff]
  %v225 = vld [vmem:[%s0 + $0x38] sm:$0xff]
  %v226 = vld [vmem:[%s0 + $0x40] sm:$0xff]
  %v227 = vld [vmem:[%s0 + $0x48] sm:$0xff]
  %v228 = vld [vmem:[%s0 + $0x50] sm:$0xff]
  %v229 = vld [vmem:[%s0 + $0x58] sm:$0xff]
  %v230 = vld [vmem:[%s0 + $0x60] sm:$0xff]
  %v231 = vld [vmem:[%s0 + $0x68] sm:$0xff]
  %v232 = vld [vmem:[%s0 + $0x70] sm:$0xff]
  %v233 = vld [vmem:[%s0 + $0x78] sm:$0xff]
  %v234 = vld [vmem:[%s0 + $0x80] sm:$0xff]
  %v235 = vld [vmem:[%s0 + $0x88] sm:$0xff]
  %v236 = vld [vmem:[%s0 + $0x90] sm:$0xff]
  %v237 = vld [vmem:[%s0 + $0x98] sm:$0xff]
  %v238 = vld [vmem:[%s0 + $0xa0] sm:$0xff]
  %v239 = vld [vmem:[%s0 + $0xa8] sm:$0xff]
  %v240 = vld [vmem:[%s0 + $0xb0] sm:$0xff]
  %v241 = vld [vmem:[%s0 + $0xb8] sm:$0xff]
  %v242 = vld [vmem:[%s0 + $0xc0] sm:$0xff]
  %v243 = vld [vmem:[%s0 + $0xc8] sm:$0xff]
  %v244 = vld [vmem:[%s0 + $0xd0] sm:$0xff]
  %v245 = vld [vmem:[%s0 + $0xd8] sm:$0xff]
  %v246 = vld [vmem:[%s0 + $0xe0] sm:$0xff]
  %v247 = vld [vmem:[%s0 + $0xe8] sm:$0xff]
  %v248 = vld [vmem:[%s0 + $0xf0] sm:$0xff]
  %v249 = vld [vmem:[%s0 + $0xf8] sm:$0xff]
  %v250 = vld [vmem:[%s0 + $0x100] sm:$0xff]
  %v251 = vld [vmem:[%s0 + $0x108] sm:$0xff]
  %v252 = vld [vmem:[%s0 + $0x110] sm:$0xff]
  %v253 = vld [vmem:[%s0 + $0x118] sm:$0xff]
  %v254 = vld [vmem:[%s0 + $0x120] sm:$0xff]
  %v255 = vld [vmem:[%s0 + $0x128] sm:$0xff]
  %v256 = vld [vmem:[%s0 + $0x130] sm:$0xff]
  %v257 = vld [vmem:[%s0 + $0x138] sm:$0xff]
  %v258 = vld [vmem:[%s0 + $0x140] sm:$0xff]
  %v259 = vld [vmem:[%s0 + $0x148] sm:$0xff]
  %v260 = vld [vmem:[%s0 + $0x150] sm:$0xff]
  %v261 = vld [vmem:[%s0 + $0x158] sm:$0xff]
  %v262 = vld [vmem:[%s0 + $0x160] sm:$0xff]
  %v263 = vld [vmem:[%s0 + $0x168] sm:$0xff]
  %v264 = vld [vmem:[%s0 + $0x170] sm:$0xff]
  %v265 = vld [vmem:[%s0 + $0x178] sm:$0xff]
  %v266 = vld [vmem:[%s0 + $0x180] sm:$0xff]
  %v267 = vld [vmem:[%s0 + $0x188] sm:$0xff]
  %v268 = vld [vmem:[%s0 + $0x190] sm:$0xff]
  %v269 = vld [vmem:[%s0 + $0x198] sm:$0xff]
  %v270 = vld [vmem:[%s0 + $0x1a0] sm:$0xff]
  %v271 = vld [vmem:[%s0 + $0x1a8] sm:$0xff]
  %v272 = vld [vmem:[%s0 + $0x1b0] sm:$0xff]
  %v273 = vld [vmem:[%s0 + $0x1b8] sm:$0xff]
  %v274 = vld [vmem:[%s0 + $0x1c0] sm:$0xff]
  %v275 = vld [vmem:[%s0 + $0x1c8] sm:$0xff]
  %v276 = vld [vmem:[%s0 + $0x1d0] sm:$0xff]
  %v277 = vld [vmem:[%s0 + $0x1d8] sm:$0xff]
  %v278 = vld [vmem:[%s0 + $0x1e0] sm:$0xff]
  %v279 = vld [vmem:[%s0 + $0x1e8] sm:$0xff]
  %v280 = vld [vmem:[%s0 + $0x1f0] sm:$0xff]
  %v281 = vld [vmem:[%s0 + $0x1f8] sm:$0xff]
  %v282 = vld [vmem:[%s0 + $0x200] sm:$0xff]
  %v283 = vld [vmem:[%s0 + $0x208] sm:$0xff]
  %v284 = vld [vmem:[%s0 + $0x210] sm:$0xff]
  %v285 = vld [vmem:[%s0 + $0x218] sm:$0xff]
  %v286 = vld [vmem:[%s0 + $0x220] sm:$0xff]
  %v287 = vld [vmem:[%s0 + $0x228] sm:$0xff]
  %v288 = vld [vmem:[%s0 + $0x230] sm:$0xff]
  %v289 = vld [vmem:[%s0 + $0x238] sm:$0xff]
  %v290 = vld [vmem:[%s0 + $0x240] sm:$0xff]
  %v291 = vld [vmem:[%s0 + $0x248] sm:$0xff]
  %v292 = vld [vmem:[%s0 + $0x250] sm:$0xff]
  %v293 = vld [vmem:[%s0 + $0x258] sm:$0xff]
  %v294 = vld [vmem:[%s0 + $0x260] sm:$0xff]
  %v295 = vld [vmem:[%s0 + $0x268] sm:$0xff]
  %v296 = vld [vmem:[%s0 + $0x270] sm:$0xff]
  %v297 = vld [vmem:[%s0 + $0x278] sm:$0xff]
  %v298 = vld [vmem:[%s0 + $0x280] sm:$0xff]
  %v299 = vld [vmem:[%s0 + $0x288] sm:$0xff]
  %v300 = vld [vmem:[%s0 + $0x290] sm:$0xff]
  %v301 = vld [vmem:[%s0 + $0x298] sm:$0xff]
  %v302 = vld [vmem:[%s0 + $0x2a0] sm:$0xff]
  %v303 = vld [vmem:[%s0 + $0x2a8] sm:$0xff]
  %v304 = vld [vmem:[%s0 + $0x2b0] sm:$0xff]
  %v305 = vld [vmem:[%s0 + $0x2b8] sm:$0xff]
  %v306 = vld [vmem:[%s0 + $0x2c0] sm:$0xff]
  %v307 = vld [vmem:[%s0 + $0x2c8] sm:$0xff]
  %v308 = vld [vmem:[%s0 + $0x2d0] sm:$0xff]
  %v309 = vld [vmem:[%s0 + $0x2d8] sm:$0xff]
  %v310 = vld [vmem:[%s0 + $0x2e0] sm:$0xff]
  %v311 = vld [vmem:[%s0 + $0x2e8] sm:$0xff]
  %v312 = vld [vmem:[%s0 + $0x2f0] sm:$0xff]
  %v313 = vld [vmem:[%s0 + $0x2f8] sm:$0xff]
  %v314 = vld [vmem:[%s0 + $0x300] sm:$0xff]
  %v315 = vld [vmem:[%s0 + $0x308] sm:$0xff]
  %v316 = vld [vmem:[%s0 + $0x310] sm:$0xff]
  %v317 = vld [vmem:[%s0 + $0x318] sm:$0xff]
  %v318 = vld [vmem:[%s0 + $0x320] sm:$0xff]
  %v319 = vld [vmem:[%s0 + $0x328] sm:$0xff]
  %v320 = vld [vmem:[%s0 + $0x330] sm:$0xff]
  %v321 = vld [vmem:[%s0 + $0x338] sm:$0xff]
  %v322 = vld [vmem:[%s0 + $0x340] sm:$0xff]
  %v323 = vld [vmem:[%s0 + $0x348] sm:$0xff]
  %v324 = vld [vmem:[%s0 + $0x350] sm:$0xff]
  %v325 = vld [vmem:[%s0 + $0x358] sm:$0xff]
  %v326 = vld [vmem:[%s0 + $0x360] sm:$0xff]
  %v327 = vld [vmem:[%s0 + $0x368] sm:$0xff]
  %v328 = vld [vmem:[%s0 + $0x370] sm:$0xff]
  %v329 = vld [vmem:[%s0 + $0x378] sm:$0xff]
  %v330 = vld [vmem:[%s0 + $0x380] sm:$0xff]
  %v331 = vld [vmem:[%s0 + $0x388] sm:$0xff]
  %v332 = vld [vmem:[%s0 + $0x390] sm:$0xff]
  %v333 = vld [vmem:[%s0 + $0x398] sm:$0xff]
  %v334 = vld [vmem:[%s0 + $0x3a0] sm:$0xff]
  %v335 = vld [vmem:[%s0 + $0x3a8] sm:$0xff]
  %v336 = vld [vmem:[%s0 + $0x3b0] sm:$0xff]
  %v337 = vld [vmem:[%s0 + $0x3b8] sm:$0xff]
  %v338 = vld [vmem:[%s0 + $0x3c0] sm:$0xff]
  %v339 = vld [vmem:[%s0 + $0x3c8] sm:$0xff]
  %v340 = vld [vmem:[%s0 + $0x3d0] sm:$0xff]
  %v341 = vld [vmem:[%s0 + $0x3d8] sm:$0xff]
  %v342 = vld [vmem:[%s0 + $0x3e0] sm:$0xff]
  %v343 = vld [vmem:[%s0 + $0x3e8] sm:$0xff]
  %v344 = vld [vmem:[%s0 + $0x3f0] sm:$0xff]
  %v345 = vld [vmem:[%s0 + $0x3f8] sm:$0xff]
  %v474 = vunpack.c.l.b16 %v218
  %v475 = vunpack.c.h.b16 %v218
  %v476 = vunpack.c.l.b16 %v219
  %v477 = vunpack.c.h.b16 %v219
  %v478 = vunpack.c.l.b16 %v220
  %v479 = vunpack.c.h.b16 %v220
  %v480 = vunpack.c.l.b16 %v221
  %v481 = vunpack.c.h.b16 %v221
  %v482 = vunpack.c.l.b16 %v222
  %v483 = vunpack.c.h.b16 %v222
  %v484 = vunpack.c.l.b16 %v223
  %v485 = vunpack.c.h.b16 %v223
  %v486 = vunpack.c.l.b16 %v224
  %v487 = vunpack.c.h.b16 %v224
  %v488 = vunpack.c.l.b16 %v225
  %v489 = vunpack.c.h.b16 %v225
  %v490 = vunpack.c.l.b16 %v226
  %v491 = vunpack.c.h.b16 %v226
  %v492 = vunpack.c.l.b16 %v227
  %v493 = vunpack.c.h.b16 %v227
  %v494 = vunpack.c.l.b16 %v228
  %v495 = vunpack.c.h.b16 %v228
  %v496 = vunpack.c.l.b16 %v229
  %v497 = vunpack.c.h.b16 %v229
  %v498 = vunpack.c.l.b16 %v230
  %v499 = vunpack.c.h.b16 %v230
  %v500 = vunpack.c.l.b16 %v231
  %v501 = vunpack.c.h.b16 %v231
  %v502 = vunpack.c.l.b16 %v232
  %v503 = vunpack.c.h.b16 %v232
  %v504 = vunpack.c.l.b16 %v233
  %v505 = vunpack.c.h.b16 %v233
  %v506 = vunpack.c.l.b16 %v234
  %v507 = vunpack.c.h.b16 %v234
  %v508 = vunpack.c.l.b16 %v235
  %v509 = vunpack.c.h.b16 %v235
  %v510 = vunpack.c.l.b16 %v236
  %v511 = vunpack.c.h.b16 %v236
  %v512 = vunpack.c.l.b16 %v237
  %v513 = vunpack.c.h.b16 %v237
  %v514 = vunpack.c.l.b16 %v238
  %v515 = vunpack.c.h.b16 %v238
  %v516 = vunpack.c.l.b16 %v239
  %v517 = vunpack.c.h.b16 %v239
  %v518 = vunpack.c.l.b16 %v240
  %v519 = vunpack.c.h.b16 %v240
  %v520 = vunpack.c.l.b16 %v241
  %v521 = vunpack.c.h.b16 %v241
  %v522 = vunpack.c.l.b16 %v242
  %v523 = vunpack.c.h.b16 %v242
  %v524 = vunpack.c.l.b16 %v243
  %v525 = vunpack.c.h.b16 %v243
  %v526 = vunpack.c.l.b16 %v244
  %v527 = vunpack.c.h.b16 %v244
  %v528 = vunpack.c.l.b16 %v245
  %v529 = vunpack.c.h.b16 %v245
  %v530 = vunpack.c.l.b16 %v246
  %v531 = vunpack.c.h.b16 %v246
  %v532 = vunpack.c.l.b16 %v247
  %v533 = vunpack.c.h.b16 %v247
  %v534 = vunpack.c.l.b16 %v248
  %v535 = vunpack.c.h.b16 %v248
  %v536 = vunpack.c.l.b16 %v249
  %v537 = vunpack.c.h.b16 %v249
  %v538 = vunpack.c.l.b16 %v250
  %v539 = vunpack.c.h.b16 %v250
  %v540 = vunpack.c.l.b16 %v251
  %v541 = vunpack.c.h.b16 %v251
  %v542 = vunpack.c.l.b16 %v252
  %v543 = vunpack.c.h.b16 %v252
  %v544 = vunpack.c.l.b16 %v253
  %v545 = vunpack.c.h.b16 %v253
  %v546 = vunpack.c.l.b16 %v254
  %v547 = vunpack.c.h.b16 %v254
  %v548 = vunpack.c.l.b16 %v255
  %v549 = vunpack.c.h.b16 %v255
  %v550 = vunpack.c.l.b16 %v256
  %v551 = vunpack.c.h.b16 %v256
  %v552 = vunpack.c.l.b16 %v257
  %v553 = vunpack.c.h.b16 %v257
  %v554 = vunpack.c.l.b16 %v258
  %v555 = vunpack.c.h.b16 %v258
  %v556 = vunpack.c.l.b16 %v259
  %v557 = vunpack.c.h.b16 %v259
  %v558 = vunpack.c.l.b16 %v260
  %v559 = vunpack.c.h.b16 %v260
  %v560 = vunpack.c.l.b16 %v261
  %v561 = vunpack.c.h.b16 %v261
  %v562 = vunpack.c.l.b16 %v262
  %v563 = vunpack.c.h.b16 %v262
  %v564 = vunpack.c.l.b16 %v263
  %v565 = vunpack.c.h.b16 %v263
  %v566 = vunpack.c.l.b16 %v264
  %v567 = vunpack.c.h.b16 %v264
  %v568 = vunpack.c.l.b16 %v265
  %v569 = vunpack.c.h.b16 %v265
  %v570 = vunpack.c.l.b16 %v266
  %v571 = vunpack.c.h.b16 %v266
  %v572 = vunpack.c.l.b16 %v267
  %v573 = vunpack.c.h.b16 %v267
  %v574 = vunpack.c.l.b16 %v268
  %v575 = vunpack.c.h.b16 %v268
  %v576 = vunpack.c.l.b16 %v269
  %v577 = vunpack.c.h.b16 %v269
  %v578 = vunpack.c.l.b16 %v270
  %v579 = vunpack.c.h.b16 %v270
  %v580 = vunpack.c.l.b16 %v271
  %v581 = vunpack.c.h.b16 %v271
  %v582 = vunpack.c.l.b16 %v272
  %v583 = vunpack.c.h.b16 %v272
  %v584 = vunpack.c.l.b16 %v273
  %v585 = vunpack.c.h.b16 %v273
  %v586 = vunpack.c.l.b16 %v274
  %v587 = vunpack.c.h.b16 %v274
  %v588 = vunpack.c.l.b16 %v275
  %v589 = vunpack.c.h.b16 %v275
  %v590 = vunpack.c.l.b16 %v276
  %v591 = vunpack.c.h.b16 %v276
  %v592 = vunpack.c.l.b16 %v277
  %v593 = vunpack.c.h.b16 %v277
  %v594 = vunpack.c.l.b16 %v278
  %v595 = vunpack.c.h.b16 %v278
  %v596 = vunpack.c.l.b16 %v279
  %v597 = vunpack.c.h.b16 %v279
  %v598 = vunpack.c.l.b16 %v280
  %v599 = vunpack.c.h.b16 %v280
  %v600 = vunpack.c.l.b16 %v281
  %v601 = vunpack.c.h.b16 %v281
  %v602 = vunpack.c.l.b16 %v282
  %v603 = vunpack.c.h.b16 %v282
  %v604 = vunpack.c.l.b16 %v283
  %v605 = vunpack.c.h.b16 %v283
  %v606 = vunpack.c.l.b16 %v284
  %v607 = vunpack.c.h.b16 %v284
  %v608 = vunpack.c.l.b16 %v285
  %v609 = vunpack.c.h.b16 %v285
  %v610 = vunpack.c.l.b16 %v286
  %v611 = vunpack.c.h.b16 %v286
  %v612 = vunpack.c.l.b16 %v287
  %v613 = vunpack.c.h.b16 %v287
  %v614 = vunpack.c.l.b16 %v288
  %v615 = vunpack.c.h.b16 %v288
  %v616 = vunpack.c.l.b16 %v289
  %v617 = vunpack.c.h.b16 %v289
  %v618 = vunpack.c.l.b16 %v290
  %v619 = vunpack.c.h.b16 %v290
  %v620 = vunpack.c.l.b16 %v291
  %v621 = vunpack.c.h.b16 %v291
  %v622 = vunpack.c.l.b16 %v292
  %v623 = vunpack.c.h.b16 %v292
  %v624 = vunpack.c.l.b16 %v293
  %v625 = vunpack.c.h.b16 %v293
  %v626 = vunpack.c.l.b16 %v294
  %v627 = vunpack.c.h.b16 %v294
  %v628 = vunpack.c.l.b16 %v295
  %v629 = vunpack.c.h.b16 %v295
  %v630 = vunpack.c.l.b16 %v296
  %v631 = vunpack.c.h.b16 %v296
  %v632 = vunpack.c.l.b16 %v297
  %v633 = vunpack.c.h.b16 %v297
  %v634 = vunpack.c.l.b16 %v298
  %v635 = vunpack.c.h.b16 %v298
  %v636 = vunpack.c.l.b16 %v299
  %v637 = vunpack.c.h.b16 %v299
  %v638 = vunpack.c.l.b16 %v300
  %v639 = vunpack.c.h.b16 %v300
  %v640 = vunpack.c.l.b16 %v301
  %v641 = vunpack.c.h.b16 %v301
  %v642 = vunpack.c.l.b16 %v302
  %v643 = vunpack.c.h.b16 %v302
  %v644 = vunpack.c.l.b16 %v303
  %v645 = vunpack.c.h.b16 %v303
  %v646 = vunpack.c.l.b16 %v304
  %v647 = vunpack.c.h.b16 %v304
  %v648 = vunpack.c.l.b16 %v305
  %v649 = vunpack.c.h.b16 %v305
  %v650 = vunpack.c.l.b16 %v306
  %v651 = vunpack.c.h.b16 %v306
  %v652 = vunpack.c.l.b16 %v307
  %v653 = vunpack.c.h.b16 %v307
  %v654 = vunpack.c.l.b16 %v308
  %v655 = vunpack.c.h.b16 %v308
  %v656 = vunpack.c.l.b16 %v309
  %v657 = vunpack.c.h.b16 %v309
  %v658 = vunpack.c.l.b16 %v310
  %v659 = vunpack.c.h.b16 %v310
  %v660 = vunpack.c.l.b16 %v311
  %v661 = vunpack.c.h.b16 %v311
  %v662 = vunpack.c.l.b16 %v312
  %v663 = vunpack.c.h.b16 %v312
  %v664 = vunpack.c.l.b16 %v313
  %v665 = vunpack.c.h.b16 %v313
  %v666 = vunpack.c.l.b16 %v314
  %v667 = vunpack.c.h.b16 %v314
  %v668 = vunpack.c.l.b16 %v315
  %v669 = vunpack.c.h.b16 %v315
  %v670 = vunpack.c.l.b16 %v316
  %v671 = vunpack.c.h.b16 %v316
  %v672 = vunpack.c.l.b16 %v317
  %v673 = vunpack.c.h.b16 %v317
  %v674 = vunpack.c.l.b16 %v318
  %v675 = vunpack.c.h.b16 %v318
  %v676 = vunpack.c.l.b16 %v319
  %v677 = vunpack.c.h.b16 %v319
  %v678 = vunpack.c.l.b16 %v320
  %v679 = vunpack.c.h.b16 %v320
  %v680 = vunpack.c.l.b16 %v321
  %v681 = vunpack.c.h.b16 %v321
  %v682 = vunpack.c.l.b16 %v322
  %v683 = vunpack.c.h.b16 %v322
  %v684 = vunpack.c.l.b16 %v323
  %v685 = vunpack.c.h.b16 %v323
  %v686 = vunpack.c.l.b16 %v324
  %v687 = vunpack.c.h.b16 %v324
  %v688 = vunpack.c.l.b16 %v325
  %v689 = vunpack.c.h.b16 %v325
  %v690 = vunpack.c.l.b16 %v326
  %v691 = vunpack.c.h.b16 %v326
  %v692 = vunpack.c.l.b16 %v327
  %v693 = vunpack.c.h.b16 %v327
  %v694 = vunpack.c.l.b16 %v328
  %v695 = vunpack.c.h.b16 %v328
  %v696 = vunpack.c.l.b16 %v329
  %v697 = vunpack.c.h.b16 %v329
  %v698 = vunpack.c.l.b16 %v330
  %v699 = vunpack.c.h.b16 %v330
  %v700 = vunpack.c.l.b16 %v331
  %v701 = vunpack.c.h.b16 %v331
  %v702 = vunpack.c.l.b16 %v332
  %v703 = vunpack.c.h.b16 %v332
  %v704 = vunpack.c.l.b16 %v333
  %v705 = vunpack.c.h.b16 %v333
  %v706 = vunpack.c.l.b16 %v334
  %v707 = vunpack.c.h.b16 %v334
  %v708 = vunpack.c.l.b16 %v335
  %v709 = vunpack.c.h.b16 %v335
  %v710 = vunpack.c.l.b16 %v336
  %v711 = vunpack.c.h.b16 %v336
  %v712 = vunpack.c.l.b16 %v337
  %v713 = vunpack.c.h.b16 %v337
  %v714 = vunpack.c.l.b16 %v338
  %v715 = vunpack.c.h.b16 %v338
  %v716 = vunpack.c.l.b16 %v339
  %v717 = vunpack.c.h.b16 %v339
  %v718 = vunpack.c.l.b16 %v340
  %v719 = vunpack.c.h.b16 %v340
  %v720 = vunpack.c.l.b16 %v341
  %v721 = vunpack.c.h.b16 %v341
  %v722 = vunpack.c.l.b16 %v342
  %v723 = vunpack.c.h.b16 %v342
  %v724 = vunpack.c.l.b16 %v343
  %v725 = vunpack.c.h.b16 %v343
  %v726 = vunpack.c.l.b16 %v344
  %v727 = vunpack.c.h.b16 %v344
  %v728 = vunpack.c.l.b16 %v345
  %v729 = vunpack.c.h.b16 %v345
  %v730 = vpack.c.b16 %v478, %v474
  %v731 = vpack.c.b16 %v479, %v475
  %v732 = vpack.c.b16 %v480, %v476
  %v733 = vpack.c.b16 %v481, %v477
  %v734 = vpack.c.b16 %v486, %v482
  %v735 = vpack.c.b16 %v487, %v483
  %v736 = vpack.c.b16 %v488, %v484
  %v737 = vpack.c.b16 %v489, %v485
  %v738 = vpack.c.b16 %v494, %v490
  %v739 = vpack.c.b16 %v495, %v491
  %v740 = vpack.c.b16 %v496, %v492
  %v741 = vpack.c.b16 %v497, %v493
  %v742 = vpack.c.b16 %v502, %v498
  %v743 = vpack.c.b16 %v503, %v499
  %v744 = vpack.c.b16 %v504, %v500
  %v745 = vpack.c.b16 %v505, %v501
  %v746 = vpack.c.b16 %v510, %v506
  %v747 = vpack.c.b16 %v511, %v507
  %v748 = vpack.c.b16 %v512, %v508
  %v749 = vpack.c.b16 %v513, %v509
  %v750 = vpack.c.b16 %v518, %v514
  %v751 = vpack.c.b16 %v519, %v515
  %v752 = vpack.c.b16 %v520, %v516
  %v753 = vpack.c.b16 %v521, %v517
  %v754 = vpack.c.b16 %v526, %v522
  %v755 = vpack.c.b16 %v527, %v523
  %v756 = vpack.c.b16 %v528, %v524
  %v757 = vpack.c.b16 %v529, %v525
  %v758 = vpack.c.b16 %v534, %v530
  %v759 = vpack.c.b16 %v535, %v531
  %v760 = vpack.c.b16 %v536, %v532
  %v761 = vpack.c.b16 %v537, %v533
  %v762 = vpack.c.b16 %v542, %v538
  %v763 = vpack.c.b16 %v543, %v539
  %v764 = vpack.c.b16 %v544, %v540
  %v765 = vpack.c.b16 %v545, %v541
  %v766 = vpack.c.b16 %v550, %v546
  %v767 = vpack.c.b16 %v551, %v547
  %v768 = vpack.c.b16 %v552, %v548
  %v769 = vpack.c.b16 %v553, %v549
  %v770 = vpack.c.b16 %v558, %v554
  %v771 = vpack.c.b16 %v559, %v555
  %v772 = vpack.c.b16 %v560, %v556
  %v773 = vpack.c.b16 %v561, %v557
  %v774 = vpack.c.b16 %v566, %v562
  %v775 = vpack.c.b16 %v567, %v563
  %v776 = vpack.c.b16 %v568, %v564
  %v777 = vpack.c.b16 %v569, %v565
  %v778 = vpack.c.b16 %v574, %v570
  %v779 = vpack.c.b16 %v575, %v571
  %v780 = vpack.c.b16 %v576, %v572
  %v781 = vpack.c.b16 %v577, %v573
  %v782 = vpack.c.b16 %v582, %v578
  %v783 = vpack.c.b16 %v583, %v579
  %v784 = vpack.c.b16 %v584, %v580
  %v785 = vpack.c.b16 %v585, %v581
  %v786 = vpack.c.b16 %v590, %v586
  %v787 = vpack.c.b16 %v591, %v587
  %v788 = vpack.c.b16 %v592, %v588
  %v789 = vpack.c.b16 %v593, %v589
  %v790 = vpack.c.b16 %v598, %v594
  %v791 = vpack.c.b16 %v599, %v595
  %v792 = vpack.c.b16 %v600, %v596
  %v793 = vpack.c.b16 %v601, %v597
  %v794 = vpack.c.b16 %v606, %v602
  %v795 = vpack.c.b16 %v607, %v603
  %v796 = vpack.c.b16 %v608, %v604
  %v797 = vpack.c.b16 %v609, %v605
  %v798 = vpack.c.b16 %v614, %v610
  %v799 = vpack.c.b16 %v615, %v611
  %v800 = vpack.c.b16 %v616, %v612
  %v801 = vpack.c.b16 %v617, %v613
  %v802 = vpack.c.b16 %v622, %v618
  %v803 = vpack.c.b16 %v623, %v619
  %v804 = vpack.c.b16 %v624, %v620
  %v805 = vpack.c.b16 %v625, %v621
  %v806 = vpack.c.b16 %v630, %v626
  %v807 = vpack.c.b16 %v631, %v627
  %v808 = vpack.c.b16 %v632, %v628
  %v809 = vpack.c.b16 %v633, %v629
  %v810 = vpack.c.b16 %v638, %v634
  %v811 = vpack.c.b16 %v639, %v635
  %v812 = vpack.c.b16 %v640, %v636
  %v813 = vpack.c.b16 %v641, %v637
  %v814 = vpack.c.b16 %v646, %v642
  %v815 = vpack.c.b16 %v647, %v643
  %v816 = vpack.c.b16 %v648, %v644
  %v817 = vpack.c.b16 %v649, %v645
  %v818 = vpack.c.b16 %v654, %v650
  %v819 = vpack.c.b16 %v655, %v651
  %v820 = vpack.c.b16 %v656, %v652
  %v821 = vpack.c.b16 %v657, %v653
  %v822 = vpack.c.b16 %v662, %v658
  %v823 = vpack.c.b16 %v663, %v659
  %v824 = vpack.c.b16 %v664, %v660
  %v825 = vpack.c.b16 %v665, %v661
  %v826 = vpack.c.b16 %v670, %v666
  %v827 = vpack.c.b16 %v671, %v667
  %v828 = vpack.c.b16 %v672, %v668
  %v829 = vpack.c.b16 %v673, %v669
  %v830 = vpack.c.b16 %v678, %v674
  %v831 = vpack.c.b16 %v679, %v675
  %v832 = vpack.c.b16 %v680, %v676
  %v833 = vpack.c.b16 %v681, %v677
  %v834 = vpack.c.b16 %v686, %v682
  %v835 = vpack.c.b16 %v687, %v683
  %v836 = vpack.c.b16 %v688, %v684
  %v837 = vpack.c.b16 %v689, %v685
  %v838 = vpack.c.b16 %v694, %v690
  %v839 = vpack.c.b16 %v695, %v691
  %v840 = vpack.c.b16 %v696, %v692
  %v841 = vpack.c.b16 %v697, %v693
  %v842 = vpack.c.b16 %v702, %v698
  %v843 = vpack.c.b16 %v703, %v699
  %v844 = vpack.c.b16 %v704, %v700
  %v845 = vpack.c.b16 %v705, %v701
  %v846 = vpack.c.b16 %v710, %v706
  %v847 = vpack.c.b16 %v711, %v707
  %v848 = vpack.c.b16 %v712, %v708
  %v849 = vpack.c.b16 %v713, %v709
  %v850 = vpack.c.b16 %v718, %v714
  %v851 = vpack.c.b16 %v719, %v715
  %v852 = vpack.c.b16 %v720, %v716
  %v853 = vpack.c.b16 %v721, %v717
  %v854 = vpack.c.b16 %v726, %v722
  %v855 = vpack.c.b16 %v727, %v723
  %v856 = vpack.c.b16 %v728, %v724
  %v857 = vpack.c.b16 %v729, %v725
  %v1050 = vunpack.c.l.b16 %v90
  %v1051 = vunpack.c.l.b16 %v91
  %v1052 = vunpack.c.l.b16 %v92
  %v1053 = vunpack.c.l.b16 %v93
  %v1054 = vunpack.c.l.b16 %v94
  %v1055 = vunpack.c.l.b16 %v95
  %v1056 = vunpack.c.l.b16 %v96
  %v1057 = vunpack.c.l.b16 %v97
  %v1058 = vunpack.c.l.b16 %v98
  %v1059 = vunpack.c.l.b16 %v99
  %v1060 = vunpack.c.l.b16 %v100
  %v1061 = vunpack.c.l.b16 %v101
  %v1062 = vunpack.c.l.b16 %v102
  %v1063 = vunpack.c.l.b16 %v103
  %v1064 = vunpack.c.l.b16 %v104
  %v1065 = vunpack.c.l.b16 %v105
  %v1066 = vunpack.c.l.b16 %v106
  %v1067 = vunpack.c.l.b16 %v107
  %v1068 = vunpack.c.l.b16 %v108
  %v1069 = vunpack.c.l.b16 %v109
  %v1070 = vunpack.c.l.b16 %v110
  %v1071 = vunpack.c.l.b16 %v111
  %v1072 = vunpack.c.l.b16 %v112
  %v1073 = vunpack.c.l.b16 %v113
  %v1074 = vunpack.c.l.b16 %v114
  %v1075 = vunpack.c.l.b16 %v115
  %v1076 = vunpack.c.l.b16 %v116
  %v1077 = vunpack.c.l.b16 %v117
  %v1078 = vunpack.c.l.b16 %v118
  %v1079 = vunpack.c.l.b16 %v119
  %v1080 = vunpack.c.l.b16 %v120
  %v1081 = vunpack.c.l.b16 %v121
  %v1082 = vunpack.c.l.b16 %v122
  %v1083 = vunpack.c.l.b16 %v123
  %v1084 = vunpack.c.l.b16 %v124
  %v1085 = vunpack.c.l.b16 %v125
  %v1086 = vunpack.c.l.b16 %v126
  %v1087 = vunpack.c.l.b16 %v127
  %v1088 = vunpack.c.l.b16 %v128
  %v1089 = vunpack.c.l.b16 %v129
  %v1090 = vunpack.c.l.b16 %v130
  %v1091 = vunpack.c.l.b16 %v131
  %v1092 = vunpack.c.l.b16 %v132
  %v1093 = vunpack.c.l.b16 %v133
  %v1094 = vunpack.c.l.b16 %v134
  %v1095 = vunpack.c.l.b16 %v135
  %v1096 = vunpack.c.l.b16 %v136
  %v1097 = vunpack.c.l.b16 %v137
  %v1098 = vunpack.c.l.b16 %v138
  %v1099 = vunpack.c.l.b16 %v139
  %v1100 = vunpack.c.l.b16 %v140
  %v1101 = vunpack.c.l.b16 %v141
  %v1102 = vunpack.c.l.b16 %v142
  %v1103 = vunpack.c.l.b16 %v143
  %v1104 = vunpack.c.l.b16 %v144
  %v1105 = vunpack.c.l.b16 %v145
  %v1106 = vunpack.c.l.b16 %v146
  %v1107 = vunpack.c.l.b16 %v147
  %v1108 = vunpack.c.l.b16 %v148
  %v1109 = vunpack.c.l.b16 %v149
  %v1110 = vunpack.c.l.b16 %v150
  %v1111 = vunpack.c.l.b16 %v151
  %v1112 = vunpack.c.l.b16 %v152
  %v1113 = vunpack.c.l.b16 %v153
  %v1114 = vpack.c.b16 %v1051, %v1050
  %v1115 = vpack.c.b16 %v1053, %v1052
  %v1116 = vpack.c.b16 %v1055, %v1054
  %v1117 = vpack.c.b16 %v1057, %v1056
  %v1118 = vpack.c.b16 %v1059, %v1058
  %v1119 = vpack.c.b16 %v1061, %v1060
  %v1120 = vpack.c.b16 %v1063, %v1062
  %v1121 = vpack.c.b16 %v1065, %v1064
  %v1122 = vpack.c.b16 %v1067, %v1066
  %v1123 = vpack.c.b16 %v1069, %v1068
  %v1124 = vpack.c.b16 %v1071, %v1070
  %v1125 = vpack.c.b16 %v1073, %v1072
  %v1126 = vpack.c.b16 %v1075, %v1074
  %v1127 = vpack.c.b16 %v1077, %v1076
  %v1128 = vpack.c.b16 %v1079, %v1078
  %v1129 = vpack.c.b16 %v1081, %v1080
  %v1130 = vpack.c.b16 %v1083, %v1082
  %v1131 = vpack.c.b16 %v1085, %v1084
  %v1132 = vpack.c.b16 %v1087, %v1086
  %v1133 = vpack.c.b16 %v1089, %v1088
  %v1134 = vpack.c.b16 %v1091, %v1090
  %v1135 = vpack.c.b16 %v1093, %v1092
  %v1136 = vpack.c.b16 %v1095, %v1094
  %v1137 = vpack.c.b16 %v1097, %v1096
  %v1138 = vpack.c.b16 %v1099, %v1098
  %v1139 = vpack.c.b16 %v1101, %v1100
  %v1140 = vpack.c.b16 %v1103, %v1102
  %v1141 = vpack.c.b16 %v1105, %v1104
  %v1142 = vpack.c.b16 %v1107, %v1106
  %v1143 = vpack.c.b16 %v1109, %v1108
  %v1144 = vpack.c.b16 %v1111, %v1110
  %v1145 = vpack.c.b16 %v1113, %v1112
  %1178 = vmatpush.bf16.msra.mxu0 %v1121
  %1179 = vmatpush.bf16.msra.mxu0 %v1120
  %1180 = vmatpush.bf16.msra.mxu0 %v1119
  %1181 = vmatpush.bf16.msra.mxu0 %v1118
  %1182 = vmatpush.bf16.msra.mxu0 %v1117
  %1183 = vmatpush.bf16.msra.mxu0 %v1116
  %1184 = vmatpush.bf16.msra.mxu0 %v1115
  %1185 = vmatpush.bf16.msra.mxu0 %v1114
  %1186 = vmatmul.bf16.gmra.mxu0 %v730
  %v1187 = vpop.f32.mrf.mxu0
  %v1188 = vadd.f32 0.0, %v1187
  %v1189 = vpop.f32.mrf.mxu0
  %v1190 = vadd.f32 0.0, %v1189
  %1191 = vmatmul.bf16.gmra.mxu0 %v734
  %v1192 = vpop.f32.mrf.mxu0
  %v1193 = vadd.f32 0.0, %v1192
  %v1194 = vpop.f32.mrf.mxu0
  %v1195 = vadd.f32 0.0, %v1194
  %1196 = vmatmul.bf16.gmra.mxu0 %v738
  %v1197 = vpop.f32.mrf.mxu0
  %v1198 = vadd.f32 0.0, %v1197
  %v1199 = vpop.f32.mrf.mxu0
  %v1200 = vadd.f32 0.0, %v1199
  %1201 = vmatmul.bf16.gmra.mxu0 %v742
  %v1202 = vpop.f32.mrf.mxu0
  %v1203 = vadd.f32 0.0, %v1202
  %v1204 = vpop.f32.mrf.mxu0
  %v1205 = vadd.f32 0.0, %v1204
  %1206 = vmatmul.bf16.gmra.mxu0 %v746
  %v1207 = vpop.f32.mrf.mxu0
  %v1208 = vadd.f32 0.0, %v1207
  %v1209 = vpop.f32.mrf.mxu0
  %v1210 = vadd.f32 0.0, %v1209
  %1211 = vmatmul.bf16.gmra.mxu0 %v750
  %v1212 = vpop.f32.mrf.mxu0
  %v1213 = vadd.f32 0.0, %v1212
  %v1214 = vpop.f32.mrf.mxu0
  %v1215 = vadd.f32 0.0, %v1214
  %1216 = vmatmul.bf16.gmra.mxu0 %v754
  %v1217 = vpop.f32.mrf.mxu0
  %v1218 = vadd.f32 0.0, %v1217
  %v1219 = vpop.f32.mrf.mxu0
  %v1220 = vadd.f32 0.0, %v1219
  %1221 = vmatmul.bf16.gmra.mxu0 %v758
  %v1222 = vpop.f32.mrf.mxu0
  %v1223 = vadd.f32 0.0, %v1222
  %v1224 = vpop.f32.mrf.mxu0
  %v1225 = vadd.f32 0.0, %v1224
  %1226 = vmatmul.bf16.gmra.mxu0 %v762
  %v1227 = vpop.f32.mrf.mxu0
  %v1228 = vadd.f32 0.0, %v1227
  %v1229 = vpop.f32.mrf.mxu0
  %v1230 = vadd.f32 0.0, %v1229
  %1231 = vmatmul.bf16.gmra.mxu0 %v766
  %v1232 = vpop.f32.mrf.mxu0
  %v1233 = vadd.f32 0.0, %v1232
  %v1234 = vpop.f32.mrf.mxu0
  %v1235 = vadd.f32 0.0, %v1234
  %1236 = vmatmul.bf16.gmra.mxu0 %v770
  %v1237 = vpop.f32.mrf.mxu0
  %v1238 = vadd.f32 0.0, %v1237
  %v1239 = vpop.f32.mrf.mxu0
  %v1240 = vadd.f32 0.0, %v1239
  %1241 = vmatmul.bf16.gmra.mxu0 %v774
  %v1242 = vpop.f32.mrf.mxu0
  %v1243 = vadd.f32 0.0, %v1242
  %v1244 = vpop.f32.mrf.mxu0
  %v1245 = vadd.f32 0.0, %v1244
  %1246 = vmatmul.bf16.gmra.mxu0 %v778
  %v1247 = vpop.f32.mrf.mxu0
  %v1248 = vadd.f32 0.0, %v1247
  %v1249 = vpop.f32.mrf.mxu0
  %v1250 = vadd.f32 0.0, %v1249
  %1251 = vmatmul.bf16.gmra.mxu0 %v782
  %v1252 = vpop.f32.mrf.mxu0
  %v1253 = vadd.f32 0.0, %v1252
  %v1254 = vpop.f32.mrf.mxu0
  %v1255 = vadd.f32 0.0, %v1254
  %1256 = vmatmul.bf16.gmra.mxu0 %v786
  %v1257 = vpop.f32.mrf.mxu0
  %v1258 = vadd.f32 0.0, %v1257
  %v1259 = vpop.f32.mrf.mxu0
  %v1260 = vadd.f32 0.0, %v1259
  %1261 = vmatmul.bf16.gmra.mxu0 %v790
  %v1262 = vpop.f32.mrf.mxu0
  %v1263 = vadd.f32 0.0, %v1262
  %v1264 = vpop.f32.mrf.mxu0
  %v1265 = vadd.f32 0.0, %v1264
  %1266 = vmatmul.bf16.gmra.mxu0 %v794
  %v1267 = vpop.f32.mrf.mxu0
  %v1268 = vadd.f32 0.0, %v1267
  %v1269 = vpop.f32.mrf.mxu0
  %v1270 = vadd.f32 0.0, %v1269
  %1271 = vmatmul.bf16.gmra.mxu0 %v798
  %v1272 = vpop.f32.mrf.mxu0
  %v1273 = vadd.f32 0.0, %v1272
  %v1274 = vpop.f32.mrf.mxu0
  %v1275 = vadd.f32 0.0, %v1274
  %1276 = vmatmul.bf16.gmra.mxu0 %v802
  %v1277 = vpop.f32.mrf.mxu0
  %v1278 = vadd.f32 0.0, %v1277
  %v1279 = vpop.f32.mrf.mxu0
  %v1280 = vadd.f32 0.0, %v1279
  %1281 = vmatmul.bf16.gmra.mxu0 %v806
  %v1282 = vpop.f32.mrf.mxu0
  %v1283 = vadd.f32 0.0, %v1282
  %v1284 = vpop.f32.mrf.mxu0
  %v1285 = vadd.f32 0.0, %v1284
  %1286 = vmatmul.bf16.gmra.mxu0 %v810
  %v1287 = vpop.f32.mrf.mxu0
  %v1288 = vadd.f32 0.0, %v1287
  %v1289 = vpop.f32.mrf.mxu0
  %v1290 = vadd.f32 0.0, %v1289
  %1291 = vmatmul.bf16.gmra.mxu0 %v814
  %v1292 = vpop.f32.mrf.mxu0
  %v1293 = vadd.f32 0.0, %v1292
  %v1294 = vpop.f32.mrf.mxu0
  %v1295 = vadd.f32 0.0, %v1294
  %1296 = vmatmul.bf16.gmra.mxu0 %v818
  %v1297 = vpop.f32.mrf.mxu0
  %v1298 = vadd.f32 0.0, %v1297
  %v1299 = vpop.f32.mrf.mxu0
  %v1300 = vadd.f32 0.0, %v1299
  %1301 = vmatmul.bf16.gmra.mxu0 %v822
  %v1302 = vpop.f32.mrf.mxu0
  %v1303 = vadd.f32 0.0, %v1302
  %v1304 = vpop.f32.mrf.mxu0
  %v1305 = vadd.f32 0.0, %v1304
  %1306 = vmatmul.bf16.gmra.mxu0 %v826
  %v1307 = vpop.f32.mrf.mxu0
  %v1308 = vadd.f32 0.0, %v1307
  %v1309 = vpop.f32.mrf.mxu0
  %v1310 = vadd.f32 0.0, %v1309
  %1311 = vmatmul.bf16.gmra.mxu0 %v830
  %v1312 = vpop.f32.mrf.mxu0
  %v1313 = vadd.f32 0.0, %v1312
  %v1314 = vpop.f32.mrf.mxu0
  %v1315 = vadd.f32 0.0, %v1314
  %1316 = vmatmul.bf16.gmra.mxu0 %v834
  %v1317 = vpop.f32.mrf.mxu0
  %v1318 = vadd.f32 0.0, %v1317
  %v1319 = vpop.f32.mrf.mxu0
  %v1320 = vadd.f32 0.0, %v1319
  %1321 = vmatmul.bf16.gmra.mxu0 %v838
  %v1322 = vpop.f32.mrf.mxu0
  %v1323 = vadd.f32 0.0, %v1322
  %v1324 = vpop.f32.mrf.mxu0
  %v1325 = vadd.f32 0.0, %v1324
  %1326 = vmatmul.bf16.gmra.mxu0 %v842
  %v1327 = vpop.f32.mrf.mxu0
  %v1328 = vadd.f32 0.0, %v1327
  %v1329 = vpop.f32.mrf.mxu0
  %v1330 = vadd.f32 0.0, %v1329
  %1331 = vmatmul.bf16.gmra.mxu0 %v846
  %v1332 = vpop.f32.mrf.mxu0
  %v1333 = vadd.f32 0.0, %v1332
  %v1334 = vpop.f32.mrf.mxu0
  %v1335 = vadd.f32 0.0, %v1334
  %1336 = vmatmul.bf16.gmra.mxu0 %v850
  %v1337 = vpop.f32.mrf.mxu0
  %v1338 = vadd.f32 0.0, %v1337
  %v1339 = vpop.f32.mrf.mxu0
  %v1340 = vadd.f32 0.0, %v1339
  %1341 = vmatmul.bf16.gmra.mxu0 %v854
  %v1342 = vpop.f32.mrf.mxu0
  %v1343 = vadd.f32 0.0, %v1342
  %v1344 = vpop.f32.mrf.mxu0
  %v1345 = vadd.f32 0.0, %v1344
  %1346 = vdwg.mxu0
  %1347 = vmatpush.bf16.msra.mxu0 %v1129
  %1348 = vmatpush.bf16.msra.mxu0 %v1128
  %1349 = vmatpush.bf16.msra.mxu0 %v1127
  %1350 = vmatpush.bf16.msra.mxu0 %v1126
  %1351 = vmatpush.bf16.msra.mxu0 %v1125
  %1352 = vmatpush.bf16.msra.mxu0 %v1124
  %1353 = vmatpush.bf16.msra.mxu0 %v1123
  %1354 = vmatpush.bf16.msra.mxu0 %v1122
  %1355 = vmatmul.bf16.gmra.mxu0 %v731
  %v1356 = vpop.f32.mrf.mxu0
  %v1357 = vadd.f32 %v1188, %v1356
  %v1358 = vpop.f32.mrf.mxu0
  %v1359 = vadd.f32 %v1190, %v1358
  %1360 = vmatmul.bf16.gmra.mxu0 %v735
  %v1361 = vpop.f32.mrf.mxu0
  %v1362 = vadd.f32 %v1193, %v1361
  %v1363 = vpop.f32.mrf.mxu0
  %v1364 = vadd.f32 %v1195, %v1363
  %1365 = vmatmul.bf16.gmra.mxu0 %v739
  %v1366 = vpop.f32.mrf.mxu0
  %v1367 = vadd.f32 %v1198, %v1366
  %v1368 = vpop.f32.mrf.mxu0
  %v1369 = vadd.f32 %v1200, %v1368
  %1370 = vmatmul.bf16.gmra.mxu0 %v743
  %v1371 = vpop.f32.mrf.mxu0
  %v1372 = vadd.f32 %v1203, %v1371
  %v1373 = vpop.f32.mrf.mxu0
  %v1374 = vadd.f32 %v1205, %v1373
  %1375 = vmatmul.bf16.gmra.mxu0 %v747
  %v1376 = vpop.f32.mrf.mxu0
  %v1377 = vadd.f32 %v1208, %v1376
  %v1378 = vpop.f32.mrf.mxu0
  %v1379 = vadd.f32 %v1210, %v1378
  %1380 = vmatmul.bf16.gmra.mxu0 %v751
  %v1381 = vpop.f32.mrf.mxu0
  %v1382 = vadd.f32 %v1213, %v1381
  %v1383 = vpop.f32.mrf.mxu0
  %v1384 = vadd.f32 %v1215, %v1383
  %1385 = vmatmul.bf16.gmra.mxu0 %v755
  %v1386 = vpop.f32.mrf.mxu0
  %v1387 = vadd.f32 %v1218, %v1386
  %v1388 = vpop.f32.mrf.mxu0
  %v1389 = vadd.f32 %v1220, %v1388
  %1390 = vmatmul.bf16.gmra.mxu0 %v759
  %v1391 = vpop.f32.mrf.mxu0
  %v1392 = vadd.f32 %v1223, %v1391
  %v1393 = vpop.f32.mrf.mxu0
  %v1394 = vadd.f32 %v1225, %v1393
  %1395 = vmatmul.bf16.gmra.mxu0 %v763
  %v1396 = vpop.f32.mrf.mxu0
  %v1397 = vadd.f32 %v1228, %v1396
  %v1398 = vpop.f32.mrf.mxu0
  %v1399 = vadd.f32 %v1230, %v1398
  %1400 = vmatmul.bf16.gmra.mxu0 %v767
  %v1401 = vpop.f32.mrf.mxu0
  %v1402 = vadd.f32 %v1233, %v1401
  %v1403 = vpop.f32.mrf.mxu0
  %v1404 = vadd.f32 %v1235, %v1403
  %1405 = vmatmul.bf16.gmra.mxu0 %v771
  %v1406 = vpop.f32.mrf.mxu0
  %v1407 = vadd.f32 %v1238, %v1406
  %v1408 = vpop.f32.mrf.mxu0
  %v1409 = vadd.f32 %v1240, %v1408
  %1410 = vmatmul.bf16.gmra.mxu0 %v775
  %v1411 = vpop.f32.mrf.mxu0
  %v1412 = vadd.f32 %v1243, %v1411
  %v1413 = vpop.f32.mrf.mxu0
  %v1414 = vadd.f32 %v1245, %v1413
  %1415 = vmatmul.bf16.gmra.mxu0 %v779
  %v1416 = vpop.f32.mrf.mxu0
  %v1417 = vadd.f32 %v1248, %v1416
  %v1418 = vpop.f32.mrf.mxu0
  %v1419 = vadd.f32 %v1250, %v1418
  %1420 = vmatmul.bf16.gmra.mxu0 %v783
  %v1421 = vpop.f32.mrf.mxu0
  %v1422 = vadd.f32 %v1253, %v1421
  %v1423 = vpop.f32.mrf.mxu0
  %v1424 = vadd.f32 %v1255, %v1423
  %1425 = vmatmul.bf16.gmra.mxu0 %v787
  %v1426 = vpop.f32.mrf.mxu0
  %v1427 = vadd.f32 %v1258, %v1426
  %v1428 = vpop.f32.mrf.mxu0
  %v1429 = vadd.f32 %v1260, %v1428
  %1430 = vmatmul.bf16.gmra.mxu0 %v791
  %v1431 = vpop.f32.mrf.mxu0
  %v1432 = vadd.f32 %v1263, %v1431
  %v1433 = vpop.f32.mrf.mxu0
  %v1434 = vadd.f32 %v1265, %v1433
  %1435 = vmatmul.bf16.gmra.mxu0 %v795
  %v1436 = vpop.f32.mrf.mxu0
  %v1437 = vadd.f32 %v1268, %v1436
  %v1438 = vpop.f32.mrf.mxu0
  %v1439 = vadd.f32 %v1270, %v1438
  %1440 = vmatmul.bf16.gmra.mxu0 %v799
  %v1441 = vpop.f32.mrf.mxu0
  %v1442 = vadd.f32 %v1273, %v1441
  %v1443 = vpop.f32.mrf.mxu0
  %v1444 = vadd.f32 %v1275, %v1443
  %1445 = vmatmul.bf16.gmra.mxu0 %v803
  %v1446 = vpop.f32.mrf.mxu0
  %v1447 = vadd.f32 %v1278, %v1446
  %v1448 = vpop.f32.mrf.mxu0
  %v1449 = vadd.f32 %v1280, %v1448
  %1450 = vmatmul.bf16.gmra.mxu0 %v807
  %v1451 = vpop.f32.mrf.mxu0
  %v1452 = vadd.f32 %v1283, %v1451
  %v1453 = vpop.f32.mrf.mxu0
  %v1454 = vadd.f32 %v1285, %v1453
  %1455 = vmatmul.bf16.gmra.mxu0 %v811
  %v1456 = vpop.f32.mrf.mxu0
  %v1457 = vadd.f32 %v1288, %v1456
  %v1458 = vpop.f32.mrf.mxu0
  %v1459 = vadd.f32 %v1290, %v1458
  %1460 = vmatmul.bf16.gmra.mxu0 %v815
  %v1461 = vpop.f32.mrf.mxu0
  %v1462 = vadd.f32 %v1293, %v1461
  %v1463 = vpop.f32.mrf.mxu0
  %v1464 = vadd.f32 %v1295, %v1463
  %1465 = vmatmul.bf16.gmra.mxu0 %v819
  %v1466 = vpop.f32.mrf.mxu0
  %v1467 = vadd.f32 %v1298, %v1466
  %v1468 = vpop.f32.mrf.mxu0
  %v1469 = vadd.f32 %v1300, %v1468
  %1470 = vmatmul.bf16.gmra.mxu0 %v823
  %v1471 = vpop.f32.mrf.mxu0
  %v1472 = vadd.f32 %v1303, %v1471
  %v1473 = vpop.f32.mrf.mxu0
  %v1474 = vadd.f32 %v1305, %v1473
  %1475 = vmatmul.bf16.gmra.mxu0 %v827
  %v1476 = vpop.f32.mrf.mxu0
  %v1477 = vadd.f32 %v1308, %v1476
  %v1478 = vpop.f32.mrf.mxu0
  %v1479 = vadd.f32 %v1310, %v1478
  %1480 = vmatmul.bf16.gmra.mxu0 %v831
  %v1481 = vpop.f32.mrf.mxu0
  %v1482 = vadd.f32 %v1313, %v1481
  %v1483 = vpop.f32.mrf.mxu0
  %v1484 = vadd.f32 %v1315, %v1483
  %1485 = vmatmul.bf16.gmra.mxu0 %v835
  %v1486 = vpop.f32.mrf.mxu0
  %v1487 = vadd.f32 %v1318, %v1486
  %v1488 = vpop.f32.mrf.mxu0
  %v1489 = vadd.f32 %v1320, %v1488
  %1490 = vmatmul.bf16.gmra.mxu0 %v839
  %v1491 = vpop.f32.mrf.mxu0
  %v1492 = vadd.f32 %v1323, %v1491
  %v1493 = vpop.f32.mrf.mxu0
  %v1494 = vadd.f32 %v1325, %v1493
  %1495 = vmatmul.bf16.gmra.mxu0 %v843
  %v1496 = vpop.f32.mrf.mxu0
  %v1497 = vadd.f32 %v1328, %v1496
  %v1498 = vpop.f32.mrf.mxu0
  %v1499 = vadd.f32 %v1330, %v1498
  %1500 = vmatmul.bf16.gmra.mxu0 %v847
  %v1501 = vpop.f32.mrf.mxu0
  %v1502 = vadd.f32 %v1333, %v1501
  %v1503 = vpop.f32.mrf.mxu0
  %v1504 = vadd.f32 %v1335, %v1503
  %1505 = vmatmul.bf16.gmra.mxu0 %v851
  %v1506 = vpop.f32.mrf.mxu0
  %v1507 = vadd.f32 %v1338, %v1506
  %v1508 = vpop.f32.mrf.mxu0
  %v1509 = vadd.f32 %v1340, %v1508
  %1510 = vmatmul.bf16.gmra.mxu0 %v855
  %v1511 = vpop.f32.mrf.mxu0
  %v1512 = vadd.f32 %v1343, %v1511
  %v1513 = vpop.f32.mrf.mxu0
  %v1514 = vadd.f32 %v1345, %v1513
  %1515 = vdwg.mxu0
  %1516 = vmatpush.bf16.msra.mxu0 %v1137
  %1517 = vmatpush.bf16.msra.mxu0 %v1136
  %1518 = vmatpush.bf16.msra.mxu0 %v1135
  %1519 = vmatpush.bf16.msra.mxu0 %v1134
  %1520 = vmatpush.bf16.msra.mxu0 %v1133
  %1521 = vmatpush.bf16.msra.mxu0 %v1132
  %1522 = vmatpush.bf16.msra.mxu0 %v1131
  %1523 = vmatpush.bf16.msra.mxu0 %v1130
  %1524 = vmatmul.bf16.gmra.mxu0 %v732
  %v1525 = vpop.f32.mrf.mxu0
  %v1526 = vadd.f32 %v1357, %v1525
  %v1527 = vpop.f32.mrf.mxu0
  %v1528 = vadd.f32 %v1359, %v1527
  %1529 = vmatmul.bf16.gmra.mxu0 %v736
  %v1530 = vpop.f32.mrf.mxu0
  %v1531 = vadd.f32 %v1362, %v1530
  %v1532 = vpop.f32.mrf.mxu0
  %v1533 = vadd.f32 %v1364, %v1532
  %1534 = vmatmul.bf16.gmra.mxu0 %v740
  %v1535 = vpop.f32.mrf.mxu0
  %v1536 = vadd.f32 %v1367, %v1535
  %v1537 = vpop.f32.mrf.mxu0
  %v1538 = vadd.f32 %v1369, %v1537
  %1539 = vmatmul.bf16.gmra.mxu0 %v744
  %v1540 = vpop.f32.mrf.mxu0
  %v1541 = vadd.f32 %v1372, %v1540
  %v1542 = vpop.f32.mrf.mxu0
  %v1543 = vadd.f32 %v1374, %v1542
  %1544 = vmatmul.bf16.gmra.mxu0 %v748
  %v1545 = vpop.f32.mrf.mxu0
  %v1546 = vadd.f32 %v1377, %v1545
  %v1547 = vpop.f32.mrf.mxu0
  %v1548 = vadd.f32 %v1379, %v1547
  %1549 = vmatmul.bf16.gmra.mxu0 %v752
  %v1550 = vpop.f32.mrf.mxu0
  %v1551 = vadd.f32 %v1382, %v1550
  %v1552 = vpop.f32.mrf.mxu0
  %v1553 = vadd.f32 %v1384, %v1552
  %1554 = vmatmul.bf16.gmra.mxu0 %v756
  %v1555 = vpop.f32.mrf.mxu0
  %v1556 = vadd.f32 %v1387, %v1555
  %v1557 = vpop.f32.mrf.mxu0
  %v1558 = vadd.f32 %v1389, %v1557
  %1559 = vmatmul.bf16.gmra.mxu0 %v760
  %v1560 = vpop.f32.mrf.mxu0
  %v1561 = vadd.f32 %v1392, %v1560
  %v1562 = vpop.f32.mrf.mxu0
  %v1563 = vadd.f32 %v1394, %v1562
  %1564 = vmatmul.bf16.gmra.mxu0 %v764
  %v1565 = vpop.f32.mrf.mxu0
  %v1566 = vadd.f32 %v1397, %v1565
  %v1567 = vpop.f32.mrf.mxu0
  %v1568 = vadd.f32 %v1399, %v1567
  %1569 = vmatmul.bf16.gmra.mxu0 %v768
  %v1570 = vpop.f32.mrf.mxu0
  %v1571 = vadd.f32 %v1402, %v1570
  %v1572 = vpop.f32.mrf.mxu0
  %v1573 = vadd.f32 %v1404, %v1572
  %1574 = vmatmul.bf16.gmra.mxu0 %v772
  %v1575 = vpop.f32.mrf.mxu0
  %v1576 = vadd.f32 %v1407, %v1575
  %v1577 = vpop.f32.mrf.mxu0
  %v1578 = vadd.f32 %v1409, %v1577
  %1579 = vmatmul.bf16.gmra.mxu0 %v776
  %v1580 = vpop.f32.mrf.mxu0
  %v1581 = vadd.f32 %v1412, %v1580
  %v1582 = vpop.f32.mrf.mxu0
  %v1583 = vadd.f32 %v1414, %v1582
  %1584 = vmatmul.bf16.gmra.mxu0 %v780
  %v1585 = vpop.f32.mrf.mxu0
  %v1586 = vadd.f32 %v1417, %v1585
  %v1587 = vpop.f32.mrf.mxu0
  %v1588 = vadd.f32 %v1419, %v1587
  %1589 = vmatmul.bf16.gmra.mxu0 %v784
  %v1590 = vpop.f32.mrf.mxu0
  %v1591 = vadd.f32 %v1422, %v1590
  %v1592 = vpop.f32.mrf.mxu0
  %v1593 = vadd.f32 %v1424, %v1592
  %1594 = vmatmul.bf16.gmra.mxu0 %v788
  %v1595 = vpop.f32.mrf.mxu0
  %v1596 = vadd.f32 %v1427, %v1595
  %v1597 = vpop.f32.mrf.mxu0
  %v1598 = vadd.f32 %v1429, %v1597
  %1599 = vmatmul.bf16.gmra.mxu0 %v792
  %v1600 = vpop.f32.mrf.mxu0
  %v1601 = vadd.f32 %v1432, %v1600
  %v1602 = vpop.f32.mrf.mxu0
  %v1603 = vadd.f32 %v1434, %v1602
  %1604 = vmatmul.bf16.gmra.mxu0 %v796
  %v1605 = vpop.f32.mrf.mxu0
  %v1606 = vadd.f32 %v1437, %v1605
  %v1607 = vpop.f32.mrf.mxu0
  %v1608 = vadd.f32 %v1439, %v1607
  %1609 = vmatmul.bf16.gmra.mxu0 %v800
  %v1610 = vpop.f32.mrf.mxu0
  %v1611 = vadd.f32 %v1442, %v1610
  %v1612 = vpop.f32.mrf.mxu0
  %v1613 = vadd.f32 %v1444, %v1612
  %1614 = vmatmul.bf16.gmra.mxu0 %v804
  %v1615 = vpop.f32.mrf.mxu0
  %v1616 = vadd.f32 %v1447, %v1615
  %v1617 = vpop.f32.mrf.mxu0
  %v1618 = vadd.f32 %v1449, %v1617
  %1619 = vmatmul.bf16.gmra.mxu0 %v808
  %v1620 = vpop.f32.mrf.mxu0
  %v1621 = vadd.f32 %v1452, %v1620
  %v1622 = vpop.f32.mrf.mxu0
  %v1623 = vadd.f32 %v1454, %v1622
  %1624 = vmatmul.bf16.gmra.mxu0 %v812
  %v1625 = vpop.f32.mrf.mxu0
  %v1626 = vadd.f32 %v1457, %v1625
  %v1627 = vpop.f32.mrf.mxu0
  %v1628 = vadd.f32 %v1459, %v1627
  %1629 = vmatmul.bf16.gmra.mxu0 %v816
  %v1630 = vpop.f32.mrf.mxu0
  %v1631 = vadd.f32 %v1462, %v1630
  %v1632 = vpop.f32.mrf.mxu0
  %v1633 = vadd.f32 %v1464, %v1632
  %1634 = vmatmul.bf16.gmra.mxu0 %v820
  %v1635 = vpop.f32.mrf.mxu0
  %v1636 = vadd.f32 %v1467, %v1635
  %v1637 = vpop.f32.mrf.mxu0
  %v1638 = vadd.f32 %v1469, %v1637
  %1639 = vmatmul.bf16.gmra.mxu0 %v824
  %v1640 = vpop.f32.mrf.mxu0
  %v1641 = vadd.f32 %v1472, %v1640
  %v1642 = vpop.f32.mrf.mxu0
  %v1643 = vadd.f32 %v1474, %v1642
  %1644 = vmatmul.bf16.gmra.mxu0 %v828
  %v1645 = vpop.f32.mrf.mxu0
  %v1646 = vadd.f32 %v1477, %v1645
  %v1647 = vpop.f32.mrf.mxu0
  %v1648 = vadd.f32 %v1479, %v1647
  %1649 = vmatmul.bf16.gmra.mxu0 %v832
  %v1650 = vpop.f32.mrf.mxu0
  %v1651 = vadd.f32 %v1482, %v1650
  %v1652 = vpop.f32.mrf.mxu0
  %v1653 = vadd.f32 %v1484, %v1652
  %1654 = vmatmul.bf16.gmra.mxu0 %v836
  %v1655 = vpop.f32.mrf.mxu0
  %v1656 = vadd.f32 %v1487, %v1655
  %v1657 = vpop.f32.mrf.mxu0
  %v1658 = vadd.f32 %v1489, %v1657
  %1659 = vmatmul.bf16.gmra.mxu0 %v840
  %v1660 = vpop.f32.mrf.mxu0
  %v1661 = vadd.f32 %v1492, %v1660
  %v1662 = vpop.f32.mrf.mxu0
  %v1663 = vadd.f32 %v1494, %v1662
  %1664 = vmatmul.bf16.gmra.mxu0 %v844
  %v1665 = vpop.f32.mrf.mxu0
  %v1666 = vadd.f32 %v1497, %v1665
  %v1667 = vpop.f32.mrf.mxu0
  %v1668 = vadd.f32 %v1499, %v1667
  %1669 = vmatmul.bf16.gmra.mxu0 %v848
  %v1670 = vpop.f32.mrf.mxu0
  %v1671 = vadd.f32 %v1502, %v1670
  %v1672 = vpop.f32.mrf.mxu0
  %v1673 = vadd.f32 %v1504, %v1672
  %1674 = vmatmul.bf16.gmra.mxu0 %v852
  %v1675 = vpop.f32.mrf.mxu0
  %v1676 = vadd.f32 %v1507, %v1675
  %v1677 = vpop.f32.mrf.mxu0
  %v1678 = vadd.f32 %v1509, %v1677
  %1679 = vmatmul.bf16.gmra.mxu0 %v856
  %v1680 = vpop.f32.mrf.mxu0
  %v1681 = vadd.f32 %v1512, %v1680
  %v1682 = vpop.f32.mrf.mxu0
  %v1683 = vadd.f32 %v1514, %v1682
  %1684 = vdwg.mxu0
  %1685 = vmatpush.bf16.msra.mxu0 %v1145
  %1686 = vmatpush.bf16.msra.mxu0 %v1144
  %1687 = vmatpush.bf16.msra.mxu0 %v1143
  %1688 = vmatpush.bf16.msra.mxu0 %v1142
  %1689 = vmatpush.bf16.msra.mxu0 %v1141
  %1690 = vmatpush.bf16.msra.mxu0 %v1140
  %1691 = vmatpush.bf16.msra.mxu0 %v1139
  %1692 = vmatpush.bf16.msra.mxu0 %v1138
  %1693 = vmatmul.bf16.gmra.mxu0 %v733
  %v1694 = vpop.f32.mrf.mxu0
  %v1695 = vadd.f32 %v1526, %v1694
  %v1696 = vpop.f32.mrf.mxu0
  %v1697 = vadd.f32 %v1528, %v1696
  %1698 = vmatmul.bf16.gmra.mxu0 %v737
  %v1699 = vpop.f32.mrf.mxu0
  %v1700 = vadd.f32 %v1531, %v1699
  %v1701 = vpop.f32.mrf.mxu0
  %v1702 = vadd.f32 %v1533, %v1701
  %1703 = vmatmul.bf16.gmra.mxu0 %v741
  %v1704 = vpop.f32.mrf.mxu0
  %v1705 = vadd.f32 %v1536, %v1704
  %v1706 = vpop.f32.mrf.mxu0
  %v1707 = vadd.f32 %v1538, %v1706
  %1708 = vmatmul.bf16.gmra.mxu0 %v745
  %v1709 = vpop.f32.mrf.mxu0
  %v1710 = vadd.f32 %v1541, %v1709
  %v1711 = vpop.f32.mrf.mxu0
  %v1712 = vadd.f32 %v1543, %v1711
  %1713 = vmatmul.bf16.gmra.mxu0 %v749
  %v1714 = vpop.f32.mrf.mxu0
  %v1715 = vadd.f32 %v1546, %v1714
  %v1716 = vpop.f32.mrf.mxu0
  %v1717 = vadd.f32 %v1548, %v1716
  %1718 = vmatmul.bf16.gmra.mxu0 %v753
  %v1719 = vpop.f32.mrf.mxu0
  %v1720 = vadd.f32 %v1551, %v1719
  %v1721 = vpop.f32.mrf.mxu0
  %v1722 = vadd.f32 %v1553, %v1721
  %1723 = vmatmul.bf16.gmra.mxu0 %v757
  %v1724 = vpop.f32.mrf.mxu0
  %v1725 = vadd.f32 %v1556, %v1724
  %v1726 = vpop.f32.mrf.mxu0
  %v1727 = vadd.f32 %v1558, %v1726
  %1728 = vmatmul.bf16.gmra.mxu0 %v761
  %v1729 = vpop.f32.mrf.mxu0
  %v1730 = vadd.f32 %v1561, %v1729
  %v1731 = vpop.f32.mrf.mxu0
  %v1732 = vadd.f32 %v1563, %v1731
  %1733 = vmatmul.bf16.gmra.mxu0 %v765
  %v1734 = vpop.f32.mrf.mxu0
  %v1735 = vadd.f32 %v1566, %v1734
  %v1736 = vpop.f32.mrf.mxu0
  %v1737 = vadd.f32 %v1568, %v1736
  %1738 = vmatmul.bf16.gmra.mxu0 %v769
  %v1739 = vpop.f32.mrf.mxu0
  %v1740 = vadd.f32 %v1571, %v1739
  %v1741 = vpop.f32.mrf.mxu0
  %v1742 = vadd.f32 %v1573, %v1741
  %1743 = vmatmul.bf16.gmra.mxu0 %v773
  %v1744 = vpop.f32.mrf.mxu0
  %v1745 = vadd.f32 %v1576, %v1744
  %v1746 = vpop.f32.mrf.mxu0
  %v1747 = vadd.f32 %v1578, %v1746
  %1748 = vmatmul.bf16.gmra.mxu0 %v777
  %v1749 = vpop.f32.mrf.mxu0
  %v1750 = vadd.f32 %v1581, %v1749
  %v1751 = vpop.f32.mrf.mxu0
  %v1752 = vadd.f32 %v1583, %v1751
  %1753 = vmatmul.bf16.gmra.mxu0 %v781
  %v1754 = vpop.f32.mrf.mxu0
  %v1755 = vadd.f32 %v1586, %v1754
  %v1756 = vpop.f32.mrf.mxu0
  %v1757 = vadd.f32 %v1588, %v1756
  %1758 = vmatmul.bf16.gmra.mxu0 %v785
  %v1759 = vpop.f32.mrf.mxu0
  %v1760 = vadd.f32 %v1591, %v1759
  %v1761 = vpop.f32.mrf.mxu0
  %v1762 = vadd.f32 %v1593, %v1761
  %1763 = vmatmul.bf16.gmra.mxu0 %v789
  %v1764 = vpop.f32.mrf.mxu0
  %v1765 = vadd.f32 %v1596, %v1764
  %v1766 = vpop.f32.mrf.mxu0
  %v1767 = vadd.f32 %v1598, %v1766
  %1768 = vmatmul.bf16.gmra.mxu0 %v793
  %v1769 = vpop.f32.mrf.mxu0
  %v1770 = vadd.f32 %v1601, %v1769
  %v1771 = vpop.f32.mrf.mxu0
  %v1772 = vadd.f32 %v1603, %v1771
  %1773 = vmatmul.bf16.gmra.mxu0 %v797
  %v1774 = vpop.f32.mrf.mxu0
  %v1775 = vadd.f32 %v1606, %v1774
  %v1776 = vpop.f32.mrf.mxu0
  %v1777 = vadd.f32 %v1608, %v1776
  %1778 = vmatmul.bf16.gmra.mxu0 %v801
  %v1779 = vpop.f32.mrf.mxu0
  %v1780 = vadd.f32 %v1611, %v1779
  %v1781 = vpop.f32.mrf.mxu0
  %v1782 = vadd.f32 %v1613, %v1781
  %1783 = vmatmul.bf16.gmra.mxu0 %v805
  %v1784 = vpop.f32.mrf.mxu0
  %v1785 = vadd.f32 %v1616, %v1784
  %v1786 = vpop.f32.mrf.mxu0
  %v1787 = vadd.f32 %v1618, %v1786
  %1788 = vmatmul.bf16.gmra.mxu0 %v809
  %v1789 = vpop.f32.mrf.mxu0
  %v1790 = vadd.f32 %v1621, %v1789
  %v1791 = vpop.f32.mrf.mxu0
  %v1792 = vadd.f32 %v1623, %v1791
  %1793 = vmatmul.bf16.gmra.mxu0 %v813
  %v1794 = vpop.f32.mrf.mxu0
  %v1795 = vadd.f32 %v1626, %v1794
  %v1796 = vpop.f32.mrf.mxu0
  %v1797 = vadd.f32 %v1628, %v1796
  %1798 = vmatmul.bf16.gmra.mxu0 %v817
  %v1799 = vpop.f32.mrf.mxu0
  %v1800 = vadd.f32 %v1631, %v1799
  %v1801 = vpop.f32.mrf.mxu0
  %v1802 = vadd.f32 %v1633, %v1801
  %1803 = vmatmul.bf16.gmra.mxu0 %v821
  %v1804 = vpop.f32.mrf.mxu0
  %v1805 = vadd.f32 %v1636, %v1804
  %v1806 = vpop.f32.mrf.mxu0
  %v1807 = vadd.f32 %v1638, %v1806
  %1808 = vmatmul.bf16.gmra.mxu0 %v825
  %v1809 = vpop.f32.mrf.mxu0
  %v1810 = vadd.f32 %v1641, %v1809
  %v1811 = vpop.f32.mrf.mxu0
  %v1812 = vadd.f32 %v1643, %v1811
  %1813 = vmatmul.bf16.gmra.mxu0 %v829
  %v1814 = vpop.f32.mrf.mxu0
  %v1815 = vadd.f32 %v1646, %v1814
  %v1816 = vpop.f32.mrf.mxu0
  %v1817 = vadd.f32 %v1648, %v1816
  %1818 = vmatmul.bf16.gmra.mxu0 %v833
  %v1819 = vpop.f32.mrf.mxu0
  %v1820 = vadd.f32 %v1651, %v1819
  %v1821 = vpop.f32.mrf.mxu0
  %v1822 = vadd.f32 %v1653, %v1821
  %1823 = vmatmul.bf16.gmra.mxu0 %v837
  %v1824 = vpop.f32.mrf.mxu0
  %v1825 = vadd.f32 %v1656, %v1824
  %v1826 = vpop.f32.mrf.mxu0
  %v1827 = vadd.f32 %v1658, %v1826
  %1828 = vmatmul.bf16.gmra.mxu0 %v841
  %v1829 = vpop.f32.mrf.mxu0
  %v1830 = vadd.f32 %v1661, %v1829
  %v1831 = vpop.f32.mrf.mxu0
  %v1832 = vadd.f32 %v1663, %v1831
  %1833 = vmatmul.bf16.gmra.mxu0 %v845
  %v1834 = vpop.f32.mrf.mxu0
  %v1835 = vadd.f32 %v1666, %v1834
  %v1836 = vpop.f32.mrf.mxu0
  %v1837 = vadd.f32 %v1668, %v1836
  %1838 = vmatmul.bf16.gmra.mxu0 %v849
  %v1839 = vpop.f32.mrf.mxu0
  %v1840 = vadd.f32 %v1671, %v1839
  %v1841 = vpop.f32.mrf.mxu0
  %v1842 = vadd.f32 %v1673, %v1841
  %1843 = vmatmul.bf16.gmra.mxu0 %v853
  %v1844 = vpop.f32.mrf.mxu0
  %v1845 = vadd.f32 %v1676, %v1844
  %v1846 = vpop.f32.mrf.mxu0
  %v1847 = vadd.f32 %v1678, %v1846
  %1848 = vmatmul.bf16.gmra.mxu0 %v857
  %v1849 = vpop.f32.mrf.mxu0
  %v1850 = vadd.f32 %v1681, %v1849
  %v1851 = vpop.f32.mrf.mxu0
  %v1852 = vadd.f32 %v1683, %v1851
  %1853 = vdwg.mxu0
  %v1854 = vadd.f32 %v154, %v1695
  %v1855 = vadd.f32 %v155, %v1697
  %v1856 = vadd.f32 %v156, %v1700
  %v1857 = vadd.f32 %v157, %v1702
  %v1858 = vadd.f32 %v158, %v1705
  %v1859 = vadd.f32 %v159, %v1707
  %v1860 = vadd.f32 %v160, %v1710
  %v1861 = vadd.f32 %v161, %v1712
  %v1862 = vadd.f32 %v162, %v1715
  %v1863 = vadd.f32 %v163, %v1717
  %v1864 = vadd.f32 %v164, %v1720
  %v1865 = vadd.f32 %v165, %v1722
  %v1866 = vadd.f32 %v166, %v1725
  %v1867 = vadd.f32 %v167, %v1727
  %v1868 = vadd.f32 %v168, %v1730
  %v1869 = vadd.f32 %v169, %v1732
  %v1870 = vadd.f32 %v170, %v1735
  %v1871 = vadd.f32 %v171, %v1737
  %v1872 = vadd.f32 %v172, %v1740
  %v1873 = vadd.f32 %v173, %v1742
  %v1874 = vadd.f32 %v174, %v1745
  %v1875 = vadd.f32 %v175, %v1747
  %v1876 = vadd.f32 %v176, %v1750
  %v1877 = vadd.f32 %v177, %v1752
  %v1878 = vadd.f32 %v178, %v1755
  %v1879 = vadd.f32 %v179, %v1757
  %v1880 = vadd.f32 %v180, %v1760
  %v1881 = vadd.f32 %v181, %v1762
  %v1882 = vadd.f32 %v182, %v1765
  %v1883 = vadd.f32 %v183, %v1767
  %v1884 = vadd.f32 %v184, %v1770
  %v1885 = vadd.f32 %v185, %v1772
  %v1886 = vadd.f32 %v186, %v1775
  %v1887 = vadd.f32 %v187, %v1777
  %v1888 = vadd.f32 %v188, %v1780
  %v1889 = vadd.f32 %v189, %v1782
  %v1890 = vadd.f32 %v190, %v1785
  %v1891 = vadd.f32 %v191, %v1787
  %v1892 = vadd.f32 %v192, %v1790
  %v1893 = vadd.f32 %v193, %v1792
  %v1894 = vadd.f32 %v194, %v1795
  %v1895 = vadd.f32 %v195, %v1797
  %v1896 = vadd.f32 %v196, %v1800
  %v1897 = vadd.f32 %v197, %v1802
  %v1898 = vadd.f32 %v198, %v1805
  %v1899 = vadd.f32 %v199, %v1807
  %v1900 = vadd.f32 %v200, %v1810
  %v1901 = vadd.f32 %v201, %v1812
  %v1902 = vadd.f32 %v202, %v1815
  %v1903 = vadd.f32 %v203, %v1817
  %v1904 = vadd.f32 %v204, %v1820
  %v1905 = vadd.f32 %v205, %v1822
  %v1906 = vadd.f32 %v206, %v1825
  %v1907 = vadd.f32 %v207, %v1827
  %v1908 = vadd.f32 %v208, %v1830
  %v1909 = vadd.f32 %v209, %v1832
  %v1910 = vadd.f32 %v210, %v1835
  %v1911 = vadd.f32 %v211, %v1837
  %v1912 = vadd.f32 %v212, %v1840
  %v1913 = vadd.f32 %v213, %v1842
  %v1914 = vadd.f32 %v214, %v1845
  %v1915 = vadd.f32 %v215, %v1847
  %v1916 = vadd.f32 %v216, %v1850
  %v1917 = vadd.f32 %v217, %v1852
  %1918 = vst [vmem:[#allocation2] sm:$0xff] %v1854
  %1919 = vst [vmem:[#allocation2 + $0x8] sm:$0xff] %v1855
  %1920 = vst [vmem:[#allocation2 + $0x10] sm:$0xff] %v1856
  %1921 = vst [vmem:[#allocation2 + $0x18] sm:$0xff] %v1857
  %1922 = vst [vmem:[#allocation2 + $0x20] sm:$0xff] %v1858
  %1923 = vst [vmem:[#allocation2 + $0x28] sm:$0xff] %v1859
  %1924 = vst [vmem:[#allocation2 + $0x30] sm:$0xff] %v1860
  %1925 = vst [vmem:[#allocation2 + $0x38] sm:$0xff] %v1861
  %1926 = vst [vmem:[#allocation2 + $0x40] sm:$0xff] %v1862
  %1927 = vst [vmem:[#allocation2 + $0x48] sm:$0xff] %v1863
  %1928 = vst [vmem:[#allocation2 + $0x50] sm:$0xff] %v1864
  %1929 = vst [vmem:[#allocation2 + $0x58] sm:$0xff] %v1865
  %1930 = vst [vmem:[#allocation2 + $0x60] sm:$0xff] %v1866
  %1931 = vst [vmem:[#allocation2 + $0x68] sm:$0xff] %v1867
  %1932 = vst [vmem:[#allocation2 + $0x70] sm:$0xff] %v1868
  %1933 = vst [vmem:[#allocation2 + $0x78] sm:$0xff] %v1869
  %1934 = vst [vmem:[#allocation2 + $0x80] sm:$0xff] %v1870
  %1935 = vst [vmem:[#allocation2 + $0x88] sm:$0xff] %v1871
  %1936 = vst [vmem:[#allocation2 + $0x90] sm:$0xff] %v1872
  %1937 = vst [vmem:[#allocation2 + $0x98] sm:$0xff] %v1873
  %1938 = vst [vmem:[#allocation2 + $0xa0] sm:$0xff] %v1874
  %1939 = vst [vmem:[#allocation2 + $0xa8] sm:$0xff] %v1875
  %1940 = vst [vmem:[#allocation2 + $0xb0] sm:$0xff] %v1876
  %1941 = vst [vmem:[#allocation2 + $0xb8] sm:$0xff] %v1877
  %1942 = vst [vmem:[#allocation2 + $0xc0] sm:$0xff] %v1878
  %1943 = vst [vmem:[#allocation2 + $0xc8] sm:$0xff] %v1879
  %1944 = vst [vmem:[#allocation2 + $0xd0] sm:$0xff] %v1880
  %1945 = vst [vmem:[#allocation2 + $0xd8] sm:$0xff] %v1881
  %1946 = vst [vmem:[#allocation2 + $0xe0] sm:$0xff] %v1882
  %1947 = vst [vmem:[#allocation2 + $0xe8] sm:$0xff] %v1883
  %1948 = vst [vmem:[#allocation2 + $0xf0] sm:$0xff] %v1884
  %1949 = vst [vmem:[#allocation2 + $0xf8] sm:$0xff] %v1885
  %1950 = vst [vmem:[#allocation2 + $0x100] sm:$0xff] %v1886
  %1951 = vst [vmem:[#allocation2 + $0x108] sm:$0xff] %v1887
  %1952 = vst [vmem:[#allocation2 + $0x110] sm:$0xff] %v1888
  %1953 = vst [vmem:[#allocation2 + $0x118] sm:$0xff] %v1889
  %1954 = vst [vmem:[#allocation2 + $0x120] sm:$0xff] %v1890
  %1955 = vst [vmem:[#allocation2 + $0x128] sm:$0xff] %v1891
  %1956 = vst [vmem:[#allocation2 + $0x130] sm:$0xff] %v1892
  %1957 = vst [vmem:[#allocation2 + $0x138] sm:$0xff] %v1893
  %1958 = vst [vmem:[#allocation2 + $0x140] sm:$0xff] %v1894
  %1959 = vst [vmem:[#allocation2 + $0x148] sm:$0xff] %v1895
  %1960 = vst [vmem:[#allocation2 + $0x150] sm:$0xff] %v1896
  %1961 = vst [vmem:[#allocation2 + $0x158] sm:$0xff] %v1897
  %1962 = vst [vmem:[#allocation2 + $0x160] sm:$0xff] %v1898
  %1963 = vst [vmem:[#allocation2 + $0x168] sm:$0xff] %v1899
  %1964 = vst [vmem:[#allocation2 + $0x170] sm:$0xff] %v1900
  %1965 = vst [vmem:[#allocation2 + $0x178] sm:$0xff] %v1901
  %1966 = vst [vmem:[#allocation2 + $0x180] sm:$0xff] %v1902
  %1967 = vst [vmem:[#allocation2 + $0x188] sm:$0xff] %v1903
  %1968 = vst [vmem:[#allocation2 + $0x190] sm:$0xff] %v1904
  %1969 = vst [vmem:[#allocation2 + $0x198] sm:$0xff] %v1905
  %1970 = vst [vmem:[#allocation2 + $0x1a0] sm:$0xff] %v1906
  %1971 = vst [vmem:[#allocation2 + $0x1a8] sm:$0xff] %v1907
  %1972 = vst [vmem:[#allocation2 + $0x1b0] sm:$0xff] %v1908
  %1973 = vst [vmem:[#allocation2 + $0x1b8] sm:$0xff] %v1909
  %1974 = vst [vmem:[#allocation2 + $0x1c0] sm:$0xff] %v1910
  %1975 = vst [vmem:[#allocation2 + $0x1c8] sm:$0xff] %v1911
  %1976 = vst [vmem:[#allocation2 + $0x1d0] sm:$0xff] %v1912
  %1977 = vst [vmem:[#allocation2 + $0x1d8] sm:$0xff] %v1913
  %1978 = vst [vmem:[#allocation2 + $0x1e0] sm:$0xff] %v1914
  %1979 = vst [vmem:[#allocation2 + $0x1e8] sm:$0xff] %v1915
  %1980 = vst [vmem:[#allocation2 + $0x1f0] sm:$0xff] %v1916
  %1981 = vst [vmem:[#allocation2 + $0x1f8] sm:$0xff] %v1917
  %p1982 = scmp.eq.s32.totalorder 0, 0
  // Predicated region
  $region22: #{gnn_forward.4} parent=0 // pred_check
    %p1983 = pneg %p1982
  $region23: #{gnn_forward.4} parent=0 // pred_check_branch
    %1985 = sbr.rel (%p1983) target = $region25
  $region24: #{gnn_forward.4} parent=0 // pred_region
    %v1986 = vld [vmem:[#allocation2] sm:$0xff]
    %v1987 = vld [vmem:[#allocation2 + $0x8] sm:$0xff]
    %v1988 = vld [vmem:[#allocation2 + $0x10] sm:$0xff]
    %v1989 = vld [vmem:[#allocation2 + $0x18] sm:$0xff]
    %v1990 = vld [vmem:[#allocation2 + $0x20] sm:$0xff]
    %v1991 = vld [vmem:[#allocation2 + $0x28] sm:$0xff]
    %v1992 = vld [vmem:[#allocation2 + $0x30] sm:$0xff]
    %v1993 = vld [vmem:[#allocation2 + $0x38] sm:$0xff]
    %v1994 = vld [vmem:[#allocation2 + $0x40] sm:$0xff]
    %v1995 = vld [vmem:[#allocation2 + $0x48] sm:$0xff]
    %v1996 = vld [vmem:[#allocation2 + $0x50] sm:$0xff]
    %v1997 = vld [vmem:[#allocation2 + $0x58] sm:$0xff]
    %v1998 = vld [vmem:[#allocation2 + $0x60] sm:$0xff]
    %v1999 = vld [vmem:[#allocation2 + $0x68] sm:$0xff]
    %v2000 = vld [vmem:[#allocation2 + $0x70] sm:$0xff]
    %v2001 = vld [vmem:[#allocation2 + $0x78] sm:$0xff]
    %v2002 = vld [vmem:[#allocation2 + $0x80] sm:$0xff]
    %v2003 = vld [vmem:[#allocation2 + $0x88] sm:$0xff]
    %v2004 = vld [vmem:[#allocation2 + $0x90] sm:$0xff]
    %v2005 = vld [vmem:[#allocation2 + $0x98] sm:$0xff]
    %v2006 = vld [vmem:[#allocation2 + $0xa0] sm:$0xff]
    %v2007 = vld [vmem:[#allocation2 + $0xa8] sm:$0xff]
    %v2008 = vld [vmem:[#allocation2 + $0xb0] sm:$0xff]
    %v2009 = vld [vmem:[#allocation2 + $0xb8] sm:$0xff]
    %v2010 = vld [vmem:[#allocation2 + $0xc0] sm:$0xff]
    %v2011 = vld [vmem:[#allocation2 + $0xc8] sm:$0xff]
    %v2012 = vld [vmem:[#allocation2 + $0xd0] sm:$0xff]
    %v2013 = vld [vmem:[#allocation2 + $0xd8] sm:$0xff]
    %v2014 = vld [vmem:[#allocation2 + $0xe0] sm:$0xff]
    %v2015 = vld [vmem:[#allocation2 + $0xe8] sm:$0xff]
    %v2016 = vld [vmem:[#allocation2 + $0xf0] sm:$0xff]
    %v2017 = vld [vmem:[#allocation2 + $0xf8] sm:$0xff]
    %v2018 = vld [vmem:[#allocation2 + $0x100] sm:$0xff]
    %v2019 = vld [vmem:[#allocation2 + $0x108] sm:$0xff]
    %v2020 = vld [vmem:[#allocation2 + $0x110] sm:$0xff]
    %v2021 = vld [vmem:[#allocation2 + $0x118] sm:$0xff]
    %v2022 = vld [vmem:[#allocation2 + $0x120] sm:$0xff]
    %v2023 = vld [vmem:[#allocation2 + $0x128] sm:$0xff]
    %v2024 = vld [vmem:[#allocation2 + $0x130] sm:$0xff]
    %v2025 = vld [vmem:[#allocation2 + $0x138] sm:$0xff]
    %v2026 = vld [vmem:[#allocation2 + $0x140] sm:$0xff]
    %v2027 = vld [vmem:[#allocation2 + $0x148] sm:$0xff]
    %v2028 = vld [vmem:[#allocation2 + $0x150] sm:$0xff]
    %v2029 = vld [vmem:[#allocation2 + $0x158] sm:$0xff]
    %v2030 = vld [vmem:[#allocation2 + $0x160] sm:$0xff]
    %v2031 = vld [vmem:[#allocation2 + $0x168] sm:$0xff]
    %v2032 = vld [vmem:[#allocation2 + $0x170] sm:$0xff]
    %v2033 = vld [vmem:[#allocation2 + $0x178] sm:$0xff]
    %v2034 = vld [vmem:[#allocation2 + $0x180] sm:$0xff]
    %v2035 = vld [vmem:[#allocation2 + $0x188] sm:$0xff]
    %v2036 = vld [vmem:[#allocation2 + $0x190] sm:$0xff]
    %v2037 = vld [vmem:[#allocation2 + $0x198] sm:$0xff]
    %v2038 = vld [vmem:[#allocation2 + $0x1a0] sm:$0xff]
    %v2039 = vld [vmem:[#allocation2 + $0x1a8] sm:$0xff]
    %v2040 = vld [vmem:[#allocation2 + $0x1b0] sm:$0xff]
    %v2041 = vld [vmem:[#allocation2 + $0x1b8] sm:$0xff]
    %v2042 = vld [vmem:[#allocation2 + $0x1c0] sm:$0xff]
    %v2043 = vld [vmem:[#allocation2 + $0x1c8] sm:$0xff]
    %v2044 = vld [vmem:[#allocation2 + $0x1d0] sm:$0xff]
    %v2045 = vld [vmem:[#allocation2 + $0x1d8] sm:$0xff]
    %v2046 = vld [vmem:[#allocation2 + $0x1e0] sm:$0xff]
    %v2047 = vld [vmem:[#allocation2 + $0x1e8] sm:$0xff]
    %v2048 = vld [vmem:[#allocation2 + $0x1f0] sm:$0xff]
    %v2049 = vld [vmem:[#allocation2 + $0x1f8] sm:$0xff]
    %v2050 = vunpack.c.l.bf16 %v90
    %v2051 = vunpack.c.l.bf16 %v91
    %v2052 = vunpack.c.l.bf16 %v92
    %v2053 = vunpack.c.l.bf16 %v93
    %v2054 = vunpack.c.l.bf16 %v94
    %v2055 = vunpack.c.l.bf16 %v95
    %v2056 = vunpack.c.l.bf16 %v96
    %v2057 = vunpack.c.l.bf16 %v97
    %v2058 = vunpack.c.l.bf16 %v98
    %v2059 = vunpack.c.l.bf16 %v99
    %v2060 = vunpack.c.l.bf16 %v100
    %v2061 = vunpack.c.l.bf16 %v101
    %v2062 = vunpack.c.l.bf16 %v102
    %v2063 = vunpack.c.l.bf16 %v103
    %v2064 = vunpack.c.l.bf16 %v104
    %v2065 = vunpack.c.l.bf16 %v105
    %v2066 = vunpack.c.l.bf16 %v106
    %v2067 = vunpack.c.l.bf16 %v107
    %v2068 = vunpack.c.l.bf16 %v108
    %v2069 = vunpack.c.l.bf16 %v109
    %v2070 = vunpack.c.l.bf16 %v110
    %v2071 = vunpack.c.l.bf16 %v111
    %v2072 = vunpack.c.l.bf16 %v112
    %v2073 = vunpack.c.l.bf16 %v113
    %v2074 = vunpack.c.l.bf16 %v114
    %v2075 = vunpack.c.l.bf16 %v115
    %v2076 = vunpack.c.l.bf16 %v116
    %v2077 = vunpack.c.l.bf16 %v117
    %v2078 = vunpack.c.l.bf16 %v118
    %v2079 = vunpack.c.l.bf16 %v119
    %v2080 = vunpack.c.l.bf16 %v120
    %v2081 = vunpack.c.l.bf16 %v121
    %v2082 = vunpack.c.l.bf16 %v122
    %v2083 = vunpack.c.l.bf16 %v123
    %v2084 = vunpack.c.l.bf16 %v124
    %v2085 = vunpack.c.l.bf16 %v125
    %v2086 = vunpack.c.l.bf16 %v126
    %v2087 = vunpack.c.l.bf16 %v127
    %v2088 = vunpack.c.l.bf16 %v128
    %v2089 = vunpack.c.l.bf16 %v129
    %v2090 = vunpack.c.l.bf16 %v130
    %v2091 = vunpack.c.l.bf16 %v131
    %v2092 = vunpack.c.l.bf16 %v132
    %v2093 = vunpack.c.l.bf16 %v133
    %v2094 = vunpack.c.l.bf16 %v134
    %v2095 = vunpack.c.l.bf16 %v135
    %v2096 = vunpack.c.l.bf16 %v136
    %v2097 = vunpack.c.l.bf16 %v137
    %v2098 = vunpack.c.l.bf16 %v138
    %v2099 = vunpack.c.l.bf16 %v139
    %v2100 = vunpack.c.l.bf16 %v140
    %v2101 = vunpack.c.l.bf16 %v141
    %v2102 = vunpack.c.l.bf16 %v142
    %v2103 = vunpack.c.l.bf16 %v143
    %v2104 = vunpack.c.l.bf16 %v144
    %v2105 = vunpack.c.l.bf16 %v145
    %v2106 = vunpack.c.l.bf16 %v146
    %v2107 = vunpack.c.l.bf16 %v147
    %v2108 = vunpack.c.l.bf16 %v148
    %v2109 = vunpack.c.l.bf16 %v149
    %v2110 = vunpack.c.l.bf16 %v150
    %v2111 = vunpack.c.l.bf16 %v151
    %v2112 = vunpack.c.l.bf16 %v152
    %v2113 = vunpack.c.l.bf16 %v153
    %v2114 = vadd.f32 %v1986, %v2050
    %v2115 = vadd.f32 %v1987, %v2051
    %v2116 = vadd.f32 %v1988, %v2052
    %v2117 = vadd.f32 %v1989, %v2053
    %v2118 = vadd.f32 %v1990, %v2054
    %v2119 = vadd.f32 %v1991, %v2055
    %v2120 = vadd.f32 %v1992, %v2056
    %v2121 = vadd.f32 %v1993, %v2057
    %v2122 = vadd.f32 %v1994, %v2058
    %v2123 = vadd.f32 %v1995, %v2059
    %v2124 = vadd.f32 %v1996, %v2060
    %v2125 = vadd.f32 %v1997, %v2061
    %v2126 = vadd.f32 %v1998, %v2062
    %v2127 = vadd.f32 %v1999, %v2063
    %v2128 = vadd.f32 %v2000, %v2064
    %v2129 = vadd.f32 %v2001, %v2065
    %v2130 = vadd.f32 %v2002, %v2066
    %v2131 = vadd.f32 %v2003, %v2067
    %v2132 = vadd.f32 %v2004, %v2068
    %v2133 = vadd.f32 %v2005, %v2069
    %v2134 = vadd.f32 %v2006, %v2070
    %v2135 = vadd.f32 %v2007, %v2071
    %v2136 = vadd.f32 %v2008, %v2072
    %v2137 = vadd.f32 %v2009, %v2073
    %v2138 = vadd.f32 %v2010, %v2074
    %v2139 = vadd.f32 %v2011, %v2075
    %v2140 = vadd.f32 %v2012, %v2076
    %v2141 = vadd.f32 %v2013, %v2077
    %v2142 = vadd.f32 %v2014, %v2078
    %v2143 = vadd.f32 %v2015, %v2079
    %v2144 = vadd.f32 %v2016, %v2080
    %v2145 = vadd.f32 %v2017, %v2081
    %v2146 = vadd.f32 %v2018, %v2082
    %v2147 = vadd.f32 %v2019, %v2083
    %v2148 = vadd.f32 %v2020, %v2084
    %v2149 = vadd.f32 %v2021, %v2085
    %v2150 = vadd.f32 %v2022, %v2086
    %v2151 = vadd.f32 %v2023, %v2087
    %v2152 = vadd.f32 %v2024, %v2088
    %v2153 = vadd.f32 %v2025, %v2089
    %v2154 = vadd.f32 %v2026, %v2090
    %v2155 = vadd.f32 %v2027, %v2091
    %v2156 = vadd.f32 %v2028, %v2092
    %v2157 = vadd.f32 %v2029, %v2093
    %v2158 = vadd.f32 %v2030, %v2094
    %v2159 = vadd.f32 %v2031, %v2095
    %v2160 = vadd.f32 %v2032, %v2096
    %v2161 = vadd.f32 %v2033, %v2097
    %v2162 = vadd.f32 %v2034, %v2098
    %v2163 = vadd.f32 %v2035, %v2099
    %v2164 = vadd.f32 %v2036, %v2100
    %v2165 = vadd.f32 %v2037, %v2101
    %v2166 = vadd.f32 %v2038, %v2102
    %v2167 = vadd.f32 %v2039, %v2103
    %v2168 = vadd.f32 %v2040, %v2104
    %v2169 = vadd.f32 %v2041, %v2105
    %v2170 = vadd.f32 %v2042, %v2106
    %v2171 = vadd.f32 %v2043, %v2107
    %v2172 = vadd.f32 %v2044, %v2108
    %v2173 = vadd.f32 %v2045, %v2109
    %v2174 = vadd.f32 %v2046, %v2110
    %v2175 = vadd.f32 %v2047, %v2111
    %v2176 = vadd.f32 %v2048, %v2112
    %v2177 = vadd.f32 %v2049, %v2113
    %2178 = vst [vmem:[#allocation2] sm:$0xff] %v2114
    %2179 = vst [vmem:[#allocation2 + $0x8] sm:$0xff] %v2115
    %2180 = vst [vmem:[#allocation2 + $0x10] sm:$0xff] %v2116
    %2181 = vst [vmem:[#allocation2 + $0x18] sm:$0xff] %v2117
    %2182 = vst [vmem:[#allocation2 + $0x20] sm:$0xff] %v2118
    %2183 = vst [vmem:[#allocation2 + $0x28] sm:$0xff] %v2119
    %2184 = vst [vmem:[#allocation2 + $0x30] sm:$0xff] %v2120
    %2185 = vst [vmem:[#allocation2 + $0x38] sm:$0xff] %v2121
    %2186 = vst [vmem:[#allocation2 + $0x40] sm:$0xff] %v2122
    %2187 = vst [vmem:[#allocation2 + $0x48] sm:$0xff] %v2123
    %2188 = vst [vmem:[#allocation2 + $0x50] sm:$0xff] %v2124
    %2189 = vst [vmem:[#allocation2 + $0x58] sm:$0xff] %v2125
    %2190 = vst [vmem:[#allocation2 + $0x60] sm:$0xff] %v2126
    %2191 = vst [vmem:[#allocation2 + $0x68] sm:$0xff] %v2127
    %2192 = vst [vmem:[#allocation2 + $0x70] sm:$0xff] %v2128
    %2193 = vst [vmem:[#allocation2 + $0x78] sm:$0xff] %v2129
    %2194 = vst [vmem:[#allocation2 + $0x80] sm:$0xff] %v2130
    %2195 = vst [vmem:[#allocation2 + $0x88] sm:$0xff] %v2131
    %2196 = vst [vmem:[#allocation2 + $0x90] sm:$0xff] %v2132
    %2197 = vst [vmem:[#allocation2 + $0x98] sm:$0xff] %v2133
    %2198 = vst [vmem:[#allocation2 + $0xa0] sm:$0xff] %v2134
    %2199 = vst [vmem:[#allocation2 + $0xa8] sm:$0xff] %v2135
    %2200 = vst [vmem:[#allocation2 + $0xb0] sm:$0xff] %v2136
    %2201 = vst [vmem:[#allocation2 + $0xb8] sm:$0xff] %v2137
    %2202 = vst [vmem:[#allocation2 + $0xc0] sm:$0xff] %v2138
    %2203 = vst [vmem:[#allocation2 + $0xc8] sm:$0xff] %v2139
    %2204 = vst [vmem:[#allocation2 + $0xd0] sm:$0xff] %v2140
    %2205 = vst [vmem:[#allocation2 + $0xd8] sm:$0xff] %v2141
    %2206 = vst [vmem:[#allocation2 + $0xe0] sm:$0xff] %v2142
    %2207 = vst [vmem:[#allocation2 + $0xe8] sm:$0xff] %v2143
    %2208 = vst [vmem:[#allocation2 + $0xf0] sm:$0xff] %v2144
    %2209 = vst [vmem:[#allocation2 + $0xf8] sm:$0xff] %v2145
    %2210 = vst [vmem:[#allocation2 + $0x100] sm:$0xff] %v2146
    %2211 = vst [vmem:[#allocation2 + $0x108] sm:$0xff] %v2147
    %2212 = vst [vmem:[#allocation2 + $0x110] sm:$0xff] %v2148
    %2213 = vst [vmem:[#allocation2 + $0x118] sm:$0xff] %v2149
    %2214 = vst [vmem:[#allocation2 + $0x120] sm:$0xff] %v2150
    %2215 = vst [vmem:[#allocation2 + $0x128] sm:$0xff] %v2151
    %2216 = vst [vmem:[#allocation2 + $0x130] sm:$0xff] %v2152
    %2217 = vst [vmem:[#allocation2 + $0x138] sm:$0xff] %v2153
    %2218 = vst [vmem:[#allocation2 + $0x140] sm:$0xff] %v2154
    %2219 = vst [vmem:[#allocation2 + $0x148] sm:$0xff] %v2155
    %2220 = vst [vmem:[#allocation2 + $0x150] sm:$0xff] %v2156
    %2221 = vst [vmem:[#allocation2 + $0x158] sm:$0xff] %v2157
    %2222 = vst [vmem:[#allocation2 + $0x160] sm:$0xff] %v2158
    %2223 = vst [vmem:[#allocation2 + $0x168] sm:$0xff] %v2159
    %2224 = vst [vmem:[#allocation2 + $0x170] sm:$0xff] %v2160
    %2225 = vst [vmem:[#allocation2 + $0x178] sm:$0xff] %v2161
    %2226 = vst [vmem:[#allocation2 + $0x180] sm:$0xff] %v2162
    %2227 = vst [vmem:[#allocation2 + $0x188] sm:$0xff] %v2163
    %2228 = vst [vmem:[#allocation2 + $0x190] sm:$0xff] %v2164
    %2229 = vst [vmem:[#allocation2 + $0x198] sm:$0xff] %v2165
    %2230 = vst [vmem:[#allocation2 + $0x1a0] sm:$0xff] %v2166
    %2231 = vst [vmem:[#allocation2 + $0x1a8] sm:$0xff] %v2167
    %2232 = vst [vmem:[#allocation2 + $0x1b0] sm:$0xff] %v2168
    %2233 = vst [vmem:[#allocation2 + $0x1b8] sm:$0xff] %v2169
    %2234 = vst [vmem:[#allocation2 + $0x1c0] sm:$0xff] %v2170
    %2235 = vst [vmem:[#allocation2 + $0x1c8] sm:$0xff] %v2171
    %2236 = vst [vmem:[#allocation2 + $0x1d0] sm:$0xff] %v2172
    %2237 = vst [vmem:[#allocation2 + $0x1d8] sm:$0xff] %v2173
    %2238 = vst [vmem:[#allocation2 + $0x1e0] sm:$0xff] %v2174
    %2239 = vst [vmem:[#allocation2 + $0x1e8] sm:$0xff] %v2175
    %2240 = vst [vmem:[#allocation2 + $0x1f0] sm:$0xff] %v2176
    %2241 = vst [vmem:[#allocation2 + $0x1f8] sm:$0xff] %v2177
  $region25: #{gnn_forward.4} parent=0 // pred_fallthru
    _
  // Predicated region
  $region26: #{gnn_forward.4} parent=0 // pred_check
    %p2242 = pneg %p17
  $region27: #{gnn_forward.4} parent=0 // pred_check_branch
    %2244 = sbr.rel (%p2242) target = $region29
  $region28: #{gnn_forward.4} parent=0 // pred_region
    %v2245 = vld [vmem:[#allocation2] sm:$0xff]
    %v2246 = vld [vmem:[#allocation2 + $0x8] sm:$0xff]
    %v2247 = vld [vmem:[#allocation2 + $0x10] sm:$0xff]
    %v2248 = vld [vmem:[#allocation2 + $0x18] sm:$0xff]
    %v2249 = vld [vmem:[#allocation2 + $0x20] sm:$0xff]
    %v2250 = vld [vmem:[#allocation2 + $0x28] sm:$0xff]
    %v2251 = vld [vmem:[#allocation2 + $0x30] sm:$0xff]
    %v2252 = vld [vmem:[#allocation2 + $0x38] sm:$0xff]
    %v2253 = vld [vmem:[#allocation2 + $0x40] sm:$0xff]
    %v2254 = vld [vmem:[#allocation2 + $0x48] sm:$0xff]
    %v2255 = vld [vmem:[#allocation2 + $0x50] sm:$0xff]
    %v2256 = vld [vmem:[#allocation2 + $0x58] sm:$0xff]
    %v2257 = vld [vmem:[#allocation2 + $0x60] sm:$0xff]
    %v2258 = vld [vmem:[#allocation2 + $0x68] sm:$0xff]
    %v2259 = vld [vmem:[#allocation2 + $0x70] sm:$0xff]
    %v2260 = vld [vmem:[#allocation2 + $0x78] sm:$0xff]
    %v2261 = vld [vmem:[#allocation2 + $0x80] sm:$0xff]
    %v2262 = vld [vmem:[#allocation2 + $0x88] sm:$0xff]
    %v2263 = vld [vmem:[#allocation2 + $0x90] sm:$0xff]
    %v2264 = vld [vmem:[#allocation2 + $0x98] sm:$0xff]
    %v2265 = vld [vmem:[#allocation2 + $0xa0] sm:$0xff]
    %v2266 = vld [vmem:[#allocation2 + $0xa8] sm:$0xff]
    %v2267 = vld [vmem:[#allocation2 + $0xb0] sm:$0xff]
    %v2268 = vld [vmem:[#allocation2 + $0xb8] sm:$0xff]
    %v2269 = vld [vmem:[#allocation2 + $0xc0] sm:$0xff]
    %v2270 = vld [vmem:[#allocation2 + $0xc8] sm:$0xff]
    %v2271 = vld [vmem:[#allocation2 + $0xd0] sm:$0xff]
    %v2272 = vld [vmem:[#allocation2 + $0xd8] sm:$0xff]
    %v2273 = vld [vmem:[#allocation2 + $0xe0] sm:$0xff]
    %v2274 = vld [vmem:[#allocation2 + $0xe8] sm:$0xff]
    %v2275 = vld [vmem:[#allocation2 + $0xf0] sm:$0xff]
    %v2276 = vld [vmem:[#allocation2 + $0xf8] sm:$0xff]
    %v2277 = vld [vmem:[#allocation2 + $0x100] sm:$0xff]
    %v2278 = vld [vmem:[#allocation2 + $0x108] sm:$0xff]
    %v2279 = vld [vmem:[#allocation2 + $0x110] sm:$0xff]
    %v2280 = vld [vmem:[#allocation2 + $0x118] sm:$0xff]
    %v2281 = vld [vmem:[#allocation2 + $0x120] sm:$0xff]
    %v2282 = vld [vmem:[#allocation2 + $0x128] sm:$0xff]
    %v2283 = vld [vmem:[#allocation2 + $0x130] sm:$0xff]
    %v2284 = vld [vmem:[#allocation2 + $0x138] sm:$0xff]
    %v2285 = vld [vmem:[#allocation2 + $0x140] sm:$0xff]
    %v2286 = vld [vmem:[#allocation2 + $0x148] sm:$0xff]
    %v2287 = vld [vmem:[#allocation2 + $0x150] sm:$0xff]
    %v2288 = vld [vmem:[#allocation2 + $0x158] sm:$0xff]
    %v2289 = vld [vmem:[#allocation2 + $0x160] sm:$0xff]
    %v2290 = vld [vmem:[#allocation2 + $0x168] sm:$0xff]
    %v2291 = vld [vmem:[#allocation2 + $0x170] sm:$0xff]
    %v2292 = vld [vmem:[#allocation2 + $0x178] sm:$0xff]
    %v2293 = vld [vmem:[#allocation2 + $0x180] sm:$0xff]
    %v2294 = vld [vmem:[#allocation2 + $0x188] sm:$0xff]
    %v2295 = vld [vmem:[#allocation2 + $0x190] sm:$0xff]
    %v2296 = vld [vmem:[#allocation2 + $0x198] sm:$0xff]
    %v2297 = vld [vmem:[#allocation2 + $0x1a0] sm:$0xff]
    %v2298 = vld [vmem:[#allocation2 + $0x1a8] sm:$0xff]
    %v2299 = vld [vmem:[#allocation2 + $0x1b0] sm:$0xff]
    %v2300 = vld [vmem:[#allocation2 + $0x1b8] sm:$0xff]
    %v2301 = vld [vmem:[#allocation2 + $0x1c0] sm:$0xff]
    %v2302 = vld [vmem:[#allocation2 + $0x1c8] sm:$0xff]
    %v2303 = vld [vmem:[#allocation2 + $0x1d0] sm:$0xff]
    %v2304 = vld [vmem:[#allocation2 + $0x1d8] sm:$0xff]
    %v2305 = vld [vmem:[#allocation2 + $0x1e0] sm:$0xff]
    %v2306 = vld [vmem:[#allocation2 + $0x1e8] sm:$0xff]
    %v2307 = vld [vmem:[#allocation2 + $0x1f0] sm:$0xff]
    %v2308 = vld [vmem:[#allocation2 + $0x1f8] sm:$0xff]
    %v2309 = vld [vmem:[%s2] sm:$0xff]
    %v2310 = vld [vmem:[%s2 + $0x8] sm:$0xff]
    %v2311 = vld [vmem:[%s2 + $0x10] sm:$0xff]
    %v2312 = vld [vmem:[%s2 + $0x18] sm:$0xff]
    %v2313 = vld [vmem:[%s2 + $0x20] sm:$0xff]
    %v2314 = vld [vmem:[%s2 + $0x28] sm:$0xff]
    %v2315 = vld [vmem:[%s2 + $0x30] sm:$0xff]
    %v2316 = vld [vmem:[%s2 + $0x38] sm:$0xff]
    %v2317 = vld [vmem:[%s2 + $0x40] sm:$0xff]
    %v2318 = vld [vmem:[%s2 + $0x48] sm:$0xff]
    %v2319 = vld [vmem:[%s2 + $0x50] sm:$0xff]
    %v2320 = vld [vmem:[%s2 + $0x58] sm:$0xff]
    %v2321 = vld [vmem:[%s2 + $0x60] sm:$0xff]
    %v2322 = vld [vmem:[%s2 + $0x68] sm:$0xff]
    %v2323 = vld [vmem:[%s2 + $0x70] sm:$0xff]
    %v2324 = vld [vmem:[%s2 + $0x78] sm:$0xff]
    %v2325 = vld [vmem:[%s3] sm:$0x1]
    %v2327 = vperm.slane %v2325, 0
    %2329 = vmatpush.msra.mxu0 %v2324
    %2330 = vmatpush.msra.mxu0 %v2323
    %2331 = vmatpush.msra.mxu0 %v2322
    %2332 = vmatpush.msra.mxu0 %v2321
    %2333 = vmatpush.msra.mxu0 %v2320
    %2334 = vmatpush.msra.mxu0 %v2319
    %2335 = vmatpush.msra.mxu0 %v2318
    %2336 = vmatpush.msra.mxu0 %v2317
    %2337 = vmatpush.msra.mxu0 %v2316
    %2338 = vmatpush.msra.mxu0 %v2315
    %2339 = vmatpush.msra.mxu0 %v2314
    %2340 = vmatpush.msra.mxu0 %v2313
    %2341 = vmatpush.msra.mxu0 %v2312
    %2342 = vmatpush.msra.mxu0 %v2311
    %2343 = vmatpush.msra.mxu0 %v2310
    %2344 = vmatpush.msra.mxu0 %v2309
    %2345 = vmatmul.f32.gmra.mxu0 %v2245
    %v2346 = vpop.f32.mrf.mxu0
    %v2347 = vadd.f32 %v2327, %v2346
    %2348 = vmatmul.f32.gmra.mxu0 %v2246
    %v2349 = vpop.f32.mrf.mxu0
    %v2350 = vadd.f32 %v2327, %v2349
    %2351 = vmatmul.f32.gmra.mxu0 %v2247
    %v2352 = vpop.f32.mrf.mxu0
    %v2353 = vadd.f32 %v2327, %v2352
    %2354 = vmatmul.f32.gmra.mxu0 %v2248
    %v2355 = vpop.f32.mrf.mxu0
    %v2356 = vadd.f32 %v2327, %v2355
    %2357 = vmatmul.f32.gmra.mxu0 %v2249
    %v2358 = vpop.f32.mrf.mxu0
    %v2359 = vadd.f32 %v2327, %v2358
    %2360 = vmatmul.f32.gmra.mxu0 %v2250
    %v2361 = vpop.f32.mrf.mxu0
    %v2362 = vadd.f32 %v2327, %v2361
    %2363 = vmatmul.f32.gmra.mxu0 %v2251
    %v2364 = vpop.f32.mrf.mxu0
    %v2365 = vadd.f32 %v2327, %v2364
    %2366 = vmatmul.f32.gmra.mxu0 %v2252
    %v2367 = vpop.f32.mrf.mxu0
    %v2368 = vadd.f32 %v2327, %v2367
    %2369 = vmatmul.f32.gmra.mxu0 %v2253
    %v2370 = vpop.f32.mrf.mxu0
    %v2371 = vadd.f32 %v2327, %v2370
    %2372 = vmatmul.f32.gmra.mxu0 %v2254
    %v2373 = vpop.f32.mrf.mxu0
    %v2374 = vadd.f32 %v2327, %v2373
    %2375 = vmatmul.f32.gmra.mxu0 %v2255
    %v2376 = vpop.f32.mrf.mxu0
    %v2377 = vadd.f32 %v2327, %v2376
    %2378 = vmatmul.f32.gmra.mxu0 %v2256
    %v2379 = vpop.f32.mrf.mxu0
    %v2380 = vadd.f32 %v2327, %v2379
    %2381 = vmatmul.f32.gmra.mxu0 %v2257
    %v2382 = vpop.f32.mrf.mxu0
    %v2383 = vadd.f32 %v2327, %v2382
    %2384 = vmatmul.f32.gmra.mxu0 %v2258
    %v2385 = vpop.f32.mrf.mxu0
    %v2386 = vadd.f32 %v2327, %v2385
    %2387 = vmatmul.f32.gmra.mxu0 %v2259
    %v2388 = vpop.f32.mrf.mxu0
    %v2389 = vadd.f32 %v2327, %v2388
    %2390 = vmatmul.f32.gmra.mxu0 %v2260
    %v2391 = vpop.f32.mrf.mxu0
    %v2392 = vadd.f32 %v2327, %v2391
    %2393 = vmatmul.f32.gmra.mxu0 %v2261
    %v2394 = vpop.f32.mrf.mxu0
    %v2395 = vadd.f32 %v2327, %v2394
    %2396 = vmatmul.f32.gmra.mxu0 %v2262
    %v2397 = vpop.f32.mrf.mxu0
    %v2398 = vadd.f32 %v2327, %v2397
    %2399 = vmatmul.f32.gmra.mxu0 %v2263
    %v2400 = vpop.f32.mrf.mxu0
    %v2401 = vadd.f32 %v2327, %v2400
    %2402 = vmatmul.f32.gmra.mxu0 %v2264
    %v2403 = vpop.f32.mrf.mxu0
    %v2404 = vadd.f32 %v2327, %v2403
    %2405 = vmatmul.f32.gmra.mxu0 %v2265
    %v2406 = vpop.f32.mrf.mxu0
    %v2407 = vadd.f32 %v2327, %v2406
    %2408 = vmatmul.f32.gmra.mxu0 %v2266
    %v2409 = vpop.f32.mrf.mxu0
    %v2410 = vadd.f32 %v2327, %v2409
    %2411 = vmatmul.f32.gmra.mxu0 %v2267
    %v2412 = vpop.f32.mrf.mxu0
    %v2413 = vadd.f32 %v2327, %v2412
    %2414 = vmatmul.f32.gmra.mxu0 %v2268
    %v2415 = vpop.f32.mrf.mxu0
    %v2416 = vadd.f32 %v2327, %v2415
    %2417 = vmatmul.f32.gmra.mxu0 %v2269
    %v2418 = vpop.f32.mrf.mxu0
    %v2419 = vadd.f32 %v2327, %v2418
    %2420 = vmatmul.f32.gmra.mxu0 %v2270
    %v2421 = vpop.f32.mrf.mxu0
    %v2422 = vadd.f32 %v2327, %v2421
    %2423 = vmatmul.f32.gmra.mxu0 %v2271
    %v2424 = vpop.f32.mrf.mxu0
    %v2425 = vadd.f32 %v2327, %v2424
    %2426 = vmatmul.f32.gmra.mxu0 %v2272
    %v2427 = vpop.f32.mrf.mxu0
    %v2428 = vadd.f32 %v2327, %v2427
    %2429 = vmatmul.f32.gmra.mxu0 %v2273
    %v2430 = vpop.f32.mrf.mxu0
    %v2431 = vadd.f32 %v2327, %v2430
    %2432 = vmatmul.f32.gmra.mxu0 %v2274
    %v2433 = vpop.f32.mrf.mxu0
    %v2434 = vadd.f32 %v2327, %v2433
    %2435 = vmatmul.f32.gmra.mxu0 %v2275
    %v2436 = vpop.f32.mrf.mxu0
    %v2437 = vadd.f32 %v2327, %v2436
    %2438 = vmatmul.f32.gmra.mxu0 %v2276
    %v2439 = vpop.f32.mrf.mxu0
    %v2440 = vadd.f32 %v2327, %v2439
    %2441 = vmatmul.f32.gmra.mxu0 %v2277
    %v2442 = vpop.f32.mrf.mxu0
    %v2443 = vadd.f32 %v2327, %v2442
    %2444 = vmatmul.f32.gmra.mxu0 %v2278
    %v2445 = vpop.f32.mrf.mxu0
    %v2446 = vadd.f32 %v2327, %v2445
    %2447 = vmatmul.f32.gmra.mxu0 %v2279
    %v2448 = vpop.f32.mrf.mxu0
    %v2449 = vadd.f32 %v2327, %v2448
    %2450 = vmatmul.f32.gmra.mxu0 %v2280
    %v2451 = vpop.f32.mrf.mxu0
    %v2452 = vadd.f32 %v2327, %v2451
    %2453 = vmatmul.f32.gmra.mxu0 %v2281
    %v2454 = vpop.f32.mrf.mxu0
    %v2455 = vadd.f32 %v2327, %v2454
    %2456 = vmatmul.f32.gmra.mxu0 %v2282
    %v2457 = vpop.f32.mrf.mxu0
    %v2458 = vadd.f32 %v2327, %v2457
    %2459 = vmatmul.f32.gmra.mxu0 %v2283
    %v2460 = vpop.f32.mrf.mxu0
    %v2461 = vadd.f32 %v2327, %v2460
    %2462 = vmatmul.f32.gmra.mxu0 %v2284
    %v2463 = vpop.f32.mrf.mxu0
    %v2464 = vadd.f32 %v2327, %v2463
    %2465 = vmatmul.f32.gmra.mxu0 %v2285
    %v2466 = vpop.f32.mrf.mxu0
    %v2467 = vadd.f32 %v2327, %v2466
    %2468 = vmatmul.f32.gmra.mxu0 %v2286
    %v2469 = vpop.f32.mrf.mxu0
    %v2470 = vadd.f32 %v2327, %v2469
    %2471 = vmatmul.f32.gmra.mxu0 %v2287
    %v2472 = vpop.f32.mrf.mxu0
    %v2473 = vadd.f32 %v2327, %v2472
    %2474 = vmatmul.f32.gmra.mxu0 %v2288
    %v2475 = vpop.f32.mrf.mxu0
    %v2476 = vadd.f32 %v2327, %v2475
    %2477 = vmatmul.f32.gmra.mxu0 %v2289
    %v2478 = vpop.f32.mrf.mxu0
    %v2479 = vadd.f32 %v2327, %v2478
    %2480 = vmatmul.f32.gmra.mxu0 %v2290
    %v2481 = vpop.f32.mrf.mxu0
    %v2482 = vadd.f32 %v2327, %v2481
    %2483 = vmatmul.f32.gmra.mxu0 %v2291
    %v2484 = vpop.f32.mrf.mxu0
    %v2485 = vadd.f32 %v2327, %v2484
    %2486 = vmatmul.f32.gmra.mxu0 %v2292
    %v2487 = vpop.f32.mrf.mxu0
    %v2488 = vadd.f32 %v2327, %v2487
    %2489 = vmatmul.f32.gmra.mxu0 %v2293
    %v2490 = vpop.f32.mrf.mxu0
    %v2491 = vadd.f32 %v2327, %v2490
    %2492 = vmatmul.f32.gmra.mxu0 %v2294
    %v2493 = vpop.f32.mrf.mxu0
    %v2494 = vadd.f32 %v2327, %v2493
    %2495 = vmatmul.f32.gmra.mxu0 %v2295
    %v2496 = vpop.f32.mrf.mxu0
    %v2497 = vadd.f32 %v2327, %v2496
    %2498 = vmatmul.f32.gmra.mxu0 %v2296
    %v2499 = vpop.f32.mrf.mxu0
    %v2500 = vadd.f32 %v2327, %v2499
    %2501 = vmatmul.f32.gmra.mxu0 %v2297
    %v2502 = vpop.f32.mrf.mxu0
    %v2503 = vadd.f32 %v2327, %v2502
    %2504 = vmatmul.f32.gmra.mxu0 %v2298
    %v2505 = vpop.f32.mrf.mxu0
    %v2506 = vadd.f32 %v2327, %v2505
    %2507 = vmatmul.f32.gmra.mxu0 %v2299
    %v2508 = vpop.f32.mrf.mxu0
    %v2509 = vadd.f32 %v2327, %v2508
    %2510 = vmatmul.f32.gmra.mxu0 %v2300
    %v2511 = vpop.f32.mrf.mxu0
    %v2512 = vadd.f32 %v2327, %v2511
    %2513 = vmatmul.f32.gmra.mxu0 %v2301
    %v2514 = vpop.f32.mrf.mxu0
    %v2515 = vadd.f32 %v2327, %v2514
    %2516 = vmatmul.f32.gmra.mxu0 %v2302
    %v2517 = vpop.f32.mrf.mxu0
    %v2518 = vadd.f32 %v2327, %v2517
    %2519 = vmatmul.f32.gmra.mxu0 %v2303
    %v2520 = vpop.f32.mrf.mxu0
    %v2521 = vadd.f32 %v2327, %v2520
    %2522 = vmatmul.f32.gmra.mxu0 %v2304
    %v2523 = vpop.f32.mrf.mxu0
    %v2524 = vadd.f32 %v2327, %v2523
    %2525 = vmatmul.f32.gmra.mxu0 %v2305
    %v2526 = vpop.f32.mrf.mxu0
    %v2527 = vadd.f32 %v2327, %v2526
    %2528 = vmatmul.f32.gmra.mxu0 %v2306
    %v2529 = vpop.f32.mrf.mxu0
    %v2530 = vadd.f32 %v2327, %v2529
    %2531 = vmatmul.f32.gmra.mxu0 %v2307
    %v2532 = vpop.f32.mrf.mxu0
    %v2533 = vadd.f32 %v2327, %v2532
    %2534 = vmatmul.f32.gmra.mxu0 %v2308
    %v2535 = vpop.f32.mrf.mxu0
    %v2536 = vadd.f32 %v2327, %v2535
    %2537 = vdwg.mxu0
    %v2538 = vpack.c.bf16 %v2347, %v2347
    %v2539 = vpack.c.bf16 %v2350, %v2350
    %v2540 = vpack.c.bf16 %v2353, %v2353
    %v2541 = vpack.c.bf16 %v2356, %v2356
    %v2542 = vpack.c.bf16 %v2359, %v2359
    %v2543 = vpack.c.bf16 %v2362, %v2362
    %v2544 = vpack.c.bf16 %v2365, %v2365
    %v2545 = vpack.c.bf16 %v2368, %v2368
    %v2546 = vpack.c.bf16 %v2371, %v2371
    %v2547 = vpack.c.bf16 %v2374, %v2374
    %v2548 = vpack.c.bf16 %v2377, %v2377
    %v2549 = vpack.c.bf16 %v2380, %v2380
    %v2550 = vpack.c.bf16 %v2383, %v2383
    %v2551 = vpack.c.bf16 %v2386, %v2386
    %v2552 = vpack.c.bf16 %v2389, %v2389
    %v2553 = vpack.c.bf16 %v2392, %v2392
    %v2554 = vpack.c.bf16 %v2395, %v2395
    %v2555 = vpack.c.bf16 %v2398, %v2398
    %v2556 = vpack.c.bf16 %v2401, %v2401
    %v2557 = vpack.c.bf16 %v2404, %v2404
    %v2558 = vpack.c.bf16 %v2407, %v2407
    %v2559 = vpack.c.bf16 %v2410, %v2410
    %v2560 = vpack.c.bf16 %v2413, %v2413
    %v2561 = vpack.c.bf16 %v2416, %v2416
    %v2562 = vpack.c.bf16 %v2419, %v2419
    %v2563 = vpack.c.bf16 %v2422, %v2422
    %v2564 = vpack.c.bf16 %v2425, %v2425
    %v2565 = vpack.c.bf16 %v2428, %v2428
    %v2566 = vpack.c.bf16 %v2431, %v2431
    %v2567 = vpack.c.bf16 %v2434, %v2434
    %v2568 = vpack.c.bf16 %v2437, %v2437
    %v2569 = vpack.c.bf16 %v2440, %v2440
    %v2570 = vpack.c.bf16 %v2443, %v2443
    %v2571 = vpack.c.bf16 %v2446, %v2446
    %v2572 = vpack.c.bf16 %v2449, %v2449
    %v2573 = vpack.c.bf16 %v2452, %v2452
    %v2574 = vpack.c.bf16 %v2455, %v2455
    %v2575 = vpack.c.bf16 %v2458, %v2458
    %v2576 = vpack.c.bf16 %v2461, %v2461
    %v2577 = vpack.c.bf16 %v2464, %v2464
    %v2578 = vpack.c.bf16 %v2467, %v2467
    %v2579 = vpack.c.bf16 %v2470, %v2470
    %v2580 = vpack.c.bf16 %v2473, %v2473
    %v2581 = vpack.c.bf16 %v2476, %v2476
    %v2582 = vpack.c.bf16 %v2479, %v2479
    %v2583 = vpack.c.bf16 %v2482, %v2482
    %v2584 = vpack.c.bf16 %v2485, %v2485
    %v2585 = vpack.c.bf16 %v2488, %v2488
    %v2586 = vpack.c.bf16 %v2491, %v2491
    %v2587 = vpack.c.bf16 %v2494, %v2494
    %v2588 = vpack.c.bf16 %v2497, %v2497
    %v2589 = vpack.c.bf16 %v2500, %v2500
    %v2590 = vpack.c.bf16 %v2503, %v2503
    %v2591 = vpack.c.bf16 %v2506, %v2506
    %v2592 = vpack.c.bf16 %v2509, %v2509
    %v2593 = vpack.c.bf16 %v2512, %v2512
    %v2594 = vpack.c.bf16 %v2515, %v2515
    %v2595 = vpack.c.bf16 %v2518, %v2518
    %v2596 = vpack.c.bf16 %v2521, %v2521
    %v2597 = vpack.c.bf16 %v2524, %v2524
    %v2598 = vpack.c.bf16 %v2527, %v2527
    %v2599 = vpack.c.bf16 %v2530, %v2530
    %v2600 = vpack.c.bf16 %v2533, %v2533
    %v2601 = vpack.c.bf16 %v2536, %v2536
    %2602 = vst [vmem:[%s4] sm:$0xf] %v2538
    %2603 = vst [vmem:[%s4 + $0x4] sm:$0xf] %v2539
    %2604 = vst [vmem:[%s4 + $0x8] sm:$0xf] %v2540
    %2605 = vst [vmem:[%s4 + $0xc] sm:$0xf] %v2541
    %2606 = vst [vmem:[%s4 + $0x10] sm:$0xf] %v2542
    %2607 = vst [vmem:[%s4 + $0x14] sm:$0xf] %v2543
    %2608 = vst [vmem:[%s4 + $0x18] sm:$0xf] %v2544
    %2609 = vst [vmem:[%s4 + $0x1c] sm:$0xf] %v2545
    %2610 = vst [vmem:[%s4 + $0x20] sm:$0xf] %v2546
    %2611 = vst [vmem:[%s4 + $0x24] sm:$0xf] %v2547
    %2612 = vst [vmem:[%s4 + $0x28] sm:$0xf] %v2548
    %2613 = vst [vmem:[%s4 + $0x2c] sm:$0xf] %v2549
    %2614 = vst [vmem:[%s4 + $0x30] sm:$0xf] %v2550
    %2615 = vst [vmem:[%s4 + $0x34] sm:$0xf] %v2551
    %2616 = vst [vmem:[%s4 + $0x38] sm:$0xf] %v2552
    %2617 = vst [vmem:[%s4 + $0x3c] sm:$0xf] %v2553
    %2618 = vst [vmem:[%s4 + $0x40] sm:$0xf] %v2554
    %2619 = vst [vmem:[%s4 + $0x44] sm:$0xf] %v2555
    %2620 = vst [vmem:[%s4 + $0x48] sm:$0xf] %v2556
    %2621 = vst [vmem:[%s4 + $0x4c] sm:$0xf] %v2557
    %2622 = vst [vmem:[%s4 + $0x50] sm:$0xf] %v2558
    %2623 = vst [vmem:[%s4 + $0x54] sm:$0xf] %v2559
    %2624 = vst [vmem:[%s4 + $0x58] sm:$0xf] %v2560
    %2625 = vst [vmem:[%s4 + $0x5c] sm:$0xf] %v2561
    %2626 = vst [vmem:[%s4 + $0x60] sm:$0xf] %v2562
    %2627 = vst [vmem:[%s4 + $0x64] sm:$0xf] %v2563
    %2628 = vst [vmem:[%s4 + $0x68] sm:$0xf] %v2564
    %2629 = vst [vmem:[%s4 + $0x6c] sm:$0xf] %v2565
    %2630 = vst [vmem:[%s4 + $0x70] sm:$0xf] %v2566
    %2631 = vst [vmem:[%s4 + $0x74] sm:$0xf] %v2567
    %2632 = vst [vmem:[%s4 + $0x78] sm:$0xf] %v2568
    %2633 = vst [vmem:[%s4 + $0x7c] sm:$0xf] %v2569
    %2634 = vst [vmem:[%s4 + $0x80] sm:$0xf] %v2570
    %2635 = vst [vmem:[%s4 + $0x84] sm:$0xf] %v2571
    %2636 = vst [vmem:[%s4 + $0x88] sm:$0xf] %v2572
    %2637 = vst [vmem:[%s4 + $0x8c] sm:$0xf] %v2573
    %2638 = vst [vmem:[%s4 + $0x90] sm:$0xf] %v2574
    %2639 = vst [vmem:[%s4 + $0x94] sm:$0xf] %v2575
    %2640 = vst [vmem:[%s4 + $0x98] sm:$0xf] %v2576
    %2641 = vst [vmem:[%s4 + $0x9c] sm:$0xf] %v2577
    %2642 = vst [vmem:[%s4 + $0xa0] sm:$0xf] %v2578
    %2643 = vst [vmem:[%s4 + $0xa4] sm:$0xf] %v2579
    %2644 = vst [vmem:[%s4 + $0xa8] sm:$0xf] %v2580
    %2645 = vst [vmem:[%s4 + $0xac] sm:$0xf] %v2581
    %2646 = vst [vmem:[%s4 + $0xb0] sm:$0xf] %v2582
    %2647 = vst [vmem:[%s4 + $0xb4] sm:$0xf] %v2583
    %2648 = vst [vmem:[%s4 + $0xb8] sm:$0xf] %v2584
    %2649 = vst [vmem:[%s4 + $0xbc] sm:$0xf] %v2585
    %2650 = vst [vmem:[%s4 + $0xc0] sm:$0xf] %v2586
    %2651 = vst [vmem:[%s4 + $0xc4] sm:$0xf] %v2587
    %2652 = vst [vmem:[%s4 + $0xc8] sm:$0xf] %v2588
    %2653 = vst [vmem:[%s4 + $0xcc] sm:$0xf] %v2589
    %2654 = vst [vmem:[%s4 + $0xd0] sm:$0xf] %v2590
    %2655 = vst [vmem:[%s4 + $0xd4] sm:$0xf] %v2591
    %2656 = vst [vmem:[%s4 + $0xd8] sm:$0xf] %v2592
    %2657 = vst [vmem:[%s4 + $0xdc] sm:$0xf] %v2593
    %2658 = vst [vmem:[%s4 + $0xe0] sm:$0xf] %v2594
    %2659 = vst [vmem:[%s4 + $0xe4] sm:$0xf] %v2595
    %2660 = vst [vmem:[%s4 + $0xe8] sm:$0xf] %v2596
    %2661 = vst [vmem:[%s4 + $0xec] sm:$0xf] %v2597
    %2662 = vst [vmem:[%s4 + $0xf0] sm:$0xf] %v2598
    %2663 = vst [vmem:[%s4 + $0xf4] sm:$0xf] %v2599
    %2664 = vst [vmem:[%s4 + $0xf8] sm:$0xf] %v2600
    %2665 = vst [vmem:[%s4 + $0xfc] sm:$0xf] %v2601
  $region29: #{gnn_forward.4} parent=0 // pred_fallthru
    _
  // Predicated region
  $region30: #{gnn_forward.4} parent=0 // pred_check
    _
  $region31: #{gnn_forward.4} parent=0 // pred_check_branch
    %2667 = sbr.rel (0) target = $region33
  $region32: #{gnn_forward.4} parent=0 // pred_region
    _
  $region33: #{gnn_forward.4} parent=0 // pred_fallthru
    _
  // Predicated region
  $region34: #{gnn_forward.4} parent=0 // pred_check
    _
  $region35: #{gnn_forward.4} parent=0 // pred_check_branch
    %2669 = sbr.rel (0) target = $region37
  $region36: #{gnn_forward.4} parent=0 // pred_region
    _
  $region37: #{gnn_forward.4} parent=0 // pred_fallthru
    _

// kernel: gnn_forward.3
$region0: #{gnn_forward.3}
  #allocation0 [shape = 'u32[]', space=smem, size = 0x4, offset = 0x4, fixed_abs, tag = 'smem constant byte address 0x4 - core index']
  #allocation1 [shape = 'u32[72,128]{1,0:T(1,128)}', space=vmem, size = 0x9000, scoped, tag = 'internal scratch']
  #allocation2 [shape = 'f32[512,128]{1,0:T(8,128)}', space=vmem, size = 0x40000, scoped, tag = 'scratch operand']
  %s0 = inlined_call_operand.vmem [shape: bf16[512,512], index: 0, kind: input, shape index: {}]
  %s1 = inlined_call_operand.vmem [shape: bf16[512,128], index: 1, kind: input, shape index: {}]
  %s2 = inlined_call_operand.vmem [shape: f32[128,128], index: 2, kind: input, shape index: {}]
  %s3 = inlined_call_operand.vmem [shape: f32[1,128], index: 3, kind: input, shape index: {}]
  %s4 = inlined_call_operand.vmem [shape: bf16[512,128], index: 4, kind: output, shape index: {}]
  %s5 = sld [smem:[#allocation0]]
  $region38: #{gnn_forward.3} parent=0
    _
  %s7 = ssub.s32 1, %s5
  %s8 = scalar_select 0, %s7, %s5
  // Predicated region
  $region2: #{gnn_forward.3} parent=0 // pred_check
    _
  $region3: #{gnn_forward.3} parent=0 // pred_check_branch
    %10 = sbr.rel (0) target = $region5
  $region4: #{gnn_forward.3} parent=0 // pred_region
    _
  $region5: #{gnn_forward.3} parent=0 // pred_fallthru
    _
  // Predicated region
  $region6: #{gnn_forward.3} parent=0 // pred_check
    _
  $region7: #{gnn_forward.3} parent=0 // pred_check_branch
    %12 = sbr.rel (0) target = $region9
  $region8: #{gnn_forward.3} parent=0 // pred_region
    _
  $region9: #{gnn_forward.3} parent=0 // pred_fallthru
    _
  // Predicated region
  $region10: #{gnn_forward.3} parent=0 // pred_check
    _
  $region11: #{gnn_forward.3} parent=0 // pred_check_branch
    %14 = sbr.rel (0) target = $region13
  $region12: #{gnn_forward.3} parent=0 // pred_region
    _
  $region13: #{gnn_forward.3} parent=0 // pred_fallthru
    _
  // Predicated region
  $region14: #{gnn_forward.3} parent=0 // pred_check
    _
  $region15: #{gnn_forward.3} parent=0 // pred_check_branch
    %16 = sbr.rel (0) target = $region17
  $region16: #{gnn_forward.3} parent=0 // pred_region
    _
  $region17: #{gnn_forward.3} parent=0 // pred_fallthru
    _
  %p17 = scmp.eq.s32.totalorder 0, 0
  // Predicated region
  $region18: #{gnn_forward.3} parent=0 // pred_check
    %p18 = pneg %p17
  $region19: #{gnn_forward.3} parent=0 // pred_check_branch
    %20 = sbr.rel (%p18) target = $region21
  $region20: #{gnn_forward.3} parent=0 // pred_region
    %21 = vst [vmem:[#allocation2] sm:$0xff] 0.0
    %22 = vst [vmem:[#allocation2 + $0x8] sm:$0xff] 0.0
    %23 = vst [vmem:[#allocation2 + $0x10] sm:$0xff] 0.0
    %24 = vst [vmem:[#allocation2 + $0x18] sm:$0xff] 0.0
    %25 = vst [vmem:[#allocation2 + $0x20] sm:$0xff] 0.0
    %26 = vst [vmem:[#allocation2 + $0x28] sm:$0xff] 0.0
    %27 = vst [vmem:[#allocation2 + $0x30] sm:$0xff] 0.0
    %28 = vst [vmem:[#allocation2 + $0x38] sm:$0xff] 0.0
    %29 = vst [vmem:[#allocation2 + $0x40] sm:$0xff] 0.0
    %30 = vst [vmem:[#allocation2 + $0x48] sm:$0xff] 0.0
    %31 = vst [vmem:[#allocation2 + $0x50] sm:$0xff] 0.0
    %32 = vst [vmem:[#allocation2 + $0x58] sm:$0xff] 0.0
    %33 = vst [vmem:[#allocation2 + $0x60] sm:$0xff] 0.0
    %34 = vst [vmem:[#allocation2 + $0x68] sm:$0xff] 0.0
    %35 = vst [vmem:[#allocation2 + $0x70] sm:$0xff] 0.0
    %36 = vst [vmem:[#allocation2 + $0x78] sm:$0xff] 0.0
    %37 = vst [vmem:[#allocation2 + $0x80] sm:$0xff] 0.0
    %38 = vst [vmem:[#allocation2 + $0x88] sm:$0xff] 0.0
    %39 = vst [vmem:[#allocation2 + $0x90] sm:$0xff] 0.0
    %40 = vst [vmem:[#allocation2 + $0x98] sm:$0xff] 0.0
    %41 = vst [vmem:[#allocation2 + $0xa0] sm:$0xff] 0.0
    %42 = vst [vmem:[#allocation2 + $0xa8] sm:$0xff] 0.0
    %43 = vst [vmem:[#allocation2 + $0xb0] sm:$0xff] 0.0
    %44 = vst [vmem:[#allocation2 + $0xb8] sm:$0xff] 0.0
    %45 = vst [vmem:[#allocation2 + $0xc0] sm:$0xff] 0.0
    %46 = vst [vmem:[#allocation2 + $0xc8] sm:$0xff] 0.0
    %47 = vst [vmem:[#allocation2 + $0xd0] sm:$0xff] 0.0
    %48 = vst [vmem:[#allocation2 + $0xd8] sm:$0xff] 0.0
    %49 = vst [vmem:[#allocation2 + $0xe0] sm:$0xff] 0.0
    %50 = vst [vmem:[#allocation2 + $0xe8] sm:$0xff] 0.0
    %51 = vst [vmem:[#allocation2 + $0xf0] sm:$0xff] 0.0
    %52 = vst [vmem:[#allocation2 + $0xf8] sm:$0xff] 0.0
    %53 = vst [vmem:[#allocation2 + $0x100] sm:$0xff] 0.0
    %54 = vst [vmem:[#allocation2 + $0x108] sm:$0xff] 0.0
    %55 = vst [vmem:[#allocation2 + $0x110] sm:$0xff] 0.0
    %56 = vst [vmem:[#allocation2 + $0x118] sm:$0xff] 0.0
    %57 = vst [vmem:[#allocation2 + $0x120] sm:$0xff] 0.0
    %58 = vst [vmem:[#allocation2 + $0x128] sm:$0xff] 0.0
    %59 = vst [vmem:[#allocation2 + $0x130] sm:$0xff] 0.0
    %60 = vst [vmem:[#allocation2 + $0x138] sm:$0xff] 0.0
    %61 = vst [vmem:[#allocation2 + $0x140] sm:$0xff] 0.0
    %62 = vst [vmem:[#allocation2 + $0x148] sm:$0xff] 0.0
    %63 = vst [vmem:[#allocation2 + $0x150] sm:$0xff] 0.0
    %64 = vst [vmem:[#allocation2 + $0x158] sm:$0xff] 0.0
    %65 = vst [vmem:[#allocation2 + $0x160] sm:$0xff] 0.0
    %66 = vst [vmem:[#allocation2 + $0x168] sm:$0xff] 0.0
    %67 = vst [vmem:[#allocation2 + $0x170] sm:$0xff] 0.0
    %68 = vst [vmem:[#allocation2 + $0x178] sm:$0xff] 0.0
    %69 = vst [vmem:[#allocation2 + $0x180] sm:$0xff] 0.0
    %70 = vst [vmem:[#allocation2 + $0x188] sm:$0xff] 0.0
    %71 = vst [vmem:[#allocation2 + $0x190] sm:$0xff] 0.0
    %72 = vst [vmem:[#allocation2 + $0x198] sm:$0xff] 0.0
    %73 = vst [vmem:[#allocation2 + $0x1a0] sm:$0xff] 0.0
    %74 = vst [vmem:[#allocation2 + $0x1a8] sm:$0xff] 0.0
    %75 = vst [vmem:[#allocation2 + $0x1b0] sm:$0xff] 0.0
    %76 = vst [vmem:[#allocation2 + $0x1b8] sm:$0xff] 0.0
    %77 = vst [vmem:[#allocation2 + $0x1c0] sm:$0xff] 0.0
    %78 = vst [vmem:[#allocation2 + $0x1c8] sm:$0xff] 0.0
    %79 = vst [vmem:[#allocation2 + $0x1d0] sm:$0xff] 0.0
    %80 = vst [vmem:[#allocation2 + $0x1d8] sm:$0xff] 0.0
    %81 = vst [vmem:[#allocation2 + $0x1e0] sm:$0xff] 0.0
    %82 = vst [vmem:[#allocation2 + $0x1e8] sm:$0xff] 0.0
    %83 = vst [vmem:[#allocation2 + $0x1f0] sm:$0xff] 0.0
    %84 = vst [vmem:[#allocation2 + $0x1f8] sm:$0xff] 0.0
  $region21: #{gnn_forward.3} parent=0 // pred_fallthru
    _
  %s85 = smul.u32 0, 512
  %s86 = sshra.s32 %s85, 3
  %s87 = sand.u32 %s85, 7
  %s88 = smul.addr %s86, 4
  %s89 = scalar_lea.vmem %s1, %s88
  %v90 = vld [vmem:[%s89] sm:$0xf]
  %v91 = vld [vmem:[%s89 + $0x4] sm:$0xf]
  %v92 = vld [vmem:[%s89 + $0x8] sm:$0xf]
  %v93 = vld [vmem:[%s89 + $0xc] sm:$0xf]
  %v94 = vld [vmem:[%s89 + $0x10] sm:$0xf]
  %v95 = vld [vmem:[%s89 + $0x14] sm:$0xf]
  %v96 = vld [vmem:[%s89 + $0x18] sm:$0xf]
  %v97 = vld [vmem:[%s89 + $0x1c] sm:$0xf]
  %v98 = vld [vmem:[%s89 + $0x20] sm:$0xf]
  %v99 = vld [vmem:[%s89 + $0x24] sm:$0xf]
  %v100 = vld [vmem:[%s89 + $0x28] sm:$0xf]
  %v101 = vld [vmem:[%s89 + $0x2c] sm:$0xf]
  %v102 = vld [vmem:[%s89 + $0x30] sm:$0xf]
  %v103 = vld [vmem:[%s89 + $0x34] sm:$0xf]
  %v104 = vld [vmem:[%s89 + $0x38] sm:$0xf]
  %v105 = vld [vmem:[%s89 + $0x3c] sm:$0xf]
  %v106 = vld [vmem:[%s89 + $0x40] sm:$0xf]
  %v107 = vld [vmem:[%s89 + $0x44] sm:$0xf]
  %v108 = vld [vmem:[%s89 + $0x48] sm:$0xf]
  %v109 = vld [vmem:[%s89 + $0x4c] sm:$0xf]
  %v110 = vld [vmem:[%s89 + $0x50] sm:$0xf]
  %v111 = vld [vmem:[%s89 + $0x54] sm:$0xf]
  %v112 = vld [vmem:[%s89 + $0x58] sm:$0xf]
  %v113 = vld [vmem:[%s89 + $0x5c] sm:$0xf]
  %v114 = vld [vmem:[%s89 + $0x60] sm:$0xf]
  %v115 = vld [vmem:[%s89 + $0x64] sm:$0xf]
  %v116 = vld [vmem:[%s89 + $0x68] sm:$0xf]
  %v117 = vld [vmem:[%s89 + $0x6c] sm:$0xf]
  %v118 = vld [vmem:[%s89 + $0x70] sm:$0xf]
  %v119 = vld [vmem:[%s89 + $0x74] sm:$0xf]
  %v120 = vld [vmem:[%s89 + $0x78] sm:$0xf]
  %v121 = vld [vmem:[%s89 + $0x7c] sm:$0xf]
  %v122 = vld [vmem:[%s89 + $0x80] sm:$0xf]
  %v123 = vld [vmem:[%s89 + $0x84] sm:$0xf]
  %v124 = vld [vmem:[%s89 + $0x88] sm:$0xf]
  %v125 = vld [vmem:[%s89 + $0x8c] sm:$0xf]
  %v126 = vld [vmem:[%s89 + $0x90] sm:$0xf]
  %v127 = vld [vmem:[%s89 + $0x94] sm:$0xf]
  %v128 = vld [vmem:[%s89 + $0x98] sm:$0xf]
  %v129 = vld [vmem:[%s89 + $0x9c] sm:$0xf]
  %v130 = vld [vmem:[%s89 + $0xa0] sm:$0xf]
  %v131 = vld [vmem:[%s89 + $0xa4] sm:$0xf]
  %v132 = vld [vmem:[%s89 + $0xa8] sm:$0xf]
  %v133 = vld [vmem:[%s89 + $0xac] sm:$0xf]
  %v134 = vld [vmem:[%s89 + $0xb0] sm:$0xf]
  %v135 = vld [vmem:[%s89 + $0xb4] sm:$0xf]
  %v136 = vld [vmem:[%s89 + $0xb8] sm:$0xf]
  %v137 = vld [vmem:[%s89 + $0xbc] sm:$0xf]
  %v138 = vld [vmem:[%s89 + $0xc0] sm:$0xf]
  %v139 = vld [vmem:[%s89 + $0xc4] sm:$0xf]
  %v140 = vld [vmem:[%s89 + $0xc8] sm:$0xf]
  %v141 = vld [vmem:[%s89 + $0xcc] sm:$0xf]
  %v142 = vld [vmem:[%s89 + $0xd0] sm:$0xf]
  %v143 = vld [vmem:[%s89 + $0xd4] sm:$0xf]
  %v144 = vld [vmem:[%s89 + $0xd8] sm:$0xf]
  %v145 = vld [vmem:[%s89 + $0xdc] sm:$0xf]
  %v146 = vld [vmem:[%s89 + $0xe0] sm:$0xf]
  %v147 = vld [vmem:[%s89 + $0xe4] sm:$0xf]
  %v148 = vld [vmem:[%s89 + $0xe8] sm:$0xf]
  %v149 = vld [vmem:[%s89 + $0xec] sm:$0xf]
  %v150 = vld [vmem:[%s89 + $0xf0] sm:$0xf]
  %v151 = vld [vmem:[%s89 + $0xf4] sm:$0xf]
  %v152 = vld [vmem:[%s89 + $0xf8] sm:$0xf]
  %v153 = vld [vmem:[%s89 + $0xfc] sm:$0xf]
  %v154 = vld [vmem:[#allocation2] sm:$0xff]
  %v155 = vld [vmem:[#allocation2 + $0x8] sm:$0xff]
  %v156 = vld [vmem:[#allocation2 + $0x10] sm:$0xff]
  %v157 = vld [vmem:[#allocation2 + $0x18] sm:$0xff]
  %v158 = vld [vmem:[#allocation2 + $0x20] sm:$0xff]
  %v159 = vld [vmem:[#allocation2 + $0x28] sm:$0xff]
  %v160 = vld [vmem:[#allocation2 + $0x30] sm:$0xff]
  %v161 = vld [vmem:[#allocation2 + $0x38] sm:$0xff]
  %v162 = vld [vmem:[#allocation2 + $0x40] sm:$0xff]
  %v163 = vld [vmem:[#allocation2 + $0x48] sm:$0xff]
  %v164 = vld [vmem:[#allocation2 + $0x50] sm:$0xff]
  %v165 = vld [vmem:[#allocation2 + $0x58] sm:$0xff]
  %v166 = vld [vmem:[#allocation2 + $0x60] sm:$0xff]
  %v167 = vld [vmem:[#allocation2 + $0x68] sm:$0xff]
  %v168 = vld [vmem:[#allocation2 + $0x70] sm:$0xff]
  %v169 = vld [vmem:[#allocation2 + $0x78] sm:$0xff]
  %v170 = vld [vmem:[#allocation2 + $0x80] sm:$0xff]
  %v171 = vld [vmem:[#allocation2 + $0x88] sm:$0xff]
  %v172 = vld [vmem:[#allocation2 + $0x90] sm:$0xff]
  %v173 = vld [vmem:[#allocation2 + $0x98] sm:$0xff]
  %v174 = vld [vmem:[#allocation2 + $0xa0] sm:$0xff]
  %v175 = vld [vmem:[#allocation2 + $0xa8] sm:$0xff]
  %v176 = vld [vmem:[#allocation2 + $0xb0] sm:$0xff]
  %v177 = vld [vmem:[#allocation2 + $0xb8] sm:$0xff]
  %v178 = vld [vmem:[#allocation2 + $0xc0] sm:$0xff]
  %v179 = vld [vmem:[#allocation2 + $0xc8] sm:$0xff]
  %v180 = vld [vmem:[#allocation2 + $0xd0] sm:$0xff]
  %v181 = vld [vmem:[#allocation2 + $0xd8] sm:$0xff]
  %v182 = vld [vmem:[#allocation2 + $0xe0] sm:$0xff]
  %v183 = vld [vmem:[#allocation2 + $0xe8] sm:$0xff]
  %v184 = vld [vmem:[#allocation2 + $0xf0] sm:$0xff]
  %v185 = vld [vmem:[#allocation2 + $0xf8] sm:$0xff]
  %v186 = vld [vmem:[#allocation2 + $0x100] sm:$0xff]
  %v187 = vld [vmem:[#allocation2 + $0x108] sm:$0xff]
  %v188 = vld [vmem:[#allocation2 + $0x110] sm:$0xff]
  %v189 = vld [vmem:[#allocation2 + $0x118] sm:$0xff]
  %v190 = vld [vmem:[#allocation2 + $0x120] sm:$0xff]
  %v191 = vld [vmem:[#allocation2 + $0x128] sm:$0xff]
  %v192 = vld [vmem:[#allocation2 + $0x130] sm:$0xff]
  %v193 = vld [vmem:[#allocation2 + $0x138] sm:$0xff]
  %v194 = vld [vmem:[#allocation2 + $0x140] sm:$0xff]
  %v195 = vld [vmem:[#allocation2 + $0x148] sm:$0xff]
  %v196 = vld [vmem:[#allocation2 + $0x150] sm:$0xff]
  %v197 = vld [vmem:[#allocation2 + $0x158] sm:$0xff]
  %v198 = vld [vmem:[#allocation2 + $0x160] sm:$0xff]
  %v199 = vld [vmem:[#allocation2 + $0x168] sm:$0xff]
  %v200 = vld [vmem:[#allocation2 + $0x170] sm:$0xff]
  %v201 = vld [vmem:[#allocation2 + $0x178] sm:$0xff]
  %v202 = vld [vmem:[#allocation2 + $0x180] sm:$0xff]
  %v203 = vld [vmem:[#allocation2 + $0x188] sm:$0xff]
  %v204 = vld [vmem:[#allocation2 + $0x190] sm:$0xff]
  %v205 = vld [vmem:[#allocation2 + $0x198] sm:$0xff]
  %v206 = vld [vmem:[#allocation2 + $0x1a0] sm:$0xff]
  %v207 = vld [vmem:[#allocation2 + $0x1a8] sm:$0xff]
  %v208 = vld [vmem:[#allocation2 + $0x1b0] sm:$0xff]
  %v209 = vld [vmem:[#allocation2 + $0x1b8] sm:$0xff]
  %v210 = vld [vmem:[#allocation2 + $0x1c0] sm:$0xff]
  %v211 = vld [vmem:[#allocation2 + $0x1c8] sm:$0xff]
  %v212 = vld [vmem:[#allocation2 + $0x1d0] sm:$0xff]
  %v213 = vld [vmem:[#allocation2 + $0x1d8] sm:$0xff]
  %v214 = vld [vmem:[#allocation2 + $0x1e0] sm:$0xff]
  %v215 = vld [vmem:[#allocation2 + $0x1e8] sm:$0xff]
  %v216 = vld [vmem:[#allocation2 + $0x1f0] sm:$0xff]
  %v217 = vld [vmem:[#allocation2 + $0x1f8] sm:$0xff]
  %v218 = vld [vmem:[%s0] sm:$0xff]
  %v219 = vld [vmem:[%s0 + $0x8] sm:$0xff]
  %v220 = vld [vmem:[%s0 + $0x10] sm:$0xff]
  %v221 = vld [vmem:[%s0 + $0x18] sm:$0xff]
  %v222 = vld [vmem:[%s0 + $0x20] sm:$0xff]
  %v223 = vld [vmem:[%s0 + $0x28] sm:$0xff]
  %v224 = vld [vmem:[%s0 + $0x30] sm:$0xff]
  %v225 = vld [vmem:[%s0 + $0x38] sm:$0xff]
  %v226 = vld [vmem:[%s0 + $0x40] sm:$0xff]
  %v227 = vld [vmem:[%s0 + $0x48] sm:$0xff]
  %v228 = vld [vmem:[%s0 + $0x50] sm:$0xff]
  %v229 = vld [vmem:[%s0 + $0x58] sm:$0xff]
  %v230 = vld [vmem:[%s0 + $0x60] sm:$0xff]
  %v231 = vld [vmem:[%s0 + $0x68] sm:$0xff]
  %v232 = vld [vmem:[%s0 + $0x70] sm:$0xff]
  %v233 = vld [vmem:[%s0 + $0x78] sm:$0xff]
  %v234 = vld [vmem:[%s0 + $0x80] sm:$0xff]
  %v235 = vld [vmem:[%s0 + $0x88] sm:$0xff]
  %v236 = vld [vmem:[%s0 + $0x90] sm:$0xff]
  %v237 = vld [vmem:[%s0 + $0x98] sm:$0xff]
  %v238 = vld [vmem:[%s0 + $0xa0] sm:$0xff]
  %v239 = vld [vmem:[%s0 + $0xa8] sm:$0xff]
  %v240 = vld [vmem:[%s0 + $0xb0] sm:$0xff]
  %v241 = vld [vmem:[%s0 + $0xb8] sm:$0xff]
  %v242 = vld [vmem:[%s0 + $0xc0] sm:$0xff]
  %v243 = vld [vmem:[%s0 + $0xc8] sm:$0xff]
  %v244 = vld [vmem:[%s0 + $0xd0] sm:$0xff]
  %v245 = vld [vmem:[%s0 + $0xd8] sm:$0xff]
  %v246 = vld [vmem:[%s0 + $0xe0] sm:$0xff]
  %v247 = vld [vmem:[%s0 + $0xe8] sm:$0xff]
  %v248 = vld [vmem:[%s0 + $0xf0] sm:$0xff]
  %v249 = vld [vmem:[%s0 + $0xf8] sm:$0xff]
  %v250 = vld [vmem:[%s0 + $0x100] sm:$0xff]
  %v251 = vld [vmem:[%s0 + $0x108] sm:$0xff]
  %v252 = vld [vmem:[%s0 + $0x110] sm:$0xff]
  %v253 = vld [vmem:[%s0 + $0x118] sm:$0xff]
  %v254 = vld [vmem:[%s0 + $0x120] sm:$0xff]
  %v255 = vld [vmem:[%s0 + $0x128] sm:$0xff]
  %v256 = vld [vmem:[%s0 + $0x130] sm:$0xff]
  %v257 = vld [vmem:[%s0 + $0x138] sm:$0xff]
  %v258 = vld [vmem:[%s0 + $0x140] sm:$0xff]
  %v259 = vld [vmem:[%s0 + $0x148] sm:$0xff]
  %v260 = vld [vmem:[%s0 + $0x150] sm:$0xff]
  %v261 = vld [vmem:[%s0 + $0x158] sm:$0xff]
  %v262 = vld [vmem:[%s0 + $0x160] sm:$0xff]
  %v263 = vld [vmem:[%s0 + $0x168] sm:$0xff]
  %v264 = vld [vmem:[%s0 + $0x170] sm:$0xff]
  %v265 = vld [vmem:[%s0 + $0x178] sm:$0xff]
  %v266 = vld [vmem:[%s0 + $0x180] sm:$0xff]
  %v267 = vld [vmem:[%s0 + $0x188] sm:$0xff]
  %v268 = vld [vmem:[%s0 + $0x190] sm:$0xff]
  %v269 = vld [vmem:[%s0 + $0x198] sm:$0xff]
  %v270 = vld [vmem:[%s0 + $0x1a0] sm:$0xff]
  %v271 = vld [vmem:[%s0 + $0x1a8] sm:$0xff]
  %v272 = vld [vmem:[%s0 + $0x1b0] sm:$0xff]
  %v273 = vld [vmem:[%s0 + $0x1b8] sm:$0xff]
  %v274 = vld [vmem:[%s0 + $0x1c0] sm:$0xff]
  %v275 = vld [vmem:[%s0 + $0x1c8] sm:$0xff]
  %v276 = vld [vmem:[%s0 + $0x1d0] sm:$0xff]
  %v277 = vld [vmem:[%s0 + $0x1d8] sm:$0xff]
  %v278 = vld [vmem:[%s0 + $0x1e0] sm:$0xff]
  %v279 = vld [vmem:[%s0 + $0x1e8] sm:$0xff]
  %v280 = vld [vmem:[%s0 + $0x1f0] sm:$0xff]
  %v281 = vld [vmem:[%s0 + $0x1f8] sm:$0xff]
  %v282 = vld [vmem:[%s0 + $0x200] sm:$0xff]
  %v283 = vld [vmem:[%s0 + $0x208] sm:$0xff]
  %v284 = vld [vmem:[%s0 + $0x210] sm:$0xff]
  %v285 = vld [vmem:[%s0 + $0x218] sm:$0xff]
  %v286 = vld [vmem:[%s0 + $0x220] sm:$0xff]
  %v287 = vld [vmem:[%s0 + $0x228] sm:$0xff]
  %v288 = vld [vmem:[%s0 + $0x230] sm:$0xff]
  %v289 = vld [vmem:[%s0 + $0x238] sm:$0xff]
  %v290 = vld [vmem:[%s0 + $0x240] sm:$0xff]
  %v291 = vld [vmem:[%s0 + $0x248] sm:$0xff]
  %v292 = vld [vmem:[%s0 + $0x250] sm:$0xff]
  %v293 = vld [vmem:[%s0 + $0x258] sm:$0xff]
  %v294 = vld [vmem:[%s0 + $0x260] sm:$0xff]
  %v295 = vld [vmem:[%s0 + $0x268] sm:$0xff]
  %v296 = vld [vmem:[%s0 + $0x270] sm:$0xff]
  %v297 = vld [vmem:[%s0 + $0x278] sm:$0xff]
  %v298 = vld [vmem:[%s0 + $0x280] sm:$0xff]
  %v299 = vld [vmem:[%s0 + $0x288] sm:$0xff]
  %v300 = vld [vmem:[%s0 + $0x290] sm:$0xff]
  %v301 = vld [vmem:[%s0 + $0x298] sm:$0xff]
  %v302 = vld [vmem:[%s0 + $0x2a0] sm:$0xff]
  %v303 = vld [vmem:[%s0 + $0x2a8] sm:$0xff]
  %v304 = vld [vmem:[%s0 + $0x2b0] sm:$0xff]
  %v305 = vld [vmem:[%s0 + $0x2b8] sm:$0xff]
  %v306 = vld [vmem:[%s0 + $0x2c0] sm:$0xff]
  %v307 = vld [vmem:[%s0 + $0x2c8] sm:$0xff]
  %v308 = vld [vmem:[%s0 + $0x2d0] sm:$0xff]
  %v309 = vld [vmem:[%s0 + $0x2d8] sm:$0xff]
  %v310 = vld [vmem:[%s0 + $0x2e0] sm:$0xff]
  %v311 = vld [vmem:[%s0 + $0x2e8] sm:$0xff]
  %v312 = vld [vmem:[%s0 + $0x2f0] sm:$0xff]
  %v313 = vld [vmem:[%s0 + $0x2f8] sm:$0xff]
  %v314 = vld [vmem:[%s0 + $0x300] sm:$0xff]
  %v315 = vld [vmem:[%s0 + $0x308] sm:$0xff]
  %v316 = vld [vmem:[%s0 + $0x310] sm:$0xff]
  %v317 = vld [vmem:[%s0 + $0x318] sm:$0xff]
  %v318 = vld [vmem:[%s0 + $0x320] sm:$0xff]
  %v319 = vld [vmem:[%s0 + $0x328] sm:$0xff]
  %v320 = vld [vmem:[%s0 + $0x330] sm:$0xff]
  %v321 = vld [vmem:[%s0 + $0x338] sm:$0xff]
  %v322 = vld [vmem:[%s0 + $0x340] sm:$0xff]
  %v323 = vld [vmem:[%s0 + $0x348] sm:$0xff]
  %v324 = vld [vmem:[%s0 + $0x350] sm:$0xff]
  %v325 = vld [vmem:[%s0 + $0x358] sm:$0xff]
  %v326 = vld [vmem:[%s0 + $0x360] sm:$0xff]
  %v327 = vld [vmem:[%s0 + $0x368] sm:$0xff]
  %v328 = vld [vmem:[%s0 + $0x370] sm:$0xff]
  %v329 = vld [vmem:[%s0 + $0x378] sm:$0xff]
  %v330 = vld [vmem:[%s0 + $0x380] sm:$0xff]
  %v331 = vld [vmem:[%s0 + $0x388] sm:$0xff]
  %v332 = vld [vmem:[%s0 + $0x390] sm:$0xff]
  %v333 = vld [vmem:[%s0 + $0x398] sm:$0xff]
  %v334 = vld [vmem:[%s0 + $0x3a0] sm:$0xff]
  %v335 = vld [vmem:[%s0 + $0x3a8] sm:$0xff]
  %v336 = vld [vmem:[%s0 + $0x3b0] sm:$0xff]
  %v337 = vld [vmem:[%s0 + $0x3b8] sm:$0xff]
  %v338 = vld [vmem:[%s0 + $0x3c0] sm:$0xff]
  %v339 = vld [vmem:[%s0 + $0x3c8] sm:$0xff]
  %v340 = vld [vmem:[%s0 + $0x3d0] sm:$0xff]
  %v341 = vld [vmem:[%s0 + $0x3d8] sm:$0xff]
  %v342 = vld [vmem:[%s0 + $0x3e0] sm:$0xff]
  %v343 = vld [vmem:[%s0 + $0x3e8] sm:$0xff]
  %v344 = vld [vmem:[%s0 + $0x3f0] sm:$0xff]
  %v345 = vld [vmem:[%s0 + $0x3f8] sm:$0xff]
  %v474 = vunpack.c.l.b16 %v218
  %v475 = vunpack.c.h.b16 %v218
  %v476 = vunpack.c.l.b16 %v219
  %v477 = vunpack.c.h.b16 %v219
  %v478 = vunpack.c.l.b16 %v220
  %v479 = vunpack.c.h.b16 %v220
  %v480 = vunpack.c.l.b16 %v221
  %v481 = vunpack.c.h.b16 %v221
  %v482 = vunpack.c.l.b16 %v222
  %v483 = vunpack.c.h.b16 %v222
  %v484 = vunpack.c.l.b16 %v223
  %v485 = vunpack.c.h.b16 %v223
  %v486 = vunpack.c.l.b16 %v224
  %v487 = vunpack.c.h.b16 %v224
  %v488 = vunpack.c.l.b16 %v225
  %v489 = vunpack.c.h.b16 %v225
  %v490 = vunpack.c.l.b16 %v226
  %v491 = vunpack.c.h.b16 %v226
  %v492 = vunpack.c.l.b16 %v227
  %v493 = vunpack.c.h.b16 %v227
  %v494 = vunpack.c.l.b16 %v228
  %v495 = vunpack.c.h.b16 %v228
  %v496 = vunpack.c.l.b16 %v229
  %v497 = vunpack.c.h.b16 %v229
  %v498 = vunpack.c.l.b16 %v230
  %v499 = vunpack.c.h.b16 %v230
  %v500 = vunpack.c.l.b16 %v231
  %v501 = vunpack.c.h.b16 %v231
  %v502 = vunpack.c.l.b16 %v232
  %v503 = vunpack.c.h.b16 %v232
  %v504 = vunpack.c.l.b16 %v233
  %v505 = vunpack.c.h.b16 %v233
  %v506 = vunpack.c.l.b16 %v234
  %v507 = vunpack.c.h.b16 %v234
  %v508 = vunpack.c.l.b16 %v235
  %v509 = vunpack.c.h.b16 %v235
  %v510 = vunpack.c.l.b16 %v236
  %v511 = vunpack.c.h.b16 %v236
  %v512 = vunpack.c.l.b16 %v237
  %v513 = vunpack.c.h.b16 %v237
  %v514 = vunpack.c.l.b16 %v238
  %v515 = vunpack.c.h.b16 %v238
  %v516 = vunpack.c.l.b16 %v239
  %v517 = vunpack.c.h.b16 %v239
  %v518 = vunpack.c.l.b16 %v240
  %v519 = vunpack.c.h.b16 %v240
  %v520 = vunpack.c.l.b16 %v241
  %v521 = vunpack.c.h.b16 %v241
  %v522 = vunpack.c.l.b16 %v242
  %v523 = vunpack.c.h.b16 %v242
  %v524 = vunpack.c.l.b16 %v243
  %v525 = vunpack.c.h.b16 %v243
  %v526 = vunpack.c.l.b16 %v244
  %v527 = vunpack.c.h.b16 %v244
  %v528 = vunpack.c.l.b16 %v245
  %v529 = vunpack.c.h.b16 %v245
  %v530 = vunpack.c.l.b16 %v246
  %v531 = vunpack.c.h.b16 %v246
  %v532 = vunpack.c.l.b16 %v247
  %v533 = vunpack.c.h.b16 %v247
  %v534 = vunpack.c.l.b16 %v248
  %v535 = vunpack.c.h.b16 %v248
  %v536 = vunpack.c.l.b16 %v249
  %v537 = vunpack.c.h.b16 %v249
  %v538 = vunpack.c.l.b16 %v250
  %v539 = vunpack.c.h.b16 %v250
  %v540 = vunpack.c.l.b16 %v251
  %v541 = vunpack.c.h.b16 %v251
  %v542 = vunpack.c.l.b16 %v252
  %v543 = vunpack.c.h.b16 %v252
  %v544 = vunpack.c.l.b16 %v253
  %v545 = vunpack.c.h.b16 %v253
  %v546 = vunpack.c.l.b16 %v254
  %v547 = vunpack.c.h.b16 %v254
  %v548 = vunpack.c.l.b16 %v255
  %v549 = vunpack.c.h.b16 %v255
  %v550 = vunpack.c.l.b16 %v256
  %v551 = vunpack.c.h.b16 %v256
  %v552 = vunpack.c.l.b16 %v257
  %v553 = vunpack.c.h.b16 %v257
  %v554 = vunpack.c.l.b16 %v258
  %v555 = vunpack.c.h.b16 %v258
  %v556 = vunpack.c.l.b16 %v259
  %v557 = vunpack.c.h.b16 %v259
  %v558 = vunpack.c.l.b16 %v260
  %v559 = vunpack.c.h.b16 %v260
  %v560 = vunpack.c.l.b16 %v261
  %v561 = vunpack.c.h.b16 %v261
  %v562 = vunpack.c.l.b16 %v262
  %v563 = vunpack.c.h.b16 %v262
  %v564 = vunpack.c.l.b16 %v263
  %v565 = vunpack.c.h.b16 %v263
  %v566 = vunpack.c.l.b16 %v264
  %v567 = vunpack.c.h.b16 %v264
  %v568 = vunpack.c.l.b16 %v265
  %v569 = vunpack.c.h.b16 %v265
  %v570 = vunpack.c.l.b16 %v266
  %v571 = vunpack.c.h.b16 %v266
  %v572 = vunpack.c.l.b16 %v267
  %v573 = vunpack.c.h.b16 %v267
  %v574 = vunpack.c.l.b16 %v268
  %v575 = vunpack.c.h.b16 %v268
  %v576 = vunpack.c.l.b16 %v269
  %v577 = vunpack.c.h.b16 %v269
  %v578 = vunpack.c.l.b16 %v270
  %v579 = vunpack.c.h.b16 %v270
  %v580 = vunpack.c.l.b16 %v271
  %v581 = vunpack.c.h.b16 %v271
  %v582 = vunpack.c.l.b16 %v272
  %v583 = vunpack.c.h.b16 %v272
  %v584 = vunpack.c.l.b16 %v273
  %v585 = vunpack.c.h.b16 %v273
  %v586 = vunpack.c.l.b16 %v274
  %v587 = vunpack.c.h.b16 %v274
  %v588 = vunpack.c.l.b16 %v275
  %v589 = vunpack.c.h.b16 %v275
  %v590 = vunpack.c.l.b16 %v276
  %v591 = vunpack.c.h.b16 %v276
  %v592 = vunpack.c.l.b16 %v277
  %v593 = vunpack.c.h.b16 %v277
  %v594 = vunpack.c.l.b16 %v278
  %v595 = vunpack.c.h.b16 %v278
  %v596 = vunpack.c.l.b16 %v279
  %v597 = vunpack.c.h.b16 %v279
  %v598 = vunpack.c.l.b16 %v280
  %v599 = vunpack.c.h.b16 %v280
  %v600 = vunpack.c.l.b16 %v281
  %v601 = vunpack.c.h.b16 %v281
  %v602 = vunpack.c.l.b16 %v282
  %v603 = vunpack.c.h.b16 %v282
  %v604 = vunpack.c.l.b16 %v283
  %v605 = vunpack.c.h.b16 %v283
  %v606 = vunpack.c.l.b16 %v284
  %v607 = vunpack.c.h.b16 %v284
  %v608 = vunpack.c.l.b16 %v285
  %v609 = vunpack.c.h.b16 %v285
  %v610 = vunpack.c.l.b16 %v286
  %v611 = vunpack.c.h.b16 %v286
  %v612 = vunpack.c.l.b16 %v287
  %v613 = vunpack.c.h.b16 %v287
  %v614 = vunpack.c.l.b16 %v288
  %v615 = vunpack.c.h.b16 %v288
  %v616 = vunpack.c.l.b16 %v289
  %v617 = vunpack.c.h.b16 %v289
  %v618 = vunpack.c.l.b16 %v290
  %v619 = vunpack.c.h.b16 %v290
  %v620 = vunpack.c.l.b16 %v291
  %v621 = vunpack.c.h.b16 %v291
  %v622 = vunpack.c.l.b16 %v292
  %v623 = vunpack.c.h.b16 %v292
  %v624 = vunpack.c.l.b16 %v293
  %v625 = vunpack.c.h.b16 %v293
  %v626 = vunpack.c.l.b16 %v294
  %v627 = vunpack.c.h.b16 %v294
  %v628 = vunpack.c.l.b16 %v295
  %v629 = vunpack.c.h.b16 %v295
  %v630 = vunpack.c.l.b16 %v296
  %v631 = vunpack.c.h.b16 %v296
  %v632 = vunpack.c.l.b16 %v297
  %v633 = vunpack.c.h.b16 %v297
  %v634 = vunpack.c.l.b16 %v298
  %v635 = vunpack.c.h.b16 %v298
  %v636 = vunpack.c.l.b16 %v299
  %v637 = vunpack.c.h.b16 %v299
  %v638 = vunpack.c.l.b16 %v300
  %v639 = vunpack.c.h.b16 %v300
  %v640 = vunpack.c.l.b16 %v301
  %v641 = vunpack.c.h.b16 %v301
  %v642 = vunpack.c.l.b16 %v302
  %v643 = vunpack.c.h.b16 %v302
  %v644 = vunpack.c.l.b16 %v303
  %v645 = vunpack.c.h.b16 %v303
  %v646 = vunpack.c.l.b16 %v304
  %v647 = vunpack.c.h.b16 %v304
  %v648 = vunpack.c.l.b16 %v305
  %v649 = vunpack.c.h.b16 %v305
  %v650 = vunpack.c.l.b16 %v306
  %v651 = vunpack.c.h.b16 %v306
  %v652 = vunpack.c.l.b16 %v307
  %v653 = vunpack.c.h.b16 %v307
  %v654 = vunpack.c.l.b16 %v308
  %v655 = vunpack.c.h.b16 %v308
  %v656 = vunpack.c.l.b16 %v309
  %v657 = vunpack.c.h.b16 %v309
  %v658 = vunpack.c.l.b16 %v310
  %v659 = vunpack.c.h.b16 %v310
  %v660 = vunpack.c.l.b16 %v311
  %v661 = vunpack.c.h.b16 %v311
  %v662 = vunpack.c.l.b16 %v312
  %v663 = vunpack.c.h.b16 %v312
  %v664 = vunpack.c.l.b16 %v313
  %v665 = vunpack.c.h.b16 %v313
  %v666 = vunpack.c.l.b16 %v314
  %v667 = vunpack.c.h.b16 %v314
  %v668 = vunpack.c.l.b16 %v315
  %v669 = vunpack.c.h.b16 %v315
  %v670 = vunpack.c.l.b16 %v316
  %v671 = vunpack.c.h.b16 %v316
  %v672 = vunpack.c.l.b16 %v317
  %v673 = vunpack.c.h.b16 %v317
  %v674 = vunpack.c.l.b16 %v318
  %v675 = vunpack.c.h.b16 %v318
  %v676 = vunpack.c.l.b16 %v319
  %v677 = vunpack.c.h.b16 %v319
  %v678 = vunpack.c.l.b16 %v320
  %v679 = vunpack.c.h.b16 %v320
  %v680 = vunpack.c.l.b16 %v321
  %v681 = vunpack.c.h.b16 %v321
  %v682 = vunpack.c.l.b16 %v322
  %v683 = vunpack.c.h.b16 %v322
  %v684 = vunpack.c.l.b16 %v323
  %v685 = vunpack.c.h.b16 %v323
  %v686 = vunpack.c.l.b16 %v324
  %v687 = vunpack.c.h.b16 %v324
  %v688 = vunpack.c.l.b16 %v325
  %v689 = vunpack.c.h.b16 %v325
  %v690 = vunpack.c.l.b16 %v326
  %v691 = vunpack.c.h.b16 %v326
  %v692 = vunpack.c.l.b16 %v327
  %v693 = vunpack.c.h.b16 %v327
  %v694 = vunpack.c.l.b16 %v328
  %v695 = vunpack.c.h.b16 %v328
  %v696 = vunpack.c.l.b16 %v329
  %v697 = vunpack.c.h.b16 %v329
  %v698 = vunpack.c.l.b16 %v330
  %v699 = vunpack.c.h.b16 %v330
  %v700 = vunpack.c.l.b16 %v331
  %v701 = vunpack.c.h.b16 %v331
  %v702 = vunpack.c.l.b16 %v332
  %v703 = vunpack.c.h.b16 %v332
  %v704 = vunpack.c.l.b16 %v333
  %v705 = vunpack.c.h.b16 %v333
  %v706 = vunpack.c.l.b16 %v334
  %v707 = vunpack.c.h.b16 %v334
  %v708 = vunpack.c.l.b16 %v335
  %v709 = vunpack.c.h.b16 %v335
  %v710 = vunpack.c.l.b16 %v336
  %v711 = vunpack.c.h.b16 %v336
  %v712 = vunpack.c.l.b16 %v337
  %v713 = vunpack.c.h.b16 %v337
  %v714 = vunpack.c.l.b16 %v338
  %v715 = vunpack.c.h.b16 %v338
  %v716 = vunpack.c.l.b16 %v339
  %v717 = vunpack.c.h.b16 %v339
  %v718 = vunpack.c.l.b16 %v340
  %v719 = vunpack.c.h.b16 %v340
  %v720 = vunpack.c.l.b16 %v341
  %v721 = vunpack.c.h.b16 %v341
  %v722 = vunpack.c.l.b16 %v342
  %v723 = vunpack.c.h.b16 %v342
  %v724 = vunpack.c.l.b16 %v343
  %v725 = vunpack.c.h.b16 %v343
  %v726 = vunpack.c.l.b16 %v344
  %v727 = vunpack.c.h.b16 %v344
  %v728 = vunpack.c.l.b16 %v345
  %v729 = vunpack.c.h.b16 %v345
  %v730 = vpack.c.b16 %v478, %v474
  %v731 = vpack.c.b16 %v479, %v475
  %v732 = vpack.c.b16 %v480, %v476
  %v733 = vpack.c.b16 %v481, %v477
  %v734 = vpack.c.b16 %v486, %v482
  %v735 = vpack.c.b16 %v487, %v483
  %v736 = vpack.c.b16 %v488, %v484
  %v737 = vpack.c.b16 %v489, %v485
  %v738 = vpack.c.b16 %v494, %v490
  %v739 = vpack.c.b16 %v495, %v491
  %v740 = vpack.c.b16 %v496, %v492
  %v741 = vpack.c.b16 %v497, %v493
  %v742 = vpack.c.b16 %v502, %v498
  %v743 = vpack.c.b16 %v503, %v499
  %v744 = vpack.c.b16 %v504, %v500
  %v745 = vpack.c.b16 %v505, %v501
  %v746 = vpack.c.b16 %v510, %v506
  %v747 = vpack.c.b16 %v511, %v507
  %v748 = vpack.c.b16 %v512, %v508
  %v749 = vpack.c.b16 %v513, %v509
  %v750 = vpack.c.b16 %v518, %v514
  %v751 = vpack.c.b16 %v519, %v515
  %v752 = vpack.c.b16 %v520, %v516
  %v753 = vpack.c.b16 %v521, %v517
  %v754 = vpack.c.b16 %v526, %v522
  %v755 = vpack.c.b16 %v527, %v523
  %v756 = vpack.c.b16 %v528, %v524
  %v757 = vpack.c.b16 %v529, %v525
  %v758 = vpack.c.b16 %v534, %v530
  %v759 = vpack.c.b16 %v535, %v531
  %v760 = vpack.c.b16 %v536, %v532
  %v761 = vpack.c.b16 %v537, %v533
  %v762 = vpack.c.b16 %v542, %v538
  %v763 = vpack.c.b16 %v543, %v539
  %v764 = vpack.c.b16 %v544, %v540
  %v765 = vpack.c.b16 %v545, %v541
  %v766 = vpack.c.b16 %v550, %v546
  %v767 = vpack.c.b16 %v551, %v547
  %v768 = vpack.c.b16 %v552, %v548
  %v769 = vpack.c.b16 %v553, %v549
  %v770 = vpack.c.b16 %v558, %v554
  %v771 = vpack.c.b16 %v559, %v555
  %v772 = vpack.c.b16 %v560, %v556
  %v773 = vpack.c.b16 %v561, %v557
  %v774 = vpack.c.b16 %v566, %v562
  %v775 = vpack.c.b16 %v567, %v563
  %v776 = vpack.c.b16 %v568, %v564
  %v777 = vpack.c.b16 %v569, %v565
  %v778 = vpack.c.b16 %v574, %v570
  %v779 = vpack.c.b16 %v575, %v571
  %v780 = vpack.c.b16 %v576, %v572
  %v781 = vpack.c.b16 %v577, %v573
  %v782 = vpack.c.b16 %v582, %v578
  %v783 = vpack.c.b16 %v583, %v579
  %v784 = vpack.c.b16 %v584, %v580
  %v785 = vpack.c.b16 %v585, %v581
  %v786 = vpack.c.b16 %v590, %v586
  %v787 = vpack.c.b16 %v591, %v587
  %v788 = vpack.c.b16 %v592, %v588
  %v789 = vpack.c.b16 %v593, %v589
  %v790 = vpack.c.b16 %v598, %v594
  %v791 = vpack.c.b16 %v599, %v595
  %v792 = vpack.c.b16 %v600, %v596
  %v793 = vpack.c.b16 %v601, %v597
  %v794 = vpack.c.b16 %v606, %v602
  %v795 = vpack.c.b16 %v607, %v603
  %v796 = vpack.c.b16 %v608, %v604
  %v797 = vpack.c.b16 %v609, %v605
  %v798 = vpack.c.b16 %v614, %v610
  %v799 = vpack.c.b16 %v615, %v611
  %v800 = vpack.c.b16 %v616, %v612
  %v801 = vpack.c.b16 %v617, %v613
  %v802 = vpack.c.b16 %v622, %v618
  %v803 = vpack.c.b16 %v623, %v619
  %v804 = vpack.c.b16 %v624, %v620
  %v805 = vpack.c.b16 %v625, %v621
  %v806 = vpack.c.b16 %v630, %v626
  %v807 = vpack.c.b16 %v631, %v627
  %v808 = vpack.c.b16 %v632, %v628
  %v809 = vpack.c.b16 %v633, %v629
  %v810 = vpack.c.b16 %v638, %v634
  %v811 = vpack.c.b16 %v639, %v635
  %v812 = vpack.c.b16 %v640, %v636
  %v813 = vpack.c.b16 %v641, %v637
  %v814 = vpack.c.b16 %v646, %v642
  %v815 = vpack.c.b16 %v647, %v643
  %v816 = vpack.c.b16 %v648, %v644
  %v817 = vpack.c.b16 %v649, %v645
  %v818 = vpack.c.b16 %v654, %v650
  %v819 = vpack.c.b16 %v655, %v651
  %v820 = vpack.c.b16 %v656, %v652
  %v821 = vpack.c.b16 %v657, %v653
  %v822 = vpack.c.b16 %v662, %v658
  %v823 = vpack.c.b16 %v663, %v659
  %v824 = vpack.c.b16 %v664, %v660
  %v825 = vpack.c.b16 %v665, %v661
  %v826 = vpack.c.b16 %v670, %v666
  %v827 = vpack.c.b16 %v671, %v667
  %v828 = vpack.c.b16 %v672, %v668
  %v829 = vpack.c.b16 %v673, %v669
  %v830 = vpack.c.b16 %v678, %v674
  %v831 = vpack.c.b16 %v679, %v675
  %v832 = vpack.c.b16 %v680, %v676
  %v833 = vpack.c.b16 %v681, %v677
  %v834 = vpack.c.b16 %v686, %v682
  %v835 = vpack.c.b16 %v687, %v683
  %v836 = vpack.c.b16 %v688, %v684
  %v837 = vpack.c.b16 %v689, %v685
  %v838 = vpack.c.b16 %v694, %v690
  %v839 = vpack.c.b16 %v695, %v691
  %v840 = vpack.c.b16 %v696, %v692
  %v841 = vpack.c.b16 %v697, %v693
  %v842 = vpack.c.b16 %v702, %v698
  %v843 = vpack.c.b16 %v703, %v699
  %v844 = vpack.c.b16 %v704, %v700
  %v845 = vpack.c.b16 %v705, %v701
  %v846 = vpack.c.b16 %v710, %v706
  %v847 = vpack.c.b16 %v711, %v707
  %v848 = vpack.c.b16 %v712, %v708
  %v849 = vpack.c.b16 %v713, %v709
  %v850 = vpack.c.b16 %v718, %v714
  %v851 = vpack.c.b16 %v719, %v715
  %v852 = vpack.c.b16 %v720, %v716
  %v853 = vpack.c.b16 %v721, %v717
  %v854 = vpack.c.b16 %v726, %v722
  %v855 = vpack.c.b16 %v727, %v723
  %v856 = vpack.c.b16 %v728, %v724
  %v857 = vpack.c.b16 %v729, %v725
  %v1050 = vunpack.c.l.b16 %v90
  %v1051 = vunpack.c.l.b16 %v91
  %v1052 = vunpack.c.l.b16 %v92
  %v1053 = vunpack.c.l.b16 %v93
  %v1054 = vunpack.c.l.b16 %v94
  %v1055 = vunpack.c.l.b16 %v95
  %v1056 = vunpack.c.l.b16 %v96
  %v1057 = vunpack.c.l.b16 %v97
  %v1058 = vunpack.c.l.b16 %v98
  %v1059 = vunpack.c.l.b16 %v99
  %v1060 = vunpack.c.l.b16 %v100
  %v1061 = vunpack.c.l.b16 %v101
  %v1062 = vunpack.c.l.b16 %v102
  %v1063 = vunpack.c.l.b16 %v103
  %v1064 = vunpack.c.l.b16 %v104
  %v1065 = vunpack.c.l.b16 %v105
  %v1066 = vunpack.c.l.b16 %v106
  %v1067 = vunpack.c.l.b16 %v107
  %v1068 = vunpack.c.l.b16 %v108
  %v1069 = vunpack.c.l.b16 %v109
  %v1070 = vunpack.c.l.b16 %v110
  %v1071 = vunpack.c.l.b16 %v111
  %v1072 = vunpack.c.l.b16 %v112
  %v1073 = vunpack.c.l.b16 %v113
  %v1074 = vunpack.c.l.b16 %v114
  %v1075 = vunpack.c.l.b16 %v115
  %v1076 = vunpack.c.l.b16 %v116
  %v1077 = vunpack.c.l.b16 %v117
  %v1078 = vunpack.c.l.b16 %v118
  %v1079 = vunpack.c.l.b16 %v119
  %v1080 = vunpack.c.l.b16 %v120
  %v1081 = vunpack.c.l.b16 %v121
  %v1082 = vunpack.c.l.b16 %v122
  %v1083 = vunpack.c.l.b16 %v123
  %v1084 = vunpack.c.l.b16 %v124
  %v1085 = vunpack.c.l.b16 %v125
  %v1086 = vunpack.c.l.b16 %v126
  %v1087 = vunpack.c.l.b16 %v127
  %v1088 = vunpack.c.l.b16 %v128
  %v1089 = vunpack.c.l.b16 %v129
  %v1090 = vunpack.c.l.b16 %v130
  %v1091 = vunpack.c.l.b16 %v131
  %v1092 = vunpack.c.l.b16 %v132
  %v1093 = vunpack.c.l.b16 %v133
  %v1094 = vunpack.c.l.b16 %v134
  %v1095 = vunpack.c.l.b16 %v135
  %v1096 = vunpack.c.l.b16 %v136
  %v1097 = vunpack.c.l.b16 %v137
  %v1098 = vunpack.c.l.b16 %v138
  %v1099 = vunpack.c.l.b16 %v139
  %v1100 = vunpack.c.l.b16 %v140
  %v1101 = vunpack.c.l.b16 %v141
  %v1102 = vunpack.c.l.b16 %v142
  %v1103 = vunpack.c.l.b16 %v143
  %v1104 = vunpack.c.l.b16 %v144
  %v1105 = vunpack.c.l.b16 %v145
  %v1106 = vunpack.c.l.b16 %v146
  %v1107 = vunpack.c.l.b16 %v147
  %v1108 = vunpack.c.l.b16 %v148
  %v1109 = vunpack.c.l.b16 %v149
  %v1110 = vunpack.c.l.b16 %v150
  %v1111 = vunpack.c.l.b16 %v151
  %v1112 = vunpack.c.l.b16 %v152
  %v1113 = vunpack.c.l.b16 %v153
  %v1114 = vpack.c.b16 %v1051, %v1050
  %v1115 = vpack.c.b16 %v1053, %v1052
  %v1116 = vpack.c.b16 %v1055, %v1054
  %v1117 = vpack.c.b16 %v1057, %v1056
  %v1118 = vpack.c.b16 %v1059, %v1058
  %v1119 = vpack.c.b16 %v1061, %v1060
  %v1120 = vpack.c.b16 %v1063, %v1062
  %v1121 = vpack.c.b16 %v1065, %v1064
  %v1122 = vpack.c.b16 %v1067, %v1066
  %v1123 = vpack.c.b16 %v1069, %v1068
  %v1124 = vpack.c.b16 %v1071, %v1070
  %v1125 = vpack.c.b16 %v1073, %v1072
  %v1126 = vpack.c.b16 %v1075, %v1074
  %v1127 = vpack.c.b16 %v1077, %v1076
  %v1128 = vpack.c.b16 %v1079, %v1078
  %v1129 = vpack.c.b16 %v1081, %v1080
  %v1130 = vpack.c.b16 %v1083, %v1082
  %v1131 = vpack.c.b16 %v1085, %v1084
  %v1132 = vpack.c.b16 %v1087, %v1086
  %v1133 = vpack.c.b16 %v1089, %v1088
  %v1134 = vpack.c.b16 %v1091, %v1090
  %v1135 = vpack.c.b16 %v1093, %v1092
  %v1136 = vpack.c.b16 %v1095, %v1094
  %v1137 = vpack.c.b16 %v1097, %v1096
  %v1138 = vpack.c.b16 %v1099, %v1098
  %v1139 = vpack.c.b16 %v1101, %v1100
  %v1140 = vpack.c.b16 %v1103, %v1102
  %v1141 = vpack.c.b16 %v1105, %v1104
  %v1142 = vpack.c.b16 %v1107, %v1106
  %v1143 = vpack.c.b16 %v1109, %v1108
  %v1144 = vpack.c.b16 %v1111, %v1110
  %v1145 = vpack.c.b16 %v1113, %v1112
  %1178 = vmatpush.bf16.msra.mxu0 %v1121
  %1179 = vmatpush.bf16.msra.mxu0 %v1120
  %1180 = vmatpush.bf16.msra.mxu0 %v1119
  %1181 = vmatpush.bf16.msra.mxu0 %v1118
  %1182 = vmatpush.bf16.msra.mxu0 %v1117
  %1183 = vmatpush.bf16.msra.mxu0 %v1116
  %1184 = vmatpush.bf16.msra.mxu0 %v1115
  %1185 = vmatpush.bf16.msra.mxu0 %v1114
  %1186 = vmatmul.bf16.gmra.mxu0 %v730
  %v1187 = vpop.f32.mrf.mxu0
  %v1188 = vadd.f32 0.0, %v1187
  %v1189 = vpop.f32.mrf.mxu0
  %v1190 = vadd.f32 0.0, %v1189
  %1191 = vmatmul.bf16.gmra.mxu0 %v734
  %v1192 = vpop.f32.mrf.mxu0
  %v1193 = vadd.f32 0.0, %v1192
  %v1194 = vpop.f32.mrf.mxu0
  %v1195 = vadd.f32 0.0, %v1194
  %1196 = vmatmul.bf16.gmra.mxu0 %v738
  %v1197 = vpop.f32.mrf.mxu0
  %v1198 = vadd.f32 0.0, %v1197
  %v1199 = vpop.f32.mrf.mxu0
  %v1200 = vadd.f32 0.0, %v1199
  %1201 = vmatmul.bf16.gmra.mxu0 %v742
  %v1202 = vpop.f32.mrf.mxu0
  %v1203 = vadd.f32 0.0, %v1202
  %v1204 = vpop.f32.mrf.mxu0
  %v1205 = vadd.f32 0.0, %v1204
  %1206 = vmatmul.bf16.gmra.mxu0 %v746
  %v1207 = vpop.f32.mrf.mxu0
  %v1208 = vadd.f32 0.0, %v1207
  %v1209 = vpop.f32.mrf.mxu0
  %v1210 = vadd.f32 0.0, %v1209
  %1211 = vmatmul.bf16.gmra.mxu0 %v750
  %v1212 = vpop.f32.mrf.mxu0
  %v1213 = vadd.f32 0.0, %v1212
  %v1214 = vpop.f32.mrf.mxu0
  %v1215 = vadd.f32 0.0, %v1214
  %1216 = vmatmul.bf16.gmra.mxu0 %v754
  %v1217 = vpop.f32.mrf.mxu0
  %v1218 = vadd.f32 0.0, %v1217
  %v1219 = vpop.f32.mrf.mxu0
  %v1220 = vadd.f32 0.0, %v1219
  %1221 = vmatmul.bf16.gmra.mxu0 %v758
  %v1222 = vpop.f32.mrf.mxu0
  %v1223 = vadd.f32 0.0, %v1222
  %v1224 = vpop.f32.mrf.mxu0
  %v1225 = vadd.f32 0.0, %v1224
  %1226 = vmatmul.bf16.gmra.mxu0 %v762
  %v1227 = vpop.f32.mrf.mxu0
  %v1228 = vadd.f32 0.0, %v1227
  %v1229 = vpop.f32.mrf.mxu0
  %v1230 = vadd.f32 0.0, %v1229
  %1231 = vmatmul.bf16.gmra.mxu0 %v766
  %v1232 = vpop.f32.mrf.mxu0
  %v1233 = vadd.f32 0.0, %v1232
  %v1234 = vpop.f32.mrf.mxu0
  %v1235 = vadd.f32 0.0, %v1234
  %1236 = vmatmul.bf16.gmra.mxu0 %v770
  %v1237 = vpop.f32.mrf.mxu0
  %v1238 = vadd.f32 0.0, %v1237
  %v1239 = vpop.f32.mrf.mxu0
  %v1240 = vadd.f32 0.0, %v1239
  %1241 = vmatmul.bf16.gmra.mxu0 %v774
  %v1242 = vpop.f32.mrf.mxu0
  %v1243 = vadd.f32 0.0, %v1242
  %v1244 = vpop.f32.mrf.mxu0
  %v1245 = vadd.f32 0.0, %v1244
  %1246 = vmatmul.bf16.gmra.mxu0 %v778
  %v1247 = vpop.f32.mrf.mxu0
  %v1248 = vadd.f32 0.0, %v1247
  %v1249 = vpop.f32.mrf.mxu0
  %v1250 = vadd.f32 0.0, %v1249
  %1251 = vmatmul.bf16.gmra.mxu0 %v782
  %v1252 = vpop.f32.mrf.mxu0
  %v1253 = vadd.f32 0.0, %v1252
  %v1254 = vpop.f32.mrf.mxu0
  %v1255 = vadd.f32 0.0, %v1254
  %1256 = vmatmul.bf16.gmra.mxu0 %v786
  %v1257 = vpop.f32.mrf.mxu0
  %v1258 = vadd.f32 0.0, %v1257
  %v1259 = vpop.f32.mrf.mxu0
  %v1260 = vadd.f32 0.0, %v1259
  %1261 = vmatmul.bf16.gmra.mxu0 %v790
  %v1262 = vpop.f32.mrf.mxu0
  %v1263 = vadd.f32 0.0, %v1262
  %v1264 = vpop.f32.mrf.mxu0
  %v1265 = vadd.f32 0.0, %v1264
  %1266 = vmatmul.bf16.gmra.mxu0 %v794
  %v1267 = vpop.f32.mrf.mxu0
  %v1268 = vadd.f32 0.0, %v1267
  %v1269 = vpop.f32.mrf.mxu0
  %v1270 = vadd.f32 0.0, %v1269
  %1271 = vmatmul.bf16.gmra.mxu0 %v798
  %v1272 = vpop.f32.mrf.mxu0
  %v1273 = vadd.f32 0.0, %v1272
  %v1274 = vpop.f32.mrf.mxu0
  %v1275 = vadd.f32 0.0, %v1274
  %1276 = vmatmul.bf16.gmra.mxu0 %v802
  %v1277 = vpop.f32.mrf.mxu0
  %v1278 = vadd.f32 0.0, %v1277
  %v1279 = vpop.f32.mrf.mxu0
  %v1280 = vadd.f32 0.0, %v1279
  %1281 = vmatmul.bf16.gmra.mxu0 %v806
  %v1282 = vpop.f32.mrf.mxu0
  %v1283 = vadd.f32 0.0, %v1282
  %v1284 = vpop.f32.mrf.mxu0
  %v1285 = vadd.f32 0.0, %v1284
  %1286 = vmatmul.bf16.gmra.mxu0 %v810
  %v1287 = vpop.f32.mrf.mxu0
  %v1288 = vadd.f32 0.0, %v1287
  %v1289 = vpop.f32.mrf.mxu0
  %v1290 = vadd.f32 0.0, %v1289
  %1291 = vmatmul.bf16.gmra.mxu0 %v814
  %v1292 = vpop.f32.mrf.mxu0
  %v1293 = vadd.f32 0.0, %v1292
  %v1294 = vpop.f32.mrf.mxu0
  %v1295 = vadd.f32 0.0, %v1294
  %1296 = vmatmul.bf16.gmra.mxu0 %v818
  %v1297 = vpop.f32.mrf.mxu0
  %v1298 = vadd.f32 0.0, %v1297
  %v1299 = vpop.f32.mrf.mxu0
  %v1300 = vadd.f32 0.0, %v1299
  %1301 = vmatmul.bf16.gmra.mxu0 %v822
  %v1302 = vpop.f32.mrf.mxu0
  %v1303 = vadd.f32 0.0, %v1302
  %v1304 = vpop.f32.mrf.mxu0
  %v1305 = vadd.f32 0.0, %v1304
  %1306 = vmatmul.bf16.gmra.mxu0 %v826
  %v1307 = vpop.f32.mrf.mxu0
  %v1308 = vadd.f32 0.0, %v1307
  %v1309 = vpop.f32.mrf.mxu0
  %v1310 = vadd.f32 0.0, %v1309
  %1311 = vmatmul.bf16.gmra.mxu0 %v830
  %v1312 = vpop.f32.mrf.mxu0
  %v1313 = vadd.f32 0.0, %v1312
  %v1314 = vpop.f32.mrf.mxu0
  %v1315 = vadd.f32 0.0, %v1314
  %1316 = vmatmul.bf16.gmra.mxu0 %v834
  %v1317 = vpop.f32.mrf.mxu0
  %v1318 = vadd.f32 0.0, %v1317
  %v1319 = vpop.f32.mrf.mxu0
  %v1320 = vadd.f32 0.0, %v1319
  %1321 = vmatmul.bf16.gmra.mxu0 %v838
  %v1322 = vpop.f32.mrf.mxu0
  %v1323 = vadd.f32 0.0, %v1322
  %v1324 = vpop.f32.mrf.mxu0
  %v1325 = vadd.f32 0.0, %v1324
  %1326 = vmatmul.bf16.gmra.mxu0 %v842
  %v1327 = vpop.f32.mrf.mxu0
  %v1328 = vadd.f32 0.0, %v1327
  %v1329 = vpop.f32.mrf.mxu0
  %v1330 = vadd.f32 0.0, %v1329
  %1331 = vmatmul.bf16.gmra.mxu0 %v846
  %v1332 = vpop.f32.mrf.mxu0
  %v1333 = vadd.f32 0.0, %v1332
  %v1334 = vpop.f32.mrf.mxu0
  %v1335 = vadd.f32 0.0, %v1334
  %1336 = vmatmul.bf16.gmra.mxu0 %v850
  %v1337 = vpop.f32.mrf.mxu0
  %v1338 = vadd.f32 0.0, %v1337
  %v1339 = vpop.f32.mrf.mxu0
  %v1340 = vadd.f32 0.0, %v1339
  %1341 = vmatmul.bf16.gmra.mxu0 %v854
  %v1342 = vpop.f32.mrf.mxu0
  %v1343 = vadd.f32 0.0, %v1342
  %v1344 = vpop.f32.mrf.mxu0
  %v1345 = vadd.f32 0.0, %v1344
  %1346 = vdwg.mxu0
  %1347 = vmatpush.bf16.msra.mxu0 %v1129
  %1348 = vmatpush.bf16.msra.mxu0 %v1128
  %1349 = vmatpush.bf16.msra.mxu0 %v1127
  %1350 = vmatpush.bf16.msra.mxu0 %v1126
  %1351 = vmatpush.bf16.msra.mxu0 %v1125
  %1352 = vmatpush.bf16.msra.mxu0 %v1124
  %1353 = vmatpush.bf16.msra.mxu0 %v1123
  %1354 = vmatpush.bf16.msra.mxu0 %v1122
  %1355 = vmatmul.bf16.gmra.mxu0 %v731
  %v1356 = vpop.f32.mrf.mxu0
  %v1357 = vadd.f32 %v1188, %v1356
  %v1358 = vpop.f32.mrf.mxu0
  %v1359 = vadd.f32 %v1190, %v1358
  %1360 = vmatmul.bf16.gmra.mxu0 %v735
  %v1361 = vpop.f32.mrf.mxu0
  %v1362 = vadd.f32 %v1193, %v1361
  %v1363 = vpop.f32.mrf.mxu0
  %v1364 = vadd.f32 %v1195, %v1363
  %1365 = vmatmul.bf16.gmra.mxu0 %v739
  %v1366 = vpop.f32.mrf.mxu0
  %v1367 = vadd.f32 %v1198, %v1366
  %v1368 = vpop.f32.mrf.mxu0
  %v1369 = vadd.f32 %v1200, %v1368
  %1370 = vmatmul.bf16.gmra.mxu0 %v743
  %v1371 = vpop.f32.mrf.mxu0
  %v1372 = vadd.f32 %v1203, %v1371
  %v1373 = vpop.f32.mrf.mxu0
  %v1374 = vadd.f32 %v1205, %v1373
  %1375 = vmatmul.bf16.gmra.mxu0 %v747
  %v1376 = vpop.f32.mrf.mxu0
  %v1377 = vadd.f32 %v1208, %v1376
  %v1378 = vpop.f32.mrf.mxu0
  %v1379 = vadd.f32 %v1210, %v1378
  %1380 = vmatmul.bf16.gmra.mxu0 %v751
  %v1381 = vpop.f32.mrf.mxu0
  %v1382 = vadd.f32 %v1213, %v1381
  %v1383 = vpop.f32.mrf.mxu0
  %v1384 = vadd.f32 %v1215, %v1383
  %1385 = vmatmul.bf16.gmra.mxu0 %v755
  %v1386 = vpop.f32.mrf.mxu0
  %v1387 = vadd.f32 %v1218, %v1386
  %v1388 = vpop.f32.mrf.mxu0
  %v1389 = vadd.f32 %v1220, %v1388
  %1390 = vmatmul.bf16.gmra.mxu0 %v759
  %v1391 = vpop.f32.mrf.mxu0
  %v1392 = vadd.f32 %v1223, %v1391
  %v1393 = vpop.f32.mrf.mxu0
  %v1394 = vadd.f32 %v1225, %v1393
  %1395 = vmatmul.bf16.gmra.mxu0 %v763
  %v1396 = vpop.f32.mrf.mxu0
  %v1397 = vadd.f32 %v1228, %v1396
  %v1398 = vpop.f32.mrf.mxu0
  %v1399 = vadd.f32 %v1230, %v1398
  %1400 = vmatmul.bf16.gmra.mxu0 %v767
  %v1401 = vpop.f32.mrf.mxu0
  %v1402 = vadd.f32 %v1233, %v1401
  %v1403 = vpop.f32.mrf.mxu0
  %v1404 = vadd.f32 %v1235, %v1403
  %1405 = vmatmul.bf16.gmra.mxu0 %v771
  %v1406 = vpop.f32.mrf.mxu0
  %v1407 = vadd.f32 %v1238, %v1406
  %v1408 = vpop.f32.mrf.mxu0
  %v1409 = vadd.f32 %v1240, %v1408
  %1410 = vmatmul.bf16.gmra.mxu0 %v775
  %v1411 = vpop.f32.mrf.mxu0
  %v1412 = vadd.f32 %v1243, %v1411
  %v1413 = vpop.f32.mrf.mxu0
  %v1414 = vadd.f32 %v1245, %v1413
  %1415 = vmatmul.bf16.gmra.mxu0 %v779
  %v1416 = vpop.f32.mrf.mxu0
  %v1417 = vadd.f32 %v1248, %v1416
  %v1418 = vpop.f32.mrf.mxu0
  %v1419 = vadd.f32 %v1250, %v1418
  %1420 = vmatmul.bf16.gmra.mxu0 %v783
  %v1421 = vpop.f32.mrf.mxu0
  %v1422 = vadd.f32 %v1253, %v1421
  %v1423 = vpop.f32.mrf.mxu0
  %v1424 = vadd.f32 %v1255, %v1423
  %1425 = vmatmul.bf16.gmra.mxu0 %v787
  %v1426 = vpop.f32.mrf.mxu0
  %v1427 = vadd.f32 %v1258, %v1426
  %v1428 = vpop.f32.mrf.mxu0
  %v1429 = vadd.f32 %v1260, %v1428
  %1430 = vmatmul.bf16.gmra.mxu0 %v791
  %v1431 = vpop.f32.mrf.mxu0
  %v1432 = vadd.f32 %v1263, %v1431
  %v1433 = vpop.f32.mrf.mxu0
  %v1434 = vadd.f32 %v1265, %v1433
  %1435 = vmatmul.bf16.gmra.mxu0 %v795
  %v1436 = vpop.f32.mrf.mxu0
  %v1437 = vadd.f32 %v1268, %v1436
  %v1438 = vpop.f32.mrf.mxu0
  %v1439 = vadd.f32 %v1270, %v1438
  %1440 = vmatmul.bf16.gmra.mxu0 %v799
  %v1441 = vpop.f32.mrf.mxu0
  %v1442 = vadd.f32 %v1273, %v1441
  %v1443 = vpop.f32.mrf.mxu0
  %v1444 = vadd.f32 %v1275, %v1443
  %1445 = vmatmul.bf16.gmra.mxu0 %v803
  %v1446 = vpop.f32.mrf.mxu0
  %v1447 = vadd.f32 %v1278, %v1446
  %v1448 = vpop.f32.mrf.mxu0
  %v1449 = vadd.f32 %v1280, %v1448
  %1450 = vmatmul.bf16.gmra.mxu0 %v807
  %v1451 = vpop.f32.mrf.mxu0
  %v1452 = vadd.f32 %v1283, %v1451
  %v1453 = vpop.f32.mrf.mxu0
  %v1454 = vadd.f32 %v1285, %v1453
  %1455 = vmatmul.bf16.gmra.mxu0 %v811
  %v1456 = vpop.f32.mrf.mxu0
  %v1457 = vadd.f32 %v1288, %v1456
  %v1458 = vpop.f32.mrf.mxu0
  %v1459 = vadd.f32 %v1290, %v1458
  %1460 = vmatmul.bf16.gmra.mxu0 %v815
  %v1461 = vpop.f32.mrf.mxu0
  %v1462 = vadd.f32 %v1293, %v1461
  %v1463 = vpop.f32.mrf.mxu0
  %v1464 = vadd.f32 %v1295, %v1463
  %1465 = vmatmul.bf16.gmra.mxu0 %v819
  %v1466 = vpop.f32.mrf.mxu0
  %v1467 = vadd.f32 %v1298, %v1466
  %v1468 = vpop.f32.mrf.mxu0
  %v1469 = vadd.f32 %v1300, %v1468
  %1470 = vmatmul.bf16.gmra.mxu0 %v823
  %v1471 = vpop.f32.mrf.mxu0
  %v1472 = vadd.f32 %v1303, %v1471
  %v1473 = vpop.f32.mrf.mxu0
  %v1474 = vadd.f32 %v1305, %v1473
  %1475 = vmatmul.bf16.gmra.mxu0 %v827
  %v1476 = vpop.f32.mrf.mxu0
  %v1477 = vadd.f32 %v1308, %v1476
  %v1478 = vpop.f32.mrf.mxu0
  %v1479 = vadd.f32 %v1310, %v1478
  %1480 = vmatmul.bf16.gmra.mxu0 %v831
  %v1481 = vpop.f32.mrf.mxu0
  %v1482 = vadd.f32 %v1313, %v1481
  %v1483 = vpop.f32.mrf.mxu0
  %v1484 = vadd.f32 %v1315, %v1483
  %1485 = vmatmul.bf16.gmra.mxu0 %v835
  %v1486 = vpop.f32.mrf.mxu0
  %v1487 = vadd.f32 %v1318, %v1486
  %v1488 = vpop.f32.mrf.mxu0
  %v1489 = vadd.f32 %v1320, %v1488
  %1490 = vmatmul.bf16.gmra.mxu0 %v839
  %v1491 = vpop.f32.mrf.mxu0
  %v1492 = vadd.f32 %v1323, %v1491
  %v1493 = vpop.f32.mrf.mxu0
  %v1494 = vadd.f32 %v1325, %v1493
  %1495 = vmatmul.bf16.gmra.mxu0 %v843
  %v1496 = vpop.f32.mrf.mxu0
  %v1497 = vadd.f32 %v1328, %v1496
  %v1498 = vpop.f32.mrf.mxu0
  %v1499 = vadd.f32 %v1330, %v1498
  %1500 = vmatmul.bf16.gmra.mxu0 %v847
  %v1501 = vpop.f32.mrf.mxu0
  %v1502 = vadd.f32 %v1333, %v1501
  %v1503 = vpop.f32.mrf.mxu0
  %v1504 = vadd.f32 %v1335, %v1503
  %1505 = vmatmul.bf16.gmra.mxu0 %v851
  %v1506 = vpop.f32.mrf.mxu0
  %v1507 = vadd.f32 %v1338, %v1506
  %v1508 = vpop.f32.mrf.mxu0
  %v1509 = vadd.f32 %v1340, %v1508
  %1510 = vmatmul.bf16.gmra.mxu0 %v855
  %v1511 = vpop.f32.mrf.mxu0
  %v1512 = vadd.f32 %v1343, %v1511
  %v1513 = vpop.f32.mrf.mxu0
  %v1514 = vadd.f32 %v1345, %v1513
  %1515 = vdwg.mxu0
  %1516 = vmatpush.bf16.msra.mxu0 %v1137
  %1517 = vmatpush.bf16.msra.mxu0 %v1136
  %1518 = vmatpush.bf16.msra.mxu0 %v1135
  %1519 = vmatpush.bf16.msra.mxu0 %v1134
  %1520 = vmatpush.bf16.msra.mxu0 %v1133
  %1521 = vmatpush.bf16.msra.mxu0 %v1132
  %1522 = vmatpush.bf16.msra.mxu0 %v1131
  %1523 = vmatpush.bf16.msra.mxu0 %v1130
  %1524 = vmatmul.bf16.gmra.mxu0 %v732
  %v1525 = vpop.f32.mrf.mxu0
  %v1526 = vadd.f32 %v1357, %v1525
  %v1527 = vpop.f32.mrf.mxu0
  %v1528 = vadd.f32 %v1359, %v1527
  %1529 = vmatmul.bf16.gmra.mxu0 %v736
  %v1530 = vpop.f32.mrf.mxu0
  %v1531 = vadd.f32 %v1362, %v1530
  %v1532 = vpop.f32.mrf.mxu0
  %v1533 = vadd.f32 %v1364, %v1532
  %1534 = vmatmul.bf16.gmra.mxu0 %v740
  %v1535 = vpop.f32.mrf.mxu0
  %v1536 = vadd.f32 %v1367, %v1535
  %v1537 = vpop.f32.mrf.mxu0
  %v1538 = vadd.f32 %v1369, %v1537
  %1539 = vmatmul.bf16.gmra.mxu0 %v744
  %v1540 = vpop.f32.mrf.mxu0
  %v1541 = vadd.f32 %v1372, %v1540
  %v1542 = vpop.f32.mrf.mxu0
  %v1543 = vadd.f32 %v1374, %v1542
  %1544 = vmatmul.bf16.gmra.mxu0 %v748
  %v1545 = vpop.f32.mrf.mxu0
  %v1546 = vadd.f32 %v1377, %v1545
  %v1547 = vpop.f32.mrf.mxu0
  %v1548 = vadd.f32 %v1379, %v1547
  %1549 = vmatmul.bf16.gmra.mxu0 %v752
  %v1550 = vpop.f32.mrf.mxu0
  %v1551 = vadd.f32 %v1382, %v1550
  %v1552 = vpop.f32.mrf.mxu0
  %v1553 = vadd.f32 %v1384, %v1552
  %1554 = vmatmul.bf16.gmra.mxu0 %v756
  %v1555 = vpop.f32.mrf.mxu0
  %v1556 = vadd.f32 %v1387, %v1555
  %v1557 = vpop.f32.mrf.mxu0
  %v1558 = vadd.f32 %v1389, %v1557
  %1559 = vmatmul.bf16.gmra.mxu0 %v760
  %v1560 = vpop.f32.mrf.mxu0
  %v1561 = vadd.f32 %v1392, %v1560
  %v1562 = vpop.f32.mrf.mxu0
  %v1563 = vadd.f32 %v1394, %v1562
  %1564 = vmatmul.bf16.gmra.mxu0 %v764
  %v1565 = vpop.f32.mrf.mxu0
  %v1566 = vadd.f32 %v1397, %v1565
  %v1567 = vpop.f32.mrf.mxu0
  %v1568 = vadd.f32 %v1399, %v1567
  %1569 = vmatmul.bf16.gmra.mxu0 %v768
  %v1570 = vpop.f32.mrf.mxu0
  %v1571 = vadd.f32 %v1402, %v1570
  %v1572 = vpop.f32.mrf.mxu0
  %v1573 = vadd.f32 %v1404, %v1572
  %1574 = vmatmul.bf16.gmra.mxu0 %v772
  %v1575 = vpop.f32.mrf.mxu0
  %v1576 = vadd.f32 %v1407, %v1575
  %v1577 = vpop.f32.mrf.mxu0
  %v1578 = vadd.f32 %v1409, %v1577
  %1579 = vmatmul.bf16.gmra.mxu0 %v776
  %v1580 = vpop.f32.mrf.mxu0
  %v1581 = vadd.f32 %v1412, %v1580
  %v1582 = vpop.f32.mrf.mxu0
  %v1583 = vadd.f32 %v1414, %v1582
  %1584 = vmatmul.bf16.gmra.mxu0 %v780
  %v1585 = vpop.f32.mrf.mxu0
  %v1586 = vadd.f32 %v1417, %v1585
  %v1587 = vpop.f32.mrf.mxu0
  %v1588 = vadd.f32 %v1419, %v1587
  %1589 = vmatmul.bf16.gmra.mxu0 %v784
  %v1590 = vpop.f32.mrf.mxu0
  %v1591 = vadd.f32 %v1422, %v1590
  %v1592 = vpop.f32.mrf.mxu0
  %v1593 = vadd.f32 %v1424, %v1592
  %1594 = vmatmul.bf16.gmra.mxu0 %v788
  %v1595 = vpop.f32.mrf.mxu0
  %v1596 = vadd.f32 %v1427, %v1595
  %v1597 = vpop.f32.mrf.mxu0
  %v1598 = vadd.f32 %v1429, %v1597
  %1599 = vmatmul.bf16.gmra.mxu0 %v792
  %v1600 = vpop.f32.mrf.mxu0
  %v1601 = vadd.f32 %v1432, %v1600
  %v1602 = vpop.f32.mrf.mxu0
  %v1603 = vadd.f32 %v1434, %v1602
  %1604 = vmatmul.bf16.gmra.mxu0 %v796
  %v1605 = vpop.f32.mrf.mxu0
  %v1606 = vadd.f32 %v1437, %v1605
  %v1607 = vpop.f32.mrf.mxu0
  %v1608 = vadd.f32 %v1439, %v1607
  %1609 = vmatmul.bf16.gmra.mxu0 %v800
  %v1610 = vpop.f32.mrf.mxu0
  %v1611 = vadd.f32 %v1442, %v1610
  %v1612 = vpop.f32.mrf.mxu0
  %v1613 = vadd.f32 %v1444, %v1612
  %1614 = vmatmul.bf16.gmra.mxu0 %v804
  %v1615 = vpop.f32.mrf.mxu0
  %v1616 = vadd.f32 %v1447, %v1615
  %v1617 = vpop.f32.mrf.mxu0
  %v1618 = vadd.f32 %v1449, %v1617
  %1619 = vmatmul.bf16.gmra.mxu0 %v808
  %v1620 = vpop.f32.mrf.mxu0
  %v1621 = vadd.f32 %v1452, %v1620
  %v1622 = vpop.f32.mrf.mxu0
  %v1623 = vadd.f32 %v1454, %v1622
  %1624 = vmatmul.bf16.gmra.mxu0 %v812
  %v1625 = vpop.f32.mrf.mxu0
  %v1626 = vadd.f32 %v1457, %v1625
  %v1627 = vpop.f32.mrf.mxu0
  %v1628 = vadd.f32 %v1459, %v1627
  %1629 = vmatmul.bf16.gmra.mxu0 %v816
  %v1630 = vpop.f32.mrf.mxu0
  %v1631 = vadd.f32 %v1462, %v1630
  %v1632 = vpop.f32.mrf.mxu0
  %v1633 = vadd.f32 %v1464, %v1632
  %1634 = vmatmul.bf16.gmra.mxu0 %v820
  %v1635 = vpop.f32.mrf.mxu0
  %v1636 = vadd.f32 %v1467, %v1635
  %v1637 = vpop.f32.mrf.mxu0
  %v1638 = vadd.f32 %v1469, %v1637
  %1639 = vmatmul.bf16.gmra.mxu0 %v824
  %v1640 = vpop.f32.mrf.mxu0
  %v1641 = vadd.f32 %v1472, %v1640
  %v1642 = vpop.f32.mrf.mxu0
  %v1643 = vadd.f32 %v1474, %v1642
  %1644 = vmatmul.bf16.gmra.mxu0 %v828
  %v1645 = vpop.f32.mrf.mxu0
  %v1646 = vadd.f32 %v1477, %v1645
  %v1647 = vpop.f32.mrf.mxu0
  %v1648 = vadd.f32 %v1479, %v1647
  %1649 = vmatmul.bf16.gmra.mxu0 %v832
  %v1650 = vpop.f32.mrf.mxu0
  %v1651 = vadd.f32 %v1482, %v1650
  %v1652 = vpop.f32.mrf.mxu0
  %v1653 = vadd.f32 %v1484, %v1652
  %1654 = vmatmul.bf16.gmra.mxu0 %v836
  %v1655 = vpop.f32.mrf.mxu0
  %v1656 = vadd.f32 %v1487, %v1655
  %v1657 = vpop.f32.mrf.mxu0
  %v1658 = vadd.f32 %v1489, %v1657
  %1659 = vmatmul.bf16.gmra.mxu0 %v840
  %v1660 = vpop.f32.mrf.mxu0
  %v1661 = vadd.f32 %v1492, %v1660
  %v1662 = vpop.f32.mrf.mxu0
  %v1663 = vadd.f32 %v1494, %v1662
  %1664 = vmatmul.bf16.gmra.mxu0 %v844
  %v1665 = vpop.f32.mrf.mxu0
  %v1666 = vadd.f32 %v1497, %v1665
  %v1667 = vpop.f32.mrf.mxu0
  %v1668 = vadd.f32 %v1499, %v1667
  %1669 = vmatmul.bf16.gmra.mxu0 %v848
  %v1670 = vpop.f32.mrf.mxu0
  %v1671 = vadd.f32 %v1502, %v1670
  %v1672 = vpop.f32.mrf.mxu0
  %v1673 = vadd.f32 %v1504, %v1672
  %1674 = vmatmul.bf16.gmra.mxu0 %v852
  %v1675 = vpop.f32.mrf.mxu0
  %v1676 = vadd.f32 %v1507, %v1675
  %v1677 = vpop.f32.mrf.mxu0
  %v1678 = vadd.f32 %v1509, %v1677
  %1679 = vmatmul.bf16.gmra.mxu0 %v856
  %v1680 = vpop.f32.mrf.mxu0
  %v1681 = vadd.f32 %v1512, %v1680
  %v1682 = vpop.f32.mrf.mxu0
  %v1683 = vadd.f32 %v1514, %v1682
  %1684 = vdwg.mxu0
  %1685 = vmatpush.bf16.msra.mxu0 %v1145
  %1686 = vmatpush.bf16.msra.mxu0 %v1144
  %1687 = vmatpush.bf16.msra.mxu0 %v1143
  %1688 = vmatpush.bf16.msra.mxu0 %v1142
  %1689 = vmatpush.bf16.msra.mxu0 %v1141
  %1690 = vmatpush.bf16.msra.mxu0 %v1140
  %1691 = vmatpush.bf16.msra.mxu0 %v1139
  %1692 = vmatpush.bf16.msra.mxu0 %v1138
  %1693 = vmatmul.bf16.gmra.mxu0 %v733
  %v1694 = vpop.f32.mrf.mxu0
  %v1695 = vadd.f32 %v1526, %v1694
  %v1696 = vpop.f32.mrf.mxu0
  %v1697 = vadd.f32 %v1528, %v1696
  %1698 = vmatmul.bf16.gmra.mxu0 %v737
  %v1699 = vpop.f32.mrf.mxu0
  %v1700 = vadd.f32 %v1531, %v1699
  %v1701 = vpop.f32.mrf.mxu0
  %v1702 = vadd.f32 %v1533, %v1701
  %1703 = vmatmul.bf16.gmra.mxu0 %v741
  %v1704 = vpop.f32.mrf.mxu0
  %v1705 = vadd.f32 %v1536, %v1704
  %v1706 = vpop.f32.mrf.mxu0
  %v1707 = vadd.f32 %v1538, %v1706
  %1708 = vmatmul.bf16.gmra.mxu0 %v745
  %v1709 = vpop.f32.mrf.mxu0
  %v1710 = vadd.f32 %v1541, %v1709
  %v1711 = vpop.f32.mrf.mxu0
  %v1712 = vadd.f32 %v1543, %v1711
  %1713 = vmatmul.bf16.gmra.mxu0 %v749
  %v1714 = vpop.f32.mrf.mxu0
  %v1715 = vadd.f32 %v1546, %v1714
  %v1716 = vpop.f32.mrf.mxu0
  %v1717 = vadd.f32 %v1548, %v1716
  %1718 = vmatmul.bf16.gmra.mxu0 %v753
  %v1719 = vpop.f32.mrf.mxu0
  %v1720 = vadd.f32 %v1551, %v1719
  %v1721 = vpop.f32.mrf.mxu0
  %v1722 = vadd.f32 %v1553, %v1721
  %1723 = vmatmul.bf16.gmra.mxu0 %v757
  %v1724 = vpop.f32.mrf.mxu0
  %v1725 = vadd.f32 %v1556, %v1724
  %v1726 = vpop.f32.mrf.mxu0
  %v1727 = vadd.f32 %v1558, %v1726
  %1728 = vmatmul.bf16.gmra.mxu0 %v761
  %v1729 = vpop.f32.mrf.mxu0
  %v1730 = vadd.f32 %v1561, %v1729
  %v1731 = vpop.f32.mrf.mxu0
  %v1732 = vadd.f32 %v1563, %v1731
  %1733 = vmatmul.bf16.gmra.mxu0 %v765
  %v1734 = vpop.f32.mrf.mxu0
  %v1735 = vadd.f32 %v1566, %v1734
  %v1736 = vpop.f32.mrf.mxu0
  %v1737 = vadd.f32 %v1568, %v1736
  %1738 = vmatmul.bf16.gmra.mxu0 %v769
  %v1739 = vpop.f32.mrf.mxu0
  %v1740 = vadd.f32 %v1571, %v1739
  %v1741 = vpop.f32.mrf.mxu0
  %v1742 = vadd.f32 %v1573, %v1741
  %1743 = vmatmul.bf16.gmra.mxu0 %v773
  %v1744 = vpop.f32.mrf.mxu0
  %v1745 = vadd.f32 %v1576, %v1744
  %v1746 = vpop.f32.mrf.mxu0
  %v1747 = vadd.f32 %v1578, %v1746
  %1748 = vmatmul.bf16.gmra.mxu0 %v777
  %v1749 = vpop.f32.mrf.mxu0
  %v1750 = vadd.f32 %v1581, %v1749
  %v1751 = vpop.f32.mrf.mxu0
  %v1752 = vadd.f32 %v1583, %v1751
  %1753 = vmatmul.bf16.gmra.mxu0 %v781
  %v1754 = vpop.f32.mrf.mxu0
  %v1755 = vadd.f32 %v1586, %v1754
  %v1756 = vpop.f32.mrf.mxu0
  %v1757 = vadd.f32 %v1588, %v1756
  %1758 = vmatmul.bf16.gmra.mxu0 %v785
  %v1759 = vpop.f32.mrf.mxu0
  %v1760 = vadd.f32 %v1591, %v1759
  %v1761 = vpop.f32.mrf.mxu0
  %v1762 = vadd.f32 %v1593, %v1761
  %1763 = vmatmul.bf16.gmra.mxu0 %v789
  %v1764 = vpop.f32.mrf.mxu0
  %v1765 = vadd.f32 %v1596, %v1764
  %v1766 = vpop.f32.mrf.mxu0
  %v1767 = vadd.f32 %v1598, %v1766
  %1768 = vmatmul.bf16.gmra.mxu0 %v793
  %v1769 = vpop.f32.mrf.mxu0
  %v1770 = vadd.f32 %v1601, %v1769
  %v1771 = vpop.f32.mrf.mxu0
  %v1772 = vadd.f32 %v1603, %v1771
  %1773 = vmatmul.bf16.gmra.mxu0 %v797
  %v1774 = vpop.f32.mrf.mxu0
  %v1775 = vadd.f32 %v1606, %v1774
  %v1776 = vpop.f32.mrf.mxu0
  %v1777 = vadd.f32 %v1608, %v1776
  %1778 = vmatmul.bf16.gmra.mxu0 %v801
  %v1779 = vpop.f32.mrf.mxu0
  %v1780 = vadd.f32 %v1611, %v1779
  %v1781 = vpop.f32.mrf.mxu0
  %v1782 = vadd.f32 %v1613, %v1781
  %1783 = vmatmul.bf16.gmra.mxu0 %v805
  %v1784 = vpop.f32.mrf.mxu0
  %v1785 = vadd.f32 %v1616, %v1784
  %v1786 = vpop.f32.mrf.mxu0
  %v1787 = vadd.f32 %v1618, %v1786
  %1788 = vmatmul.bf16.gmra.mxu0 %v809
  %v1789 = vpop.f32.mrf.mxu0
  %v1790 = vadd.f32 %v1621, %v1789
  %v1791 = vpop.f32.mrf.mxu0
  %v1792 = vadd.f32 %v1623, %v1791
  %1793 = vmatmul.bf16.gmra.mxu0 %v813
  %v1794 = vpop.f32.mrf.mxu0
  %v1795 = vadd.f32 %v1626, %v1794
  %v1796 = vpop.f32.mrf.mxu0
  %v1797 = vadd.f32 %v1628, %v1796
  %1798 = vmatmul.bf16.gmra.mxu0 %v817
  %v1799 = vpop.f32.mrf.mxu0
  %v1800 = vadd.f32 %v1631, %v1799
  %v1801 = vpop.f32.mrf.mxu0
  %v1802 = vadd.f32 %v1633, %v1801
  %1803 = vmatmul.bf16.gmra.mxu0 %v821
  %v1804 = vpop.f32.mrf.mxu0
  %v1805 = vadd.f32 %v1636, %v1804
  %v1806 = vpop.f32.mrf.mxu0
  %v1807 = vadd.f32 %v1638, %v1806
  %1808 = vmatmul.bf16.gmra.mxu0 %v825
  %v1809 = vpop.f32.mrf.mxu0
  %v1810 = vadd.f32 %v1641, %v1809
  %v1811 = vpop.f32.mrf.mxu0
  %v1812 = vadd.f32 %v1643, %v1811
  %1813 = vmatmul.bf16.gmra.mxu0 %v829
  %v1814 = vpop.f32.mrf.mxu0
  %v1815 = vadd.f32 %v1646, %v1814
  %v1816 = vpop.f32.mrf.mxu0
  %v1817 = vadd.f32 %v1648, %v1816
  %1818 = vmatmul.bf16.gmra.mxu0 %v833
  %v1819 = vpop.f32.mrf.mxu0
  %v1820 = vadd.f32 %v1651, %v1819
  %v1821 = vpop.f32.mrf.mxu0
  %v1822 = vadd.f32 %v1653, %v1821
  %1823 = vmatmul.bf16.gmra.mxu0 %v837
  %v1824 = vpop.f32.mrf.mxu0
  %v1825 = vadd.f32 %v1656, %v1824
  %v1826 = vpop.f32.mrf.mxu0
  %v1827 = vadd.f32 %v1658, %v1826
  %1828 = vmatmul.bf16.gmra.mxu0 %v841
  %v1829 = vpop.f32.mrf.mxu0
  %v1830 = vadd.f32 %v1661, %v1829
  %v1831 = vpop.f32.mrf.mxu0
  %v1832 = vadd.f32 %v1663, %v1831
  %1833 = vmatmul.bf16.gmra.mxu0 %v845
  %v1834 = vpop.f32.mrf.mxu0
  %v1835 = vadd.f32 %v1666, %v1834
  %v1836 = vpop.f32.mrf.mxu0
  %v1837 = vadd.f32 %v1668, %v1836
  %1838 = vmatmul.bf16.gmra.mxu0 %v849
  %v1839 = vpop.f32.mrf.mxu0
  %v1840 = vadd.f32 %v1671, %v1839
  %v1841 = vpop.f32.mrf.mxu0
  %v1842 = vadd.f32 %v1673, %v1841
  %1843 = vmatmul.bf16.gmra.mxu0 %v853
  %v1844 = vpop.f32.mrf.mxu0
  %v1845 = vadd.f32 %v1676, %v1844
  %v1846 = vpop.f32.mrf.mxu0
  %v1847 = vadd.f32 %v1678, %v1846
  %1848 = vmatmul.bf16.gmra.mxu0 %v857
  %v1849 = vpop.f32.mrf.mxu0
  %v1850 = vadd.f32 %v1681, %v1849
  %v1851 = vpop.f32.mrf.mxu0
  %v1852 = vadd.f32 %v1683, %v1851
  %1853 = vdwg.mxu0
  %v1854 = vadd.f32 %v154, %v1695
  %v1855 = vadd.f32 %v155, %v1697
  %v1856 = vadd.f32 %v156, %v1700
  %v1857 = vadd.f32 %v157, %v1702
  %v1858 = vadd.f32 %v158, %v1705
  %v1859 = vadd.f32 %v159, %v1707
  %v1860 = vadd.f32 %v160, %v1710
  %v1861 = vadd.f32 %v161, %v1712
  %v1862 = vadd.f32 %v162, %v1715
  %v1863 = vadd.f32 %v163, %v1717
  %v1864 = vadd.f32 %v164, %v1720
  %v1865 = vadd.f32 %v165, %v1722
  %v1866 = vadd.f32 %v166, %v1725
  %v1867 = vadd.f32 %v167, %v1727
  %v1868 = vadd.f32 %v168, %v1730
  %v1869 = vadd.f32 %v169, %v1732
  %v1870 = vadd.f32 %v170, %v1735
  %v1871 = vadd.f32 %v171, %v1737
  %v1872 = vadd.f32 %v172, %v1740
  %v1873 = vadd.f32 %v173, %v1742
  %v1874 = vadd.f32 %v174, %v1745
  %v1875 = vadd.f32 %v175, %v1747
  %v1876 = vadd.f32 %v176, %v1750
  %v1877 = vadd.f32 %v177, %v1752
  %v1878 = vadd.f32 %v178, %v1755
  %v1879 = vadd.f32 %v179, %v1757
  %v1880 = vadd.f32 %v180, %v1760
  %v1881 = vadd.f32 %v181, %v1762
  %v1882 = vadd.f32 %v182, %v1765
  %v1883 = vadd.f32 %v183, %v1767
  %v1884 = vadd.f32 %v184, %v1770
  %v1885 = vadd.f32 %v185, %v1772
  %v1886 = vadd.f32 %v186, %v1775
  %v1887 = vadd.f32 %v187, %v1777
  %v1888 = vadd.f32 %v188, %v1780
  %v1889 = vadd.f32 %v189, %v1782
  %v1890 = vadd.f32 %v190, %v1785
  %v1891 = vadd.f32 %v191, %v1787
  %v1892 = vadd.f32 %v192, %v1790
  %v1893 = vadd.f32 %v193, %v1792
  %v1894 = vadd.f32 %v194, %v1795
  %v1895 = vadd.f32 %v195, %v1797
  %v1896 = vadd.f32 %v196, %v1800
  %v1897 = vadd.f32 %v197, %v1802
  %v1898 = vadd.f32 %v198, %v1805
  %v1899 = vadd.f32 %v199, %v1807
  %v1900 = vadd.f32 %v200, %v1810
  %v1901 = vadd.f32 %v201, %v1812
  %v1902 = vadd.f32 %v202, %v1815
  %v1903 = vadd.f32 %v203, %v1817
  %v1904 = vadd.f32 %v204, %v1820
  %v1905 = vadd.f32 %v205, %v1822
  %v1906 = vadd.f32 %v206, %v1825
  %v1907 = vadd.f32 %v207, %v1827
  %v1908 = vadd.f32 %v208, %v1830
  %v1909 = vadd.f32 %v209, %v1832
  %v1910 = vadd.f32 %v210, %v1835
  %v1911 = vadd.f32 %v211, %v1837
  %v1912 = vadd.f32 %v212, %v1840
  %v1913 = vadd.f32 %v213, %v1842
  %v1914 = vadd.f32 %v214, %v1845
  %v1915 = vadd.f32 %v215, %v1847
  %v1916 = vadd.f32 %v216, %v1850
  %v1917 = vadd.f32 %v217, %v1852
  %1918 = vst [vmem:[#allocation2] sm:$0xff] %v1854
  %1919 = vst [vmem:[#allocation2 + $0x8] sm:$0xff] %v1855
  %1920 = vst [vmem:[#allocation2 + $0x10] sm:$0xff] %v1856
  %1921 = vst [vmem:[#allocation2 + $0x18] sm:$0xff] %v1857
  %1922 = vst [vmem:[#allocation2 + $0x20] sm:$0xff] %v1858
  %1923 = vst [vmem:[#allocation2 + $0x28] sm:$0xff] %v1859
  %1924 = vst [vmem:[#allocation2 + $0x30] sm:$0xff] %v1860
  %1925 = vst [vmem:[#allocation2 + $0x38] sm:$0xff] %v1861
  %1926 = vst [vmem:[#allocation2 + $0x40] sm:$0xff] %v1862
  %1927 = vst [vmem:[#allocation2 + $0x48] sm:$0xff] %v1863
  %1928 = vst [vmem:[#allocation2 + $0x50] sm:$0xff] %v1864
  %1929 = vst [vmem:[#allocation2 + $0x58] sm:$0xff] %v1865
  %1930 = vst [vmem:[#allocation2 + $0x60] sm:$0xff] %v1866
  %1931 = vst [vmem:[#allocation2 + $0x68] sm:$0xff] %v1867
  %1932 = vst [vmem:[#allocation2 + $0x70] sm:$0xff] %v1868
  %1933 = vst [vmem:[#allocation2 + $0x78] sm:$0xff] %v1869
  %1934 = vst [vmem:[#allocation2 + $0x80] sm:$0xff] %v1870
  %1935 = vst [vmem:[#allocation2 + $0x88] sm:$0xff] %v1871
  %1936 = vst [vmem:[#allocation2 + $0x90] sm:$0xff] %v1872
  %1937 = vst [vmem:[#allocation2 + $0x98] sm:$0xff] %v1873
  %1938 = vst [vmem:[#allocation2 + $0xa0] sm:$0xff] %v1874
  %1939 = vst [vmem:[#allocation2 + $0xa8] sm:$0xff] %v1875
  %1940 = vst [vmem:[#allocation2 + $0xb0] sm:$0xff] %v1876
  %1941 = vst [vmem:[#allocation2 + $0xb8] sm:$0xff] %v1877
  %1942 = vst [vmem:[#allocation2 + $0xc0] sm:$0xff] %v1878
  %1943 = vst [vmem:[#allocation2 + $0xc8] sm:$0xff] %v1879
  %1944 = vst [vmem:[#allocation2 + $0xd0] sm:$0xff] %v1880
  %1945 = vst [vmem:[#allocation2 + $0xd8] sm:$0xff] %v1881
  %1946 = vst [vmem:[#allocation2 + $0xe0] sm:$0xff] %v1882
  %1947 = vst [vmem:[#allocation2 + $0xe8] sm:$0xff] %v1883
  %1948 = vst [vmem:[#allocation2 + $0xf0] sm:$0xff] %v1884
  %1949 = vst [vmem:[#allocation2 + $0xf8] sm:$0xff] %v1885
  %1950 = vst [vmem:[#allocation2 + $0x100] sm:$0xff] %v1886
  %1951 = vst [vmem:[#allocation2 + $0x108] sm:$0xff] %v1887
  %1952 = vst [vmem:[#allocation2 + $0x110] sm:$0xff] %v1888
  %1953 = vst [vmem:[#allocation2 + $0x118] sm:$0xff] %v1889
  %1954 = vst [vmem:[#allocation2 + $0x120] sm:$0xff] %v1890
  %1955 = vst [vmem:[#allocation2 + $0x128] sm:$0xff] %v1891
  %1956 = vst [vmem:[#allocation2 + $0x130] sm:$0xff] %v1892
  %1957 = vst [vmem:[#allocation2 + $0x138] sm:$0xff] %v1893
  %1958 = vst [vmem:[#allocation2 + $0x140] sm:$0xff] %v1894
  %1959 = vst [vmem:[#allocation2 + $0x148] sm:$0xff] %v1895
  %1960 = vst [vmem:[#allocation2 + $0x150] sm:$0xff] %v1896
  %1961 = vst [vmem:[#allocation2 + $0x158] sm:$0xff] %v1897
  %1962 = vst [vmem:[#allocation2 + $0x160] sm:$0xff] %v1898
  %1963 = vst [vmem:[#allocation2 + $0x168] sm:$0xff] %v1899
  %1964 = vst [vmem:[#allocation2 + $0x170] sm:$0xff] %v1900
  %1965 = vst [vmem:[#allocation2 + $0x178] sm:$0xff] %v1901
  %1966 = vst [vmem:[#allocation2 + $0x180] sm:$0xff] %v1902
  %1967 = vst [vmem:[#allocation2 + $0x188] sm:$0xff] %v1903
  %1968 = vst [vmem:[#allocation2 + $0x190] sm:$0xff] %v1904
  %1969 = vst [vmem:[#allocation2 + $0x198] sm:$0xff] %v1905
  %1970 = vst [vmem:[#allocation2 + $0x1a0] sm:$0xff] %v1906
  %1971 = vst [vmem:[#allocation2 + $0x1a8] sm:$0xff] %v1907
  %1972 = vst [vmem:[#allocation2 + $0x1b0] sm:$0xff] %v1908
  %1973 = vst [vmem:[#allocation2 + $0x1b8] sm:$0xff] %v1909
  %1974 = vst [vmem:[#allocation2 + $0x1c0] sm:$0xff] %v1910
  %1975 = vst [vmem:[#allocation2 + $0x1c8] sm:$0xff] %v1911
  %1976 = vst [vmem:[#allocation2 + $0x1d0] sm:$0xff] %v1912
  %1977 = vst [vmem:[#allocation2 + $0x1d8] sm:$0xff] %v1913
  %1978 = vst [vmem:[#allocation2 + $0x1e0] sm:$0xff] %v1914
  %1979 = vst [vmem:[#allocation2 + $0x1e8] sm:$0xff] %v1915
  %1980 = vst [vmem:[#allocation2 + $0x1f0] sm:$0xff] %v1916
  %1981 = vst [vmem:[#allocation2 + $0x1f8] sm:$0xff] %v1917
  %p1982 = scmp.eq.s32.totalorder 0, 0
  // Predicated region
  $region22: #{gnn_forward.3} parent=0 // pred_check
    %p1983 = pneg %p1982
  $region23: #{gnn_forward.3} parent=0 // pred_check_branch
    %1985 = sbr.rel (%p1983) target = $region25
  $region24: #{gnn_forward.3} parent=0 // pred_region
    %v1986 = vld [vmem:[#allocation2] sm:$0xff]
    %v1987 = vld [vmem:[#allocation2 + $0x8] sm:$0xff]
    %v1988 = vld [vmem:[#allocation2 + $0x10] sm:$0xff]
    %v1989 = vld [vmem:[#allocation2 + $0x18] sm:$0xff]
    %v1990 = vld [vmem:[#allocation2 + $0x20] sm:$0xff]
    %v1991 = vld [vmem:[#allocation2 + $0x28] sm:$0xff]
    %v1992 = vld [vmem:[#allocation2 + $0x30] sm:$0xff]
    %v1993 = vld [vmem:[#allocation2 + $0x38] sm:$0xff]
    %v1994 = vld [vmem:[#allocation2 + $0x40] sm:$0xff]
    %v1995 = vld [vmem:[#allocation2 + $0x48] sm:$0xff]
    %v1996 = vld [vmem:[#allocation2 + $0x50] sm:$0xff]
    %v1997 = vld [vmem:[#allocation2 + $0x58] sm:$0xff]
    %v1998 = vld [vmem:[#allocation2 + $0x60] sm:$0xff]
    %v1999 = vld [vmem:[#allocation2 + $0x68] sm:$0xff]
    %v2000 = vld [vmem:[#allocation2 + $0x70] sm:$0xff]
    %v2001 = vld [vmem:[#allocation2 + $0x78] sm:$0xff]
    %v2002 = vld [vmem:[#allocation2 + $0x80] sm:$0xff]
    %v2003 = vld [vmem:[#allocation2 + $0x88] sm:$0xff]
    %v2004 = vld [vmem:[#allocation2 + $0x90] sm:$0xff]
    %v2005 = vld [vmem:[#allocation2 + $0x98] sm:$0xff]
    %v2006 = vld [vmem:[#allocation2 + $0xa0] sm:$0xff]
    %v2007 = vld [vmem:[#allocation2 + $0xa8] sm:$0xff]
    %v2008 = vld [vmem:[#allocation2 + $0xb0] sm:$0xff]
    %v2009 = vld [vmem:[#allocation2 + $0xb8] sm:$0xff]
    %v2010 = vld [vmem:[#allocation2 + $0xc0] sm:$0xff]
    %v2011 = vld [vmem:[#allocation2 + $0xc8] sm:$0xff]
    %v2012 = vld [vmem:[#allocation2 + $0xd0] sm:$0xff]
    %v2013 = vld [vmem:[#allocation2 + $0xd8] sm:$0xff]
    %v2014 = vld [vmem:[#allocation2 + $0xe0] sm:$0xff]
    %v2015 = vld [vmem:[#allocation2 + $0xe8] sm:$0xff]
    %v2016 = vld [vmem:[#allocation2 + $0xf0] sm:$0xff]
    %v2017 = vld [vmem:[#allocation2 + $0xf8] sm:$0xff]
    %v2018 = vld [vmem:[#allocation2 + $0x100] sm:$0xff]
    %v2019 = vld [vmem:[#allocation2 + $0x108] sm:$0xff]
    %v2020 = vld [vmem:[#allocation2 + $0x110] sm:$0xff]
    %v2021 = vld [vmem:[#allocation2 + $0x118] sm:$0xff]
    %v2022 = vld [vmem:[#allocation2 + $0x120] sm:$0xff]
    %v2023 = vld [vmem:[#allocation2 + $0x128] sm:$0xff]
    %v2024 = vld [vmem:[#allocation2 + $0x130] sm:$0xff]
    %v2025 = vld [vmem:[#allocation2 + $0x138] sm:$0xff]
    %v2026 = vld [vmem:[#allocation2 + $0x140] sm:$0xff]
    %v2027 = vld [vmem:[#allocation2 + $0x148] sm:$0xff]
    %v2028 = vld [vmem:[#allocation2 + $0x150] sm:$0xff]
    %v2029 = vld [vmem:[#allocation2 + $0x158] sm:$0xff]
    %v2030 = vld [vmem:[#allocation2 + $0x160] sm:$0xff]
    %v2031 = vld [vmem:[#allocation2 + $0x168] sm:$0xff]
    %v2032 = vld [vmem:[#allocation2 + $0x170] sm:$0xff]
    %v2033 = vld [vmem:[#allocation2 + $0x178] sm:$0xff]
    %v2034 = vld [vmem:[#allocation2 + $0x180] sm:$0xff]
    %v2035 = vld [vmem:[#allocation2 + $0x188] sm:$0xff]
    %v2036 = vld [vmem:[#allocation2 + $0x190] sm:$0xff]
    %v2037 = vld [vmem:[#allocation2 + $0x198] sm:$0xff]
    %v2038 = vld [vmem:[#allocation2 + $0x1a0] sm:$0xff]
    %v2039 = vld [vmem:[#allocation2 + $0x1a8] sm:$0xff]
    %v2040 = vld [vmem:[#allocation2 + $0x1b0] sm:$0xff]
    %v2041 = vld [vmem:[#allocation2 + $0x1b8] sm:$0xff]
    %v2042 = vld [vmem:[#allocation2 + $0x1c0] sm:$0xff]
    %v2043 = vld [vmem:[#allocation2 + $0x1c8] sm:$0xff]
    %v2044 = vld [vmem:[#allocation2 + $0x1d0] sm:$0xff]
    %v2045 = vld [vmem:[#allocation2 + $0x1d8] sm:$0xff]
    %v2046 = vld [vmem:[#allocation2 + $0x1e0] sm:$0xff]
    %v2047 = vld [vmem:[#allocation2 + $0x1e8] sm:$0xff]
    %v2048 = vld [vmem:[#allocation2 + $0x1f0] sm:$0xff]
    %v2049 = vld [vmem:[#allocation2 + $0x1f8] sm:$0xff]
    %v2050 = vunpack.c.l.bf16 %v90
    %v2051 = vunpack.c.l.bf16 %v91
    %v2052 = vunpack.c.l.bf16 %v92
    %v2053 = vunpack.c.l.bf16 %v93
    %v2054 = vunpack.c.l.bf16 %v94
    %v2055 = vunpack.c.l.bf16 %v95
    %v2056 = vunpack.c.l.bf16 %v96
    %v2057 = vunpack.c.l.bf16 %v97
    %v2058 = vunpack.c.l.bf16 %v98
    %v2059 = vunpack.c.l.bf16 %v99
    %v2060 = vunpack.c.l.bf16 %v100
    %v2061 = vunpack.c.l.bf16 %v101
    %v2062 = vunpack.c.l.bf16 %v102
    %v2063 = vunpack.c.l.bf16 %v103
    %v2064 = vunpack.c.l.bf16 %v104
    %v2065 = vunpack.c.l.bf16 %v105
    %v2066 = vunpack.c.l.bf16 %v106
    %v2067 = vunpack.c.l.bf16 %v107
    %v2068 = vunpack.c.l.bf16 %v108
    %v2069 = vunpack.c.l.bf16 %v109
    %v2070 = vunpack.c.l.bf16 %v110
    %v2071 = vunpack.c.l.bf16 %v111
    %v2072 = vunpack.c.l.bf16 %v112
    %v2073 = vunpack.c.l.bf16 %v113
    %v2074 = vunpack.c.l.bf16 %v114
    %v2075 = vunpack.c.l.bf16 %v115
    %v2076 = vunpack.c.l.bf16 %v116
    %v2077 = vunpack.c.l.bf16 %v117
    %v2078 = vunpack.c.l.bf16 %v118
    %v2079 = vunpack.c.l.bf16 %v119
    %v2080 = vunpack.c.l.bf16 %v120
    %v2081 = vunpack.c.l.bf16 %v121
    %v2082 = vunpack.c.l.bf16 %v122
    %v2083 = vunpack.c.l.bf16 %v123
    %v2084 = vunpack.c.l.bf16 %v124
    %v2085 = vunpack.c.l.bf16 %v125
    %v2086 = vunpack.c.l.bf16 %v126
    %v2087 = vunpack.c.l.bf16 %v127
    %v2088 = vunpack.c.l.bf16 %v128
    %v2089 = vunpack.c.l.bf16 %v129
    %v2090 = vunpack.c.l.bf16 %v130
    %v2091 = vunpack.c.l.bf16 %v131
    %v2092 = vunpack.c.l.bf16 %v132
    %v2093 = vunpack.c.l.bf16 %v133
    %v2094 = vunpack.c.l.bf16 %v134
    %v2095 = vunpack.c.l.bf16 %v135
    %v2096 = vunpack.c.l.bf16 %v136
    %v2097 = vunpack.c.l.bf16 %v137
    %v2098 = vunpack.c.l.bf16 %v138
    %v2099 = vunpack.c.l.bf16 %v139
    %v2100 = vunpack.c.l.bf16 %v140
    %v2101 = vunpack.c.l.bf16 %v141
    %v2102 = vunpack.c.l.bf16 %v142
    %v2103 = vunpack.c.l.bf16 %v143
    %v2104 = vunpack.c.l.bf16 %v144
    %v2105 = vunpack.c.l.bf16 %v145
    %v2106 = vunpack.c.l.bf16 %v146
    %v2107 = vunpack.c.l.bf16 %v147
    %v2108 = vunpack.c.l.bf16 %v148
    %v2109 = vunpack.c.l.bf16 %v149
    %v2110 = vunpack.c.l.bf16 %v150
    %v2111 = vunpack.c.l.bf16 %v151
    %v2112 = vunpack.c.l.bf16 %v152
    %v2113 = vunpack.c.l.bf16 %v153
    %v2114 = vadd.f32 %v1986, %v2050
    %v2115 = vadd.f32 %v1987, %v2051
    %v2116 = vadd.f32 %v1988, %v2052
    %v2117 = vadd.f32 %v1989, %v2053
    %v2118 = vadd.f32 %v1990, %v2054
    %v2119 = vadd.f32 %v1991, %v2055
    %v2120 = vadd.f32 %v1992, %v2056
    %v2121 = vadd.f32 %v1993, %v2057
    %v2122 = vadd.f32 %v1994, %v2058
    %v2123 = vadd.f32 %v1995, %v2059
    %v2124 = vadd.f32 %v1996, %v2060
    %v2125 = vadd.f32 %v1997, %v2061
    %v2126 = vadd.f32 %v1998, %v2062
    %v2127 = vadd.f32 %v1999, %v2063
    %v2128 = vadd.f32 %v2000, %v2064
    %v2129 = vadd.f32 %v2001, %v2065
    %v2130 = vadd.f32 %v2002, %v2066
    %v2131 = vadd.f32 %v2003, %v2067
    %v2132 = vadd.f32 %v2004, %v2068
    %v2133 = vadd.f32 %v2005, %v2069
    %v2134 = vadd.f32 %v2006, %v2070
    %v2135 = vadd.f32 %v2007, %v2071
    %v2136 = vadd.f32 %v2008, %v2072
    %v2137 = vadd.f32 %v2009, %v2073
    %v2138 = vadd.f32 %v2010, %v2074
    %v2139 = vadd.f32 %v2011, %v2075
    %v2140 = vadd.f32 %v2012, %v2076
    %v2141 = vadd.f32 %v2013, %v2077
    %v2142 = vadd.f32 %v2014, %v2078
    %v2143 = vadd.f32 %v2015, %v2079
    %v2144 = vadd.f32 %v2016, %v2080
    %v2145 = vadd.f32 %v2017, %v2081
    %v2146 = vadd.f32 %v2018, %v2082
    %v2147 = vadd.f32 %v2019, %v2083
    %v2148 = vadd.f32 %v2020, %v2084
    %v2149 = vadd.f32 %v2021, %v2085
    %v2150 = vadd.f32 %v2022, %v2086
    %v2151 = vadd.f32 %v2023, %v2087
    %v2152 = vadd.f32 %v2024, %v2088
    %v2153 = vadd.f32 %v2025, %v2089
    %v2154 = vadd.f32 %v2026, %v2090
    %v2155 = vadd.f32 %v2027, %v2091
    %v2156 = vadd.f32 %v2028, %v2092
    %v2157 = vadd.f32 %v2029, %v2093
    %v2158 = vadd.f32 %v2030, %v2094
    %v2159 = vadd.f32 %v2031, %v2095
    %v2160 = vadd.f32 %v2032, %v2096
    %v2161 = vadd.f32 %v2033, %v2097
    %v2162 = vadd.f32 %v2034, %v2098
    %v2163 = vadd.f32 %v2035, %v2099
    %v2164 = vadd.f32 %v2036, %v2100
    %v2165 = vadd.f32 %v2037, %v2101
    %v2166 = vadd.f32 %v2038, %v2102
    %v2167 = vadd.f32 %v2039, %v2103
    %v2168 = vadd.f32 %v2040, %v2104
    %v2169 = vadd.f32 %v2041, %v2105
    %v2170 = vadd.f32 %v2042, %v2106
    %v2171 = vadd.f32 %v2043, %v2107
    %v2172 = vadd.f32 %v2044, %v2108
    %v2173 = vadd.f32 %v2045, %v2109
    %v2174 = vadd.f32 %v2046, %v2110
    %v2175 = vadd.f32 %v2047, %v2111
    %v2176 = vadd.f32 %v2048, %v2112
    %v2177 = vadd.f32 %v2049, %v2113
    %2178 = vst [vmem:[#allocation2] sm:$0xff] %v2114
    %2179 = vst [vmem:[#allocation2 + $0x8] sm:$0xff] %v2115
    %2180 = vst [vmem:[#allocation2 + $0x10] sm:$0xff] %v2116
    %2181 = vst [vmem:[#allocation2 + $0x18] sm:$0xff] %v2117
    %2182 = vst [vmem:[#allocation2 + $0x20] sm:$0xff] %v2118
    %2183 = vst [vmem:[#allocation2 + $0x28] sm:$0xff] %v2119
    %2184 = vst [vmem:[#allocation2 + $0x30] sm:$0xff] %v2120
    %2185 = vst [vmem:[#allocation2 + $0x38] sm:$0xff] %v2121
    %2186 = vst [vmem:[#allocation2 + $0x40] sm:$0xff] %v2122
    %2187 = vst [vmem:[#allocation2 + $0x48] sm:$0xff] %v2123
    %2188 = vst [vmem:[#allocation2 + $0x50] sm:$0xff] %v2124
    %2189 = vst [vmem:[#allocation2 + $0x58] sm:$0xff] %v2125
    %2190 = vst [vmem:[#allocation2 + $0x60] sm:$0xff] %v2126
    %2191 = vst [vmem:[#allocation2 + $0x68] sm:$0xff] %v2127
    %2192 = vst [vmem:[#allocation2 + $0x70] sm:$0xff] %v2128
    %2193 = vst [vmem:[#allocation2 + $0x78] sm:$0xff] %v2129
    %2194 = vst [vmem:[#allocation2 + $0x80] sm:$0xff] %v2130
    %2195 = vst [vmem:[#allocation2 + $0x88] sm:$0xff] %v2131
    %2196 = vst [vmem:[#allocation2 + $0x90] sm:$0xff] %v2132
    %2197 = vst [vmem:[#allocation2 + $0x98] sm:$0xff] %v2133
    %2198 = vst [vmem:[#allocation2 + $0xa0] sm:$0xff] %v2134
    %2199 = vst [vmem:[#allocation2 + $0xa8] sm:$0xff] %v2135
    %2200 = vst [vmem:[#allocation2 + $0xb0] sm:$0xff] %v2136
    %2201 = vst [vmem:[#allocation2 + $0xb8] sm:$0xff] %v2137
    %2202 = vst [vmem:[#allocation2 + $0xc0] sm:$0xff] %v2138
    %2203 = vst [vmem:[#allocation2 + $0xc8] sm:$0xff] %v2139
    %2204 = vst [vmem:[#allocation2 + $0xd0] sm:$0xff] %v2140
    %2205 = vst [vmem:[#allocation2 + $0xd8] sm:$0xff] %v2141
    %2206 = vst [vmem:[#allocation2 + $0xe0] sm:$0xff] %v2142
    %2207 = vst [vmem:[#allocation2 + $0xe8] sm:$0xff] %v2143
    %2208 = vst [vmem:[#allocation2 + $0xf0] sm:$0xff] %v2144
    %2209 = vst [vmem:[#allocation2 + $0xf8] sm:$0xff] %v2145
    %2210 = vst [vmem:[#allocation2 + $0x100] sm:$0xff] %v2146
    %2211 = vst [vmem:[#allocation2 + $0x108] sm:$0xff] %v2147
    %2212 = vst [vmem:[#allocation2 + $0x110] sm:$0xff] %v2148
    %2213 = vst [vmem:[#allocation2 + $0x118] sm:$0xff] %v2149
    %2214 = vst [vmem:[#allocation2 + $0x120] sm:$0xff] %v2150
    %2215 = vst [vmem:[#allocation2 + $0x128] sm:$0xff] %v2151
    %2216 = vst [vmem:[#allocation2 + $0x130] sm:$0xff] %v2152
    %2217 = vst [vmem:[#allocation2 + $0x138] sm:$0xff] %v2153
    %2218 = vst [vmem:[#allocation2 + $0x140] sm:$0xff] %v2154
    %2219 = vst [vmem:[#allocation2 + $0x148] sm:$0xff] %v2155
    %2220 = vst [vmem:[#allocation2 + $0x150] sm:$0xff] %v2156
    %2221 = vst [vmem:[#allocation2 + $0x158] sm:$0xff] %v2157
    %2222 = vst [vmem:[#allocation2 + $0x160] sm:$0xff] %v2158
    %2223 = vst [vmem:[#allocation2 + $0x168] sm:$0xff] %v2159
    %2224 = vst [vmem:[#allocation2 + $0x170] sm:$0xff] %v2160
    %2225 = vst [vmem:[#allocation2 + $0x178] sm:$0xff] %v2161
    %2226 = vst [vmem:[#allocation2 + $0x180] sm:$0xff] %v2162
    %2227 = vst [vmem:[#allocation2 + $0x188] sm:$0xff] %v2163
    %2228 = vst [vmem:[#allocation2 + $0x190] sm:$0xff] %v2164
    %2229 = vst [vmem:[#allocation2 + $0x198] sm:$0xff] %v2165
    %2230 = vst [vmem:[#allocation2 + $0x1a0] sm:$0xff] %v2166
    %2231 = vst [vmem:[#allocation2 + $0x1a8] sm:$0xff] %v2167
    %2232 = vst [vmem:[#allocation2 + $0x1b0] sm:$0xff] %v2168
    %2233 = vst [vmem:[#allocation2 + $0x1b8] sm:$0xff] %v2169
    %2234 = vst [vmem:[#allocation2 + $0x1c0] sm:$0xff] %v2170
    %2235 = vst [vmem:[#allocation2 + $0x1c8] sm:$0xff] %v2171
    %2236 = vst [vmem:[#allocation2 + $0x1d0] sm:$0xff] %v2172
    %2237 = vst [vmem:[#allocation2 + $0x1d8] sm:$0xff] %v2173
    %2238 = vst [vmem:[#allocation2 + $0x1e0] sm:$0xff] %v2174
    %2239 = vst [vmem:[#allocation2 + $0x1e8] sm:$0xff] %v2175
    %2240 = vst [vmem:[#allocation2 + $0x1f0] sm:$0xff] %v2176
    %2241 = vst [vmem:[#allocation2 + $0x1f8] sm:$0xff] %v2177
  $region25: #{gnn_forward.3} parent=0 // pred_fallthru
    _
  // Predicated region
  $region26: #{gnn_forward.3} parent=0 // pred_check
    %p2242 = pneg %p17
  $region27: #{gnn_forward.3} parent=0 // pred_check_branch
    %2244 = sbr.rel (%p2242) target = $region29
  $region28: #{gnn_forward.3} parent=0 // pred_region
    %v2245 = vld [vmem:[#allocation2] sm:$0xff]
    %v2246 = vld [vmem:[#allocation2 + $0x8] sm:$0xff]
    %v2247 = vld [vmem:[#allocation2 + $0x10] sm:$0xff]
    %v2248 = vld [vmem:[#allocation2 + $0x18] sm:$0xff]
    %v2249 = vld [vmem:[#allocation2 + $0x20] sm:$0xff]
    %v2250 = vld [vmem:[#allocation2 + $0x28] sm:$0xff]
    %v2251 = vld [vmem:[#allocation2 + $0x30] sm:$0xff]
    %v2252 = vld [vmem:[#allocation2 + $0x38] sm:$0xff]
    %v2253 = vld [vmem:[#allocation2 + $0x40] sm:$0xff]
    %v2254 = vld [vmem:[#allocation2 + $0x48] sm:$0xff]
    %v2255 = vld [vmem:[#allocation2 + $0x50] sm:$0xff]
    %v2256 = vld [vmem:[#allocation2 + $0x58] sm:$0xff]
    %v2257 = vld [vmem:[#allocation2 + $0x60] sm:$0xff]
    %v2258 = vld [vmem:[#allocation2 + $0x68] sm:$0xff]
    %v2259 = vld [vmem:[#allocation2 + $0x70] sm:$0xff]
    %v2260 = vld [vmem:[#allocation2 + $0x78] sm:$0xff]
    %v2261 = vld [vmem:[#allocation2 + $0x80] sm:$0xff]
    %v2262 = vld [vmem:[#allocation2 + $0x88] sm:$0xff]
    %v2263 = vld [vmem:[#allocation2 + $0x90] sm:$0xff]
    %v2264 = vld [vmem:[#allocation2 + $0x98] sm:$0xff]
    %v2265 = vld [vmem:[#allocation2 + $0xa0] sm:$0xff]
    %v2266 = vld [vmem:[#allocation2 + $0xa8] sm:$0xff]
    %v2267 = vld [vmem:[#allocation2 + $0xb0] sm:$0xff]
    %v2268 = vld [vmem:[#allocation2 + $0xb8] sm:$0xff]
    %v2269 = vld [vmem:[#allocation2 + $0xc0] sm:$0xff]
    %v2270 = vld [vmem:[#allocation2 + $0xc8] sm:$0xff]
    %v2271 = vld [vmem:[#allocation2 + $0xd0] sm:$0xff]
    %v2272 = vld [vmem:[#allocation2 + $0xd8] sm:$0xff]
    %v2273 = vld [vmem:[#allocation2 + $0xe0] sm:$0xff]
    %v2274 = vld [vmem:[#allocation2 + $0xe8] sm:$0xff]
    %v2275 = vld [vmem:[#allocation2 + $0xf0] sm:$0xff]
    %v2276 = vld [vmem:[#allocation2 + $0xf8] sm:$0xff]
    %v2277 = vld [vmem:[#allocation2 + $0x100] sm:$0xff]
    %v2278 = vld [vmem:[#allocation2 + $0x108] sm:$0xff]
    %v2279 = vld [vmem:[#allocation2 + $0x110] sm:$0xff]
    %v2280 = vld [vmem:[#allocation2 + $0x118] sm:$0xff]
    %v2281 = vld [vmem:[#allocation2 + $0x120] sm:$0xff]
    %v2282 = vld [vmem:[#allocation2 + $0x128] sm:$0xff]
    %v2283 = vld [vmem:[#allocation2 + $0x130] sm:$0xff]
    %v2284 = vld [vmem:[#allocation2 + $0x138] sm:$0xff]
    %v2285 = vld [vmem:[#allocation2 + $0x140] sm:$0xff]
    %v2286 = vld [vmem:[#allocation2 + $0x148] sm:$0xff]
    %v2287 = vld [vmem:[#allocation2 + $0x150] sm:$0xff]
    %v2288 = vld [vmem:[#allocation2 + $0x158] sm:$0xff]
    %v2289 = vld [vmem:[#allocation2 + $0x160] sm:$0xff]
    %v2290 = vld [vmem:[#allocation2 + $0x168] sm:$0xff]
    %v2291 = vld [vmem:[#allocation2 + $0x170] sm:$0xff]
    %v2292 = vld [vmem:[#allocation2 + $0x178] sm:$0xff]
    %v2293 = vld [vmem:[#allocation2 + $0x180] sm:$0xff]
    %v2294 = vld [vmem:[#allocation2 + $0x188] sm:$0xff]
    %v2295 = vld [vmem:[#allocation2 + $0x190] sm:$0xff]
    %v2296 = vld [vmem:[#allocation2 + $0x198] sm:$0xff]
    %v2297 = vld [vmem:[#allocation2 + $0x1a0] sm:$0xff]
    %v2298 = vld [vmem:[#allocation2 + $0x1a8] sm:$0xff]
    %v2299 = vld [vmem:[#allocation2 + $0x1b0] sm:$0xff]
    %v2300 = vld [vmem:[#allocation2 + $0x1b8] sm:$0xff]
    %v2301 = vld [vmem:[#allocation2 + $0x1c0] sm:$0xff]
    %v2302 = vld [vmem:[#allocation2 + $0x1c8] sm:$0xff]
    %v2303 = vld [vmem:[#allocation2 + $0x1d0] sm:$0xff]
    %v2304 = vld [vmem:[#allocation2 + $0x1d8] sm:$0xff]
    %v2305 = vld [vmem:[#allocation2 + $0x1e0] sm:$0xff]
    %v2306 = vld [vmem:[#allocation2 + $0x1e8] sm:$0xff]
    %v2307 = vld [vmem:[#allocation2 + $0x1f0] sm:$0xff]
    %v2308 = vld [vmem:[#allocation2 + $0x1f8] sm:$0xff]
    %v2309 = vld [vmem:[%s2] sm:$0xff]
    %v2310 = vld [vmem:[%s2 + $0x8] sm:$0xff]
    %v2311 = vld [vmem:[%s2 + $0x10] sm:$0xff]
    %v2312 = vld [vmem:[%s2 + $0x18] sm:$0xff]
    %v2313 = vld [vmem:[%s2 + $0x20] sm:$0xff]
    %v2314 = vld [vmem:[%s2 + $0x28] sm:$0xff]
    %v2315 = vld [vmem:[%s2 + $0x30] sm:$0xff]
    %v2316 = vld [vmem:[%s2 + $0x38] sm:$0xff]
    %v2317 = vld [vmem:[%s2 + $0x40] sm:$0xff]
    %v2318 = vld [vmem:[%s2 + $0x48] sm:$0xff]
    %v2319 = vld [vmem:[%s2 + $0x50] sm:$0xff]
    %v2320 = vld [vmem:[%s2 + $0x58] sm:$0xff]
    %v2321 = vld [vmem:[%s2 + $0x60] sm:$0xff]
    %v2322 = vld [vmem:[%s2 + $0x68] sm:$0xff]
    %v2323 = vld [vmem:[%s2 + $0x70] sm:$0xff]
    %v2324 = vld [vmem:[%s2 + $0x78] sm:$0xff]
    %v2325 = vld [vmem:[%s3] sm:$0x1]
    %v2327 = vperm.slane %v2325, 0
    %2329 = vmatpush.msra.mxu0 %v2324
    %2330 = vmatpush.msra.mxu0 %v2323
    %2331 = vmatpush.msra.mxu0 %v2322
    %2332 = vmatpush.msra.mxu0 %v2321
    %2333 = vmatpush.msra.mxu0 %v2320
    %2334 = vmatpush.msra.mxu0 %v2319
    %2335 = vmatpush.msra.mxu0 %v2318
    %2336 = vmatpush.msra.mxu0 %v2317
    %2337 = vmatpush.msra.mxu0 %v2316
    %2338 = vmatpush.msra.mxu0 %v2315
    %2339 = vmatpush.msra.mxu0 %v2314
    %2340 = vmatpush.msra.mxu0 %v2313
    %2341 = vmatpush.msra.mxu0 %v2312
    %2342 = vmatpush.msra.mxu0 %v2311
    %2343 = vmatpush.msra.mxu0 %v2310
    %2344 = vmatpush.msra.mxu0 %v2309
    %2345 = vmatmul.f32.gmra.mxu0 %v2245
    %v2346 = vpop.f32.mrf.mxu0
    %v2347 = vadd.f32 %v2327, %v2346
    %2348 = vmatmul.f32.gmra.mxu0 %v2246
    %v2349 = vpop.f32.mrf.mxu0
    %v2350 = vadd.f32 %v2327, %v2349
    %2351 = vmatmul.f32.gmra.mxu0 %v2247
    %v2352 = vpop.f32.mrf.mxu0
    %v2353 = vadd.f32 %v2327, %v2352
    %2354 = vmatmul.f32.gmra.mxu0 %v2248
    %v2355 = vpop.f32.mrf.mxu0
    %v2356 = vadd.f32 %v2327, %v2355
    %2357 = vmatmul.f32.gmra.mxu0 %v2249
    %v2358 = vpop.f32.mrf.mxu0
    %v2359 = vadd.f32 %v2327, %v2358
    %2360 = vmatmul.f32.gmra.mxu0 %v2250
    %v2361 = vpop.f32.mrf.mxu0
    %v2362 = vadd.f32 %v2327, %v2361
    %2363 = vmatmul.f32.gmra.mxu0 %v2251
    %v2364 = vpop.f32.mrf.mxu0
    %v2365 = vadd.f32 %v2327, %v2364
    %2366 = vmatmul.f32.gmra.mxu0 %v2252
    %v2367 = vpop.f32.mrf.mxu0
    %v2368 = vadd.f32 %v2327, %v2367
    %2369 = vmatmul.f32.gmra.mxu0 %v2253
    %v2370 = vpop.f32.mrf.mxu0
    %v2371 = vadd.f32 %v2327, %v2370
    %2372 = vmatmul.f32.gmra.mxu0 %v2254
    %v2373 = vpop.f32.mrf.mxu0
    %v2374 = vadd.f32 %v2327, %v2373
    %2375 = vmatmul.f32.gmra.mxu0 %v2255
    %v2376 = vpop.f32.mrf.mxu0
    %v2377 = vadd.f32 %v2327, %v2376
    %2378 = vmatmul.f32.gmra.mxu0 %v2256
    %v2379 = vpop.f32.mrf.mxu0
    %v2380 = vadd.f32 %v2327, %v2379
    %2381 = vmatmul.f32.gmra.mxu0 %v2257
    %v2382 = vpop.f32.mrf.mxu0
    %v2383 = vadd.f32 %v2327, %v2382
    %2384 = vmatmul.f32.gmra.mxu0 %v2258
    %v2385 = vpop.f32.mrf.mxu0
    %v2386 = vadd.f32 %v2327, %v2385
    %2387 = vmatmul.f32.gmra.mxu0 %v2259
    %v2388 = vpop.f32.mrf.mxu0
    %v2389 = vadd.f32 %v2327, %v2388
    %2390 = vmatmul.f32.gmra.mxu0 %v2260
    %v2391 = vpop.f32.mrf.mxu0
    %v2392 = vadd.f32 %v2327, %v2391
    %2393 = vmatmul.f32.gmra.mxu0 %v2261
    %v2394 = vpop.f32.mrf.mxu0
    %v2395 = vadd.f32 %v2327, %v2394
    %2396 = vmatmul.f32.gmra.mxu0 %v2262
    %v2397 = vpop.f32.mrf.mxu0
    %v2398 = vadd.f32 %v2327, %v2397
    %2399 = vmatmul.f32.gmra.mxu0 %v2263
    %v2400 = vpop.f32.mrf.mxu0
    %v2401 = vadd.f32 %v2327, %v2400
    %2402 = vmatmul.f32.gmra.mxu0 %v2264
    %v2403 = vpop.f32.mrf.mxu0
    %v2404 = vadd.f32 %v2327, %v2403
    %2405 = vmatmul.f32.gmra.mxu0 %v2265
    %v2406 = vpop.f32.mrf.mxu0
    %v2407 = vadd.f32 %v2327, %v2406
    %2408 = vmatmul.f32.gmra.mxu0 %v2266
    %v2409 = vpop.f32.mrf.mxu0
    %v2410 = vadd.f32 %v2327, %v2409
    %2411 = vmatmul.f32.gmra.mxu0 %v2267
    %v2412 = vpop.f32.mrf.mxu0
    %v2413 = vadd.f32 %v2327, %v2412
    %2414 = vmatmul.f32.gmra.mxu0 %v2268
    %v2415 = vpop.f32.mrf.mxu0
    %v2416 = vadd.f32 %v2327, %v2415
    %2417 = vmatmul.f32.gmra.mxu0 %v2269
    %v2418 = vpop.f32.mrf.mxu0
    %v2419 = vadd.f32 %v2327, %v2418
    %2420 = vmatmul.f32.gmra.mxu0 %v2270
    %v2421 = vpop.f32.mrf.mxu0
    %v2422 = vadd.f32 %v2327, %v2421
    %2423 = vmatmul.f32.gmra.mxu0 %v2271
    %v2424 = vpop.f32.mrf.mxu0
    %v2425 = vadd.f32 %v2327, %v2424
    %2426 = vmatmul.f32.gmra.mxu0 %v2272
    %v2427 = vpop.f32.mrf.mxu0
    %v2428 = vadd.f32 %v2327, %v2427
    %2429 = vmatmul.f32.gmra.mxu0 %v2273
    %v2430 = vpop.f32.mrf.mxu0
    %v2431 = vadd.f32 %v2327, %v2430
    %2432 = vmatmul.f32.gmra.mxu0 %v2274
    %v2433 = vpop.f32.mrf.mxu0
    %v2434 = vadd.f32 %v2327, %v2433
    %2435 = vmatmul.f32.gmra.mxu0 %v2275
    %v2436 = vpop.f32.mrf.mxu0
    %v2437 = vadd.f32 %v2327, %v2436
    %2438 = vmatmul.f32.gmra.mxu0 %v2276
    %v2439 = vpop.f32.mrf.mxu0
    %v2440 = vadd.f32 %v2327, %v2439
    %2441 = vmatmul.f32.gmra.mxu0 %v2277
    %v2442 = vpop.f32.mrf.mxu0
    %v2443 = vadd.f32 %v2327, %v2442
    %2444 = vmatmul.f32.gmra.mxu0 %v2278
    %v2445 = vpop.f32.mrf.mxu0
    %v2446 = vadd.f32 %v2327, %v2445
    %2447 = vmatmul.f32.gmra.mxu0 %v2279
    %v2448 = vpop.f32.mrf.mxu0
    %v2449 = vadd.f32 %v2327, %v2448
    %2450 = vmatmul.f32.gmra.mxu0 %v2280
    %v2451 = vpop.f32.mrf.mxu0
    %v2452 = vadd.f32 %v2327, %v2451
    %2453 = vmatmul.f32.gmra.mxu0 %v2281
    %v2454 = vpop.f32.mrf.mxu0
    %v2455 = vadd.f32 %v2327, %v2454
    %2456 = vmatmul.f32.gmra.mxu0 %v2282
    %v2457 = vpop.f32.mrf.mxu0
    %v2458 = vadd.f32 %v2327, %v2457
    %2459 = vmatmul.f32.gmra.mxu0 %v2283
    %v2460 = vpop.f32.mrf.mxu0
    %v2461 = vadd.f32 %v2327, %v2460
    %2462 = vmatmul.f32.gmra.mxu0 %v2284
    %v2463 = vpop.f32.mrf.mxu0
    %v2464 = vadd.f32 %v2327, %v2463
    %2465 = vmatmul.f32.gmra.mxu0 %v2285
    %v2466 = vpop.f32.mrf.mxu0
    %v2467 = vadd.f32 %v2327, %v2466
    %2468 = vmatmul.f32.gmra.mxu0 %v2286
    %v2469 = vpop.f32.mrf.mxu0
    %v2470 = vadd.f32 %v2327, %v2469
    %2471 = vmatmul.f32.gmra.mxu0 %v2287
    %v2472 = vpop.f32.mrf.mxu0
    %v2473 = vadd.f32 %v2327, %v2472
    %2474 = vmatmul.f32.gmra.mxu0 %v2288
    %v2475 = vpop.f32.mrf.mxu0
    %v2476 = vadd.f32 %v2327, %v2475
    %2477 = vmatmul.f32.gmra.mxu0 %v2289
    %v2478 = vpop.f32.mrf.mxu0
    %v2479 = vadd.f32 %v2327, %v2478
    %2480 = vmatmul.f32.gmra.mxu0 %v2290
    %v2481 = vpop.f32.mrf.mxu0
    %v2482 = vadd.f32 %v2327, %v2481
    %2483 = vmatmul.f32.gmra.mxu0 %v2291
    %v2484 = vpop.f32.mrf.mxu0
    %v2485 = vadd.f32 %v2327, %v2484
    %2486 = vmatmul.f32.gmra.mxu0 %v2292
    %v2487 = vpop.f32.mrf.mxu0
    %v2488 = vadd.f32 %v2327, %v2487
    %2489 = vmatmul.f32.gmra.mxu0 %v2293
    %v2490 = vpop.f32.mrf.mxu0
    %v2491 = vadd.f32 %v2327, %v2490
    %2492 = vmatmul.f32.gmra.mxu0 %v2294
    %v2493 = vpop.f32.mrf.mxu0
    %v2494 = vadd.f32 %v2327, %v2493
    %2495 = vmatmul.f32.gmra.mxu0 %v2295
    %v2496 = vpop.f32.mrf.mxu0
    %v2497 = vadd.f32 %v2327, %v2496
    %2498 = vmatmul.f32.gmra.mxu0 %v2296
    %v2499 = vpop.f32.mrf.mxu0
    %v2500 = vadd.f32 %v2327, %v2499
    %2501 = vmatmul.f32.gmra.mxu0 %v2297
    %v2502 = vpop.f32.mrf.mxu0
    %v2503 = vadd.f32 %v2327, %v2502
    %2504 = vmatmul.f32.gmra.mxu0 %v2298
    %v2505 = vpop.f32.mrf.mxu0
    %v2506 = vadd.f32 %v2327, %v2505
    %2507 = vmatmul.f32.gmra.mxu0 %v2299
    %v2508 = vpop.f32.mrf.mxu0
    %v2509 = vadd.f32 %v2327, %v2508
    %2510 = vmatmul.f32.gmra.mxu0 %v2300
    %v2511 = vpop.f32.mrf.mxu0
    %v2512 = vadd.f32 %v2327, %v2511
    %2513 = vmatmul.f32.gmra.mxu0 %v2301
    %v2514 = vpop.f32.mrf.mxu0
    %v2515 = vadd.f32 %v2327, %v2514
    %2516 = vmatmul.f32.gmra.mxu0 %v2302
    %v2517 = vpop.f32.mrf.mxu0
    %v2518 = vadd.f32 %v2327, %v2517
    %2519 = vmatmul.f32.gmra.mxu0 %v2303
    %v2520 = vpop.f32.mrf.mxu0
    %v2521 = vadd.f32 %v2327, %v2520
    %2522 = vmatmul.f32.gmra.mxu0 %v2304
    %v2523 = vpop.f32.mrf.mxu0
    %v2524 = vadd.f32 %v2327, %v2523
    %2525 = vmatmul.f32.gmra.mxu0 %v2305
    %v2526 = vpop.f32.mrf.mxu0
    %v2527 = vadd.f32 %v2327, %v2526
    %2528 = vmatmul.f32.gmra.mxu0 %v2306
    %v2529 = vpop.f32.mrf.mxu0
    %v2530 = vadd.f32 %v2327, %v2529
    %2531 = vmatmul.f32.gmra.mxu0 %v2307
    %v2532 = vpop.f32.mrf.mxu0
    %v2533 = vadd.f32 %v2327, %v2532
    %2534 = vmatmul.f32.gmra.mxu0 %v2308
    %v2535 = vpop.f32.mrf.mxu0
    %v2536 = vadd.f32 %v2327, %v2535
    %2537 = vdwg.mxu0
    %v2538 = vmax.f32 %v2347, 0.0
    %v2539 = vmax.f32 %v2350, 0.0
    %v2540 = vmax.f32 %v2353, 0.0
    %v2541 = vmax.f32 %v2356, 0.0
    %v2542 = vmax.f32 %v2359, 0.0
    %v2543 = vmax.f32 %v2362, 0.0
    %v2544 = vmax.f32 %v2365, 0.0
    %v2545 = vmax.f32 %v2368, 0.0
    %v2546 = vmax.f32 %v2371, 0.0
    %v2547 = vmax.f32 %v2374, 0.0
    %v2548 = vmax.f32 %v2377, 0.0
    %v2549 = vmax.f32 %v2380, 0.0
    %v2550 = vmax.f32 %v2383, 0.0
    %v2551 = vmax.f32 %v2386, 0.0
    %v2552 = vmax.f32 %v2389, 0.0
    %v2553 = vmax.f32 %v2392, 0.0
    %v2554 = vmax.f32 %v2395, 0.0
    %v2555 = vmax.f32 %v2398, 0.0
    %v2556 = vmax.f32 %v2401, 0.0
    %v2557 = vmax.f32 %v2404, 0.0
    %v2558 = vmax.f32 %v2407, 0.0
    %v2559 = vmax.f32 %v2410, 0.0
    %v2560 = vmax.f32 %v2413, 0.0
    %v2561 = vmax.f32 %v2416, 0.0
    %v2562 = vmax.f32 %v2419, 0.0
    %v2563 = vmax.f32 %v2422, 0.0
    %v2564 = vmax.f32 %v2425, 0.0
    %v2565 = vmax.f32 %v2428, 0.0
    %v2566 = vmax.f32 %v2431, 0.0
    %v2567 = vmax.f32 %v2434, 0.0
    %v2568 = vmax.f32 %v2437, 0.0
    %v2569 = vmax.f32 %v2440, 0.0
    %v2570 = vmax.f32 %v2443, 0.0
    %v2571 = vmax.f32 %v2446, 0.0
    %v2572 = vmax.f32 %v2449, 0.0
    %v2573 = vmax.f32 %v2452, 0.0
    %v2574 = vmax.f32 %v2455, 0.0
    %v2575 = vmax.f32 %v2458, 0.0
    %v2576 = vmax.f32 %v2461, 0.0
    %v2577 = vmax.f32 %v2464, 0.0
    %v2578 = vmax.f32 %v2467, 0.0
    %v2579 = vmax.f32 %v2470, 0.0
    %v2580 = vmax.f32 %v2473, 0.0
    %v2581 = vmax.f32 %v2476, 0.0
    %v2582 = vmax.f32 %v2479, 0.0
    %v2583 = vmax.f32 %v2482, 0.0
    %v2584 = vmax.f32 %v2485, 0.0
    %v2585 = vmax.f32 %v2488, 0.0
    %v2586 = vmax.f32 %v2491, 0.0
    %v2587 = vmax.f32 %v2494, 0.0
    %v2588 = vmax.f32 %v2497, 0.0
    %v2589 = vmax.f32 %v2500, 0.0
    %v2590 = vmax.f32 %v2503, 0.0
    %v2591 = vmax.f32 %v2506, 0.0
    %v2592 = vmax.f32 %v2509, 0.0
    %v2593 = vmax.f32 %v2512, 0.0
    %v2594 = vmax.f32 %v2515, 0.0
    %v2595 = vmax.f32 %v2518, 0.0
    %v2596 = vmax.f32 %v2521, 0.0
    %v2597 = vmax.f32 %v2524, 0.0
    %v2598 = vmax.f32 %v2527, 0.0
    %v2599 = vmax.f32 %v2530, 0.0
    %v2600 = vmax.f32 %v2533, 0.0
    %v2601 = vmax.f32 %v2536, 0.0
    %v2602 = vpack.c.bf16 %v2538, %v2538
    %v2603 = vpack.c.bf16 %v2539, %v2539
    %v2604 = vpack.c.bf16 %v2540, %v2540
    %v2605 = vpack.c.bf16 %v2541, %v2541
    %v2606 = vpack.c.bf16 %v2542, %v2542
    %v2607 = vpack.c.bf16 %v2543, %v2543
    %v2608 = vpack.c.bf16 %v2544, %v2544
    %v2609 = vpack.c.bf16 %v2545, %v2545
    %v2610 = vpack.c.bf16 %v2546, %v2546
    %v2611 = vpack.c.bf16 %v2547, %v2547
    %v2612 = vpack.c.bf16 %v2548, %v2548
    %v2613 = vpack.c.bf16 %v2549, %v2549
    %v2614 = vpack.c.bf16 %v2550, %v2550
    %v2615 = vpack.c.bf16 %v2551, %v2551
    %v2616 = vpack.c.bf16 %v2552, %v2552
    %v2617 = vpack.c.bf16 %v2553, %v2553
    %v2618 = vpack.c.bf16 %v2554, %v2554
    %v2619 = vpack.c.bf16 %v2555, %v2555
    %v2620 = vpack.c.bf16 %v2556, %v2556
    %v2621 = vpack.c.bf16 %v2557, %v2557
    %v2622 = vpack.c.bf16 %v2558, %v2558
    %v2623 = vpack.c.bf16 %v2559, %v2559
    %v2624 = vpack.c.bf16 %v2560, %v2560
    %v2625 = vpack.c.bf16 %v2561, %v2561
    %v2626 = vpack.c.bf16 %v2562, %v2562
    %v2627 = vpack.c.bf16 %v2563, %v2563
    %v2628 = vpack.c.bf16 %v2564, %v2564
    %v2629 = vpack.c.bf16 %v2565, %v2565
    %v2630 = vpack.c.bf16 %v2566, %v2566
    %v2631 = vpack.c.bf16 %v2567, %v2567
    %v2632 = vpack.c.bf16 %v2568, %v2568
    %v2633 = vpack.c.bf16 %v2569, %v2569
    %v2634 = vpack.c.bf16 %v2570, %v2570
    %v2635 = vpack.c.bf16 %v2571, %v2571
    %v2636 = vpack.c.bf16 %v2572, %v2572
    %v2637 = vpack.c.bf16 %v2573, %v2573
    %v2638 = vpack.c.bf16 %v2574, %v2574
    %v2639 = vpack.c.bf16 %v2575, %v2575
    %v2640 = vpack.c.bf16 %v2576, %v2576
    %v2641 = vpack.c.bf16 %v2577, %v2577
    %v2642 = vpack.c.bf16 %v2578, %v2578
    %v2643 = vpack.c.bf16 %v2579, %v2579
    %v2644 = vpack.c.bf16 %v2580, %v2580
    %v2645 = vpack.c.bf16 %v2581, %v2581
    %v2646 = vpack.c.bf16 %v2582, %v2582
    %v2647 = vpack.c.bf16 %v2583, %v2583
    %v2648 = vpack.c.bf16 %v2584, %v2584
    %v2649 = vpack.c.bf16 %v2585, %v2585
    %v2650 = vpack.c.bf16 %v2586, %v2586
    %v2651 = vpack.c.bf16 %v2587, %v2587
    %v2652 = vpack.c.bf16 %v2588, %v2588
    %v2653 = vpack.c.bf16 %v2589, %v2589
    %v2654 = vpack.c.bf16 %v2590, %v2590
    %v2655 = vpack.c.bf16 %v2591, %v2591
    %v2656 = vpack.c.bf16 %v2592, %v2592
    %v2657 = vpack.c.bf16 %v2593, %v2593
    %v2658 = vpack.c.bf16 %v2594, %v2594
    %v2659 = vpack.c.bf16 %v2595, %v2595
    %v2660 = vpack.c.bf16 %v2596, %v2596
    %v2661 = vpack.c.bf16 %v2597, %v2597
    %v2662 = vpack.c.bf16 %v2598, %v2598
    %v2663 = vpack.c.bf16 %v2599, %v2599
    %v2664 = vpack.c.bf16 %v2600, %v2600
    %v2665 = vpack.c.bf16 %v2601, %v2601
    %2666 = vst [vmem:[%s4] sm:$0xf] %v2602
    %2667 = vst [vmem:[%s4 + $0x4] sm:$0xf] %v2603
    %2668 = vst [vmem:[%s4 + $0x8] sm:$0xf] %v2604
    %2669 = vst [vmem:[%s4 + $0xc] sm:$0xf] %v2605
    %2670 = vst [vmem:[%s4 + $0x10] sm:$0xf] %v2606
    %2671 = vst [vmem:[%s4 + $0x14] sm:$0xf] %v2607
    %2672 = vst [vmem:[%s4 + $0x18] sm:$0xf] %v2608
    %2673 = vst [vmem:[%s4 + $0x1c] sm:$0xf] %v2609
    %2674 = vst [vmem:[%s4 + $0x20] sm:$0xf] %v2610
    %2675 = vst [vmem:[%s4 + $0x24] sm:$0xf] %v2611
    %2676 = vst [vmem:[%s4 + $0x28] sm:$0xf] %v2612
    %2677 = vst [vmem:[%s4 + $0x2c] sm:$0xf] %v2613
    %2678 = vst [vmem:[%s4 + $0x30] sm:$0xf] %v2614
    %2679 = vst [vmem:[%s4 + $0x34] sm:$0xf] %v2615
    %2680 = vst [vmem:[%s4 + $0x38] sm:$0xf] %v2616
    %2681 = vst [vmem:[%s4 + $0x3c] sm:$0xf] %v2617
    %2682 = vst [vmem:[%s4 + $0x40] sm:$0xf] %v2618
    %2683 = vst [vmem:[%s4 + $0x44] sm:$0xf] %v2619
    %2684 = vst [vmem:[%s4 + $0x48] sm:$0xf] %v2620
    %2685 = vst [vmem:[%s4 + $0x4c] sm:$0xf] %v2621
    %2686 = vst [vmem:[%s4 + $0x50] sm:$0xf] %v2622
    %2687 = vst [vmem:[%s4 + $0x54] sm:$0xf] %v2623
    %2688 = vst [vmem:[%s4 + $0x58] sm:$0xf] %v2624
    %2689 = vst [vmem:[%s4 + $0x5c] sm:$0xf] %v2625
    %2690 = vst [vmem:[%s4 + $0x60] sm:$0xf] %v2626
    %2691 = vst [vmem:[%s4 + $0x64] sm:$0xf] %v2627
    %2692 = vst [vmem:[%s4 + $0x68] sm:$0xf] %v2628
    %2693 = vst [vmem:[%s4 + $0x6c] sm:$0xf] %v2629
    %2694 = vst [vmem:[%s4 + $0x70] sm:$0xf] %v2630
    %2695 = vst [vmem:[%s4 + $0x74] sm:$0xf] %v2631
    %2696 = vst [vmem:[%s4 + $0x78] sm:$0xf] %v2632
    %2697 = vst [vmem:[%s4 + $0x7c] sm:$0xf] %v2633
    %2698 = vst [vmem:[%s4 + $0x80] sm:$0xf] %v2634
    %2699 = vst [vmem:[%s4 + $0x84] sm:$0xf] %v2635
    %2700 = vst [vmem:[%s4 + $0x88] sm:$0xf] %v2636
    %2701 = vst [vmem:[%s4 + $0x8c] sm:$0xf] %v2637
    %2702 = vst [vmem:[%s4 + $0x90] sm:$0xf] %v2638
    %2703 = vst [vmem:[%s4 + $0x94] sm:$0xf] %v2639
    %2704 = vst [vmem:[%s4 + $0x98] sm:$0xf] %v2640
    %2705 = vst [vmem:[%s4 + $0x9c] sm:$0xf] %v2641
    %2706 = vst [vmem:[%s4 + $0xa0] sm:$0xf] %v2642
    %2707 = vst [vmem:[%s4 + $0xa4] sm:$0xf] %v2643
    %2708 = vst [vmem:[%s4 + $0xa8] sm:$0xf] %v2644
    %2709 = vst [vmem:[%s4 + $0xac] sm:$0xf] %v2645
    %2710 = vst [vmem:[%s4 + $0xb0] sm:$0xf] %v2646
    %2711 = vst [vmem:[%s4 + $0xb4] sm:$0xf] %v2647
    %2712 = vst [vmem:[%s4 + $0xb8] sm:$0xf] %v2648
    %2713 = vst [vmem:[%s4 + $0xbc] sm:$0xf] %v2649
    %2714 = vst [vmem:[%s4 + $0xc0] sm:$0xf] %v2650
    %2715 = vst [vmem:[%s4 + $0xc4] sm:$0xf] %v2651
    %2716 = vst [vmem:[%s4 + $0xc8] sm:$0xf] %v2652
    %2717 = vst [vmem:[%s4 + $0xcc] sm:$0xf] %v2653
    %2718 = vst [vmem:[%s4 + $0xd0] sm:$0xf] %v2654
    %2719 = vst [vmem:[%s4 + $0xd4] sm:$0xf] %v2655
    %2720 = vst [vmem:[%s4 + $0xd8] sm:$0xf] %v2656
    %2721 = vst [vmem:[%s4 + $0xdc] sm:$0xf] %v2657
    %2722 = vst [vmem:[%s4 + $0xe0] sm:$0xf] %v2658
    %2723 = vst [vmem:[%s4 + $0xe4] sm:$0xf] %v2659
    %2724 = vst [vmem:[%s4 + $0xe8] sm:$0xf] %v2660
    %2725 = vst [vmem:[%s4 + $0xec] sm:$0xf] %v2661
    %2726 = vst [vmem:[%s4 + $0xf0] sm:$0xf] %v2662
    %2727 = vst [vmem:[%s4 + $0xf4] sm:$0xf] %v2663
    %2728 = vst [vmem:[%s4 + $0xf8] sm:$0xf] %v2664
    %2729 = vst [vmem:[%s4 + $0xfc] sm:$0xf] %v2665
  $region29: #{gnn_forward.3} parent=0 // pred_fallthru
    _
  // Predicated region
  $region30: #{gnn_forward.3} parent=0 // pred_check
    _
  $region31: #{gnn_forward.3} parent=0 // pred_check_branch
    %2731 = sbr.rel (0) target = $region33
  $region32: #{gnn_forward.3} parent=0 // pred_region
    _
  $region33: #{gnn_forward.3} parent=0 // pred_fallthru
    _
  // Predicated region
  $region34: #{gnn_forward.3} parent=0 // pred_check
    _
  $region35: #{gnn_forward.3} parent=0 // pred_check_branch
    %2733 = sbr.rel (0) target = $region37
  $region36: #{gnn_forward.3} parent=0 // pred_region
    _
  $region37: #{gnn_forward.3} parent=0 // pred_fallthru
    _

</llo_original>
